<compile_context>
chip_gen: v7x
topology: tpu7x:2x2x1
jax: 0.10.0
libtpu: 0.0.40
codegen_flags: <defaults>
</compile_context>

<pallas_src>
import jax
import jax.numpy as jnp
from jax.experimental import pallas as pl
from jax.experimental.pallas import tpu as pltpu

EPS = 1e-5  # PyTorch BatchNorm2d default
_HI = jax.lax.Precision.HIGHEST


# ----------------------------- in-kernel helpers (traced) -----------------------------

def _silu(v):
    return v * jax.nn.sigmoid(v)


def _read_shift(x, s):
    """out[:, m] = x[:, (m + s) mod L] via an XLU lane rotation (wrap handled by caller masks)."""
    if s == 0:
        return x
    return pltpu.roll(x, (-s) % x.shape[1], axis=1)


def _dw3x3(x, wt, cm_l, cm_r, rm_t, rm_b, w_sp):
    """3x3 depthwise conv accumulation (stride 1, pad 1, cross-correlation) on (C, B*H*W) data.

    x:    (C, L) lane-dense activation, L = B*H*W.
    wt:   (C, 9) per-channel taps (BN scale folded), tap k = ky*3 + kx.
    cm_l/cm_r: (1, L) masks: position may read column w-1 / w+1 (zero at image column edges).
    rm_t/rm_b: (1, L) masks: position may read row h-1 / h+1 (zero at image row edges).
    Returns the accumulation (no BN shift, no activation).
    """
    xw = {
        -1: _read_shift(x, -1) * cm_l,   # value at column w-1
        0: x,
        1: _read_shift(x, 1) * cm_r,     # value at column w+1
    }
    acc = None
    for dh in (-1, 0, 1):
        part = None
        for dw in (-1, 0, 1):
            term = xw[dw] * wt[:, (dh + 1) * 3 + (dw + 1):(dh + 1) * 3 + (dw + 1) + 1]
            part = term if part is None else part + term
        if dh == -1:
            part = _read_shift(part, -w_sp) * rm_t   # value at row h-1
        elif dh == 1:
            part = _read_shift(part, w_sp) * rm_b    # value at row h+1
        acc = part if acc is None else acc + part
    return acc


def _pw(w, b, x):
    """1x1 conv with folded BN: (Cout, Cin) @ (Cin, L) + (Cout, 1)."""
    return jnp.dot(w, x, preferred_element_type=jnp.float32) + b


def _make_encoder_kernel(nb, hw, w_sp, n_img):
    """Kernel factory. nb bottlenecks, per-image spatial size hw, image width w_sp,
    n_img images packed along the lane axis per grid step."""

    def kernel(x_ref, temb_ref, mask_ref, sel_ref,
               w_pw1_ref, b_pw1_ref, w_dw_ref, b_dw_ref,
               w_pwf_ref, b_pwf_ref, w_pwfl_ref, b_pwfl_ref,
               d_pw1_ref, d_bpw1_ref, d_dw_ref, d_bdw_ref, d_pwf_ref, d_bpwf_ref,
               out_ref, sc_ref):
        masks = mask_ref[...]                         # (4, L)
        cm_l, cm_r = masks[0:1, :], masks[1:2, :]
        rm_t, rm_b = masks[2:3, :], masks[3:4, :]

        x = x_ref[0]                                  # (C_in, L), lane-dense

        # ---- conv0: nb fused ResidualBottlenecks (chunk/concat/shuffle baked into w_pwf) ----
        for i in range(nb):
            w_pw1 = w_pw1_ref[i]
            b_pw1 = b_pw1_ref[:, i:i + 1]
            w_dw = w_dw_ref[i]
            b_dw = b_dw_ref[:, i:i + 1]
            if i < nb - 1:
                w_pwf, b_pwf = w_pwf_ref[i], b_pwf_ref[:, i:i + 1]
            else:
                w_pwf, b_pwf = w_pwfl_ref[...], b_pwfl_ref[...]
            c2 = w_pw1.shape[1]
            # branch2 first 1x1 ConvBnSiLu on the second channel half
            y2 = _silu(_pw(w_pw1, b_pw1, x[c2:, :]))
            # both branches' depthwise 3x3 + BN shift, channels stacked
            d = _dw3x3(jnp.concatenate([x[:c2, :], y2], axis=0), w_dw,
                       cm_l, cm_r, rm_t, rm_b, w_sp) + b_dw
            # combined final 1x1 ConvBnSiLu (block-diag, ChannelShuffle(2) pre-applied)
            x = _silu(_pw(w_pwf, b_pwf, d))
        sc_ref[0] = x                                 # x_shortcut = conv0(x)

        # ---- TimeMLP (hoisted to wrapper): broadcast add + SiLU ----
        y = _silu(x + temb_ref[0])

        # ---- conv1: fused ResidualDownsample (stride 2 via per-image 0/1 selection matmul) ----
        y2 = _silu(_pw(d_pw1_ref[...], d_bpw1_ref[...], y))
        dfull = _dw3x3(jnp.concatenate([y, y2], axis=0), d_dw_ref[...],
                       cm_l, cm_r, rm_t, rm_b, w_sp)
        sel = sel_ref[...]                            # (H*W, Ho*Wo), per image
        parts = [jnp.dot(dfull[:, b * hw:(b + 1) * hw], sel,
                         preferred_element_type=jnp.float32)
                 for b in range(n_img)]
        dsel = (parts[0] if n_img == 1 else jnp.concatenate(parts, axis=1)) + d_bdw_ref[...]
        out_ref[0] = _silu(_pw(d_pwf_ref[...], d_bpwf_ref[...], dsel))

    return kernel


# ----------------------------- host-side constants -----------------------------

def _build_masks(n_img, h_sp, w_sp):
    m = jnp.arange(h_sp * w_sp)
    w = m % w_sp
    h = m // w_sp
    masks = jnp.stack([(w >= 1),            # may read column w-1
                       (w <= w_sp - 2),     # may read column w+1
                       (h >= 1),            # may read row h-1
                       (h <= h_sp - 2)],    # may read row h+1
                      axis=0).astype(jnp.float32)
    return jnp.tile(masks, (1, n_img))                           # (4, n_img*H*W)


def _build_stride2_selector(h_sp, w_sp):
    h_o = (h_sp - 1) // 2 + 1
    w_o = (w_sp - 1) // 2 + 1
    j = jnp.arange(h_o * w_o)
    rows = 2 * (j // w_o) * w_sp + 2 * (j % w_o)
    sel = jnp.zeros((h_sp * w_sp, h_o * w_o), jnp.float32)
    return sel.at[rows, j].set(1.0)                              # (H*W, Ho*Wo)


# ----------------------------- forward (single pallas_call) -----------------------------

def encoder_block_forward(params, x_nchw, t, images_per_block=None):
    n, c_in, h_sp, w_sp = x_nchw.shape
    hw = h_sp * w_sp
    h_o = (h_sp - 1) // 2 + 1
    w_o = (w_sp - 1) // 2 + 1

    nb = params["w_pw1"].shape[0]
    c_mid = params["w_pwf_last"].shape[0]
    ds = params["ds"]
    c_out = ds[4].shape[0]

    if images_per_block is None:
        # whole batch in one lane-packed block for tiny N; otherwise keep >= 2 grid steps
        # (both v7x TensorCores get work) with up to 8 images packed along the lane axis.
        images_per_block = n if n <= 2 else max(1, min(8, -(-n // 2)))
    b_img = max(1, min(images_per_block, n))
    grid = -(-n // b_img)
    n_pad = grid * b_img

    x = x_nchw.reshape(n, c_in, hw).astype(jnp.float32)

    # TimeMLP hoisted out of the kernel (depends only on t): Linear -> SiLU -> Linear.
    tm = params["time_mlp"]
    tf = t.astype(jnp.float32)
    hid = jnp.dot(tf, tm["w1"].T, precision=_HI) + tm["b1"][None, :]
    hid = hid * jax.nn.sigmoid(hid)
    temb = jnp.dot(hid, tm["w2"].T, precision=_HI) + tm["b2"][None, :]   # (n, c_mid)

    if n_pad != n:
        x = jnp.pad(x, ((0, n_pad - n), (0, 0), (0, 0)))
        temb = jnp.pad(temb, ((0, n_pad - n), (0, 0)))

    l_sp = b_img * hw
    lo_sp = b_img * h_o * w_o

    # Pack B images along the lane axis: (grid, C, B*H*W). NCHW per image == (C, H*W).
    x_b = x.reshape(grid, b_img, c_in, hw).transpose(0, 2, 1, 3).reshape(grid, c_in, l_sp)
    temb_b = jnp.broadcast_to(
        temb.reshape(grid, b_img, c_mid, 1).transpose(0, 2, 1, 3),
        (grid, c_mid, b_img, hw)).reshape(grid, c_mid, l_sp)

    masks = _build_masks(b_img, h_sp, w_sp)
    sel = _build_stride2_selector(h_sp, w_sp)

    operands = [x_b, temb_b, masks, sel,
                params["w_pw1"], params["b_pw1"], params["w_dw"], params["b_dw"],
                params["w_pwf"], params["b_pwf"], params["w_pwf_last"], params["b_pwf_last"],
                *ds]

    vmem = pl.BlockSpec(memory_space=pltpu.MemorySpace.VMEM)
    in_specs = ([pl.BlockSpec((1, c_in, l_sp), lambda i: (i, 0, 0)),
                 pl.BlockSpec((1, c_mid, l_sp), lambda i: (i, 0, 0))]
                + [vmem] * (len(operands) - 2))
    out_specs = (pl.BlockSpec((1, c_out, lo_sp), lambda i: (i, 0, 0)),
                 pl.BlockSpec((1, c_mid, l_sp), lambda i: (i, 0, 0)))
    out_shape = (jax.ShapeDtypeStruct((grid, c_out, lo_sp), jnp.float32),
                 jax.ShapeDtypeStruct((grid, c_mid, l_sp), jnp.float32))

    out_b, sc_b = pl.pallas_call(
        _make_encoder_kernel(nb, hw, w_sp, b_img),
        out_shape=out_shape,
        grid=(grid,),
        in_specs=in_specs,
        out_specs=out_specs,
        compiler_params=pltpu.CompilerParams(dimension_semantics=("parallel",)),
    )(*operands)

    out = (out_b.reshape(grid, c_out, b_img, h_o * w_o).transpose(0, 2, 1, 3)
           .reshape(n_pad, c_out, h_o, w_o)[:n])
    sc = (sc_b.reshape(grid, c_mid, b_img, hw).transpose(0, 2, 1, 3)
          .reshape(n_pad, c_mid, h_sp, w_sp)[:n])
    return [out, sc]


# ----------------------------- raw (PyTorch-like) parameter init -----------------------------

def _init_bn(keys, c):
    gamma = 1.0 + 0.05 * jax.random.normal(keys[0], (c,), jnp.float32)
    beta = 0.05 * jax.random.normal(keys[1], (c,), jnp.float32)
    mean = 0.05 * jax.random.normal(keys[2], (c,), jnp.float32)
    var = 1.0 + 0.1 * jnp.abs(jax.random.normal(keys[3], (c,), jnp.float32))
    return dict(gamma=gamma, beta=beta, mean=mean, var=var)


def init_pw(key, cin, cout):           # 1x1 Conv + BN (+ SiLU applied in-kernel)
    ks = jax.random.split(key, 6)
    w = jax.random.normal(ks[0], (cout, cin), jnp.float32) / jnp.sqrt(float(cin))
    b = 0.05 * jax.random.normal(ks[1], (cout,), jnp.float32)
    return dict(w=w, b=b, **_init_bn(ks[2:6], cout))


def init_dw(key, c):                   # depthwise 3x3 Conv + BN (no activation)
    ks = jax.random.split(key, 6)
    w = jax.random.normal(ks[0], (c, 3, 3), jnp.float32) / 3.0
    b = 0.05 * jax.random.normal(ks[1], (c,), jnp.float32)
    return dict(w=w, b=b, **_init_bn(ks[2:6], c))


def init_res_bottleneck(key, cin, cout):
    ks = jax.random.split(key, 5)
    c2 = cin // 2
    return dict(b1_dw=init_dw(ks[0], c2), b1_pw=init_pw(ks[1], c2, cout // 2),
                b2_pw1=init_pw(ks[2], c2, c2), b2_dw=init_dw(ks[3], c2),
                b2_pw2=init_pw(ks[4], c2, cout // 2))


def init_res_downsample(key, cin, cout):
    ks = jax.random.split(key, 5)
    return dict(b1_dw=init_dw(ks[0], cin), b1_pw=init_pw(ks[1], cin, cout // 2),
                b2_pw1=init_pw(ks[2], cin, cout // 2), b2_dw=init_dw(ks[3], cout // 2),
                b2_pw2=init_pw(ks[4], cout // 2, cout // 2))


def init_time_mlp(key, emb, hidden, out):
    ks = jax.random.split(key, 4)
    w1 = jax.random.normal(ks[0], (hidden, emb), jnp.float32) / jnp.sqrt(float(emb))
    b1 = 0.05 * jax.random.normal(ks[1], (hidden,), jnp.float32)
    w2 = jax.random.normal(ks[2], (out, hidden), jnp.float32) / jnp.sqrt(float(hidden))
    b2 = 0.05 * jax.random.normal(ks[3], (out,), jnp.float32)
    return dict(w1=w1, b1=b1, w2=w2, b2=b2)


def init_encoder_block(key, cin, cout, tdim):
    ks = jax.random.split(key, 6)
    conv0 = [init_res_bottleneck(ks[i], cin, cin) for i in range(3)]
    conv0.append(init_res_bottleneck(ks[3], cin, cout // 2))
    return dict(conv0=conv0,
                time_mlp=init_time_mlp(ks[4], tdim, cout, cout // 2),
                conv1=init_res_downsample(ks[5], cout // 2, cout))


# ----------------------------- fold / pack params for the kernel -----------------------------

def _prep_pw(pw):
    scale = pw["gamma"] / jnp.sqrt(pw["var"] + EPS)
    w = pw["w"] * scale[:, None]                                     # BN scale folded into W
    b = (scale * (pw["b"] - pw["mean"]) + pw["beta"])[:, None]       # (cout, 1)
    return w, b


def _prep_dw(dw):
    scale = dw["gamma"] / jnp.sqrt(dw["var"] + EPS)
    w = dw["w"].reshape(dw["w"].shape[0], 9) * scale[:, None]        # (c, 9), tap k = ky*3+kx
    b = (scale * (dw["b"] - dw["mean"]) + dw["beta"])[:, None]       # (c, 1)
    return w, b


def _prep_dw_pair(dw_b1, dw_b2):
    w1, b1 = _prep_dw(dw_b1)
    w2, b2 = _prep_dw(dw_b2)
    return jnp.concatenate([w1, w2], axis=0), jnp.concatenate([b1, b2], axis=0)


def _prep_final(pw_b1, pw_b2):
    """Block-diag [branch1 1x1; branch2 1x1] with ChannelShuffle(2) baked into the row order."""
    w1, b1 = _prep_pw(pw_b1)
    w2, b2 = _prep_pw(pw_b2)
    co2, c1 = w1.shape
    c2 = w2.shape[1]
    wc = jnp.zeros((2 * co2, c1 + c2), jnp.float32)
    wc = wc.at[:co2, :c1].set(w1).at[co2:, c1:].set(w2)
    bc = jnp.concatenate([b1, b2], axis=0)
    perm = jnp.array([(j % 2) * co2 + j // 2 for j in range(2 * co2)], jnp.int32)
    return wc[perm, :], bc[perm, :]


def prepare_params(raw):
    blocks = []
    for blk in raw["conv0"]:
        w_pw1, b_pw1 = _prep_pw(blk["b2_pw1"])
        w_dw, b_dw = _prep_dw_pair(blk["b1_dw"], blk["b2_dw"])
        w_pwf, b_pwf = _prep_final(blk["b1_pw"], blk["b2_pw2"])
        blocks.append((w_pw1, b_pw1, w_dw, b_dw, w_pwf, b_pwf))

    ds = raw["conv1"]
    ds_pw1, ds_bpw1 = _prep_pw(ds["b2_pw1"])
    ds_dw, ds_bdw = _prep_dw_pair(ds["b1_dw"], ds["b2_dw"])
    ds_pwf, ds_bpwf = _prep_final(ds["b1_pw"], ds["b2_pw2"])

    return dict(
        # identically-shaped pieces stacked over all nb bottlenecks
        w_pw1=jnp.stack([b[0] for b in blocks], axis=0),             # (nb, c2, c2)
        b_pw1=jnp.concatenate([b[1] for b in blocks], axis=1),       # (c2, nb)
        w_dw=jnp.stack([b[2] for b in blocks], axis=0),              # (nb, cin, 9)
        b_dw=jnp.concatenate([b[3] for b in blocks], axis=1),        # (cin, nb)
        # final 1x1 of the first nb-1 units shares a shape; the last unit's may differ
        w_pwf=jnp.stack([b[4] for b in blocks[:-1]], axis=0),        # (nb-1, cin, cin)
        b_pwf=jnp.concatenate([b[5] for b in blocks[:-1]], axis=1),  # (cin, nb-1)
        w_pwf_last=blocks[-1][4],                                    # (c_mid, cin)
        b_pwf_last=blocks[-1][5],                                    # (c_mid, 1)
        ds=(ds_pw1, ds_bpw1, ds_dw, ds_bdw, ds_pwf, ds_bpwf),
        time_mlp=dict(raw["time_mlp"]),
    )


# ----------------------------- pure-JAX reference (eval-mode BN) -----------------------------

def _ref_bn(y, p):
    s = p["gamma"] / jnp.sqrt(p["var"] + EPS)
    return s[None, :, None, None] * (y - p["mean"][None, :, None, None]) + p["beta"][None, :, None, None]


def _ref_pw(x, p):
    y = jax.lax.conv_general_dilated(x, p["w"][:, :, None, None], (1, 1), ((0, 0), (0, 0)),
                                     dimension_numbers=("NCHW", "OIHW", "NCHW"), precision=_HI)
    y = _ref_bn(y + p["b"][None, :, None, None], p)
    return y * jax.nn.sigmoid(y)


def _ref_dw(x, p, stride):
    c = x.shape[1]
    y = jax.lax.conv_general_dilated(x, p["w"][:, None, :, :], (stride, stride), ((1, 1), (1, 1)),
                                     dimension_numbers=("NCHW", "OIHW", "NCHW"),
                                     feature_group_count=c, precision=_HI)
    return _ref_bn(y + p["b"][None, :, None, None], p)


def _ref_shuffle(x):
    n, c, h, w = x.shape
    return x.reshape(n, 2, c // 2, h, w).transpose(0, 2, 1, 3, 4).reshape(n, c, h, w)


def encoder_block_reference(raw, x, t):
    for p in raw["conv0"]:
        c = x.shape[1]
        x1, x2 = x[:, :c // 2], x[:, c // 2:]
        b1 = _ref_pw(_ref_dw(x1, p["b1_dw"], 1), p["b1_pw"])
        b2 = _ref_pw(_ref_dw(_ref_pw(x2, p["b2_pw1"]), p["b2_dw"], 1), p["b2_pw2"])
        x = _ref_shuffle(jnp.concatenate([b1, b2], axis=1))
    sc = x
    tm = raw["time_mlp"]
    h = jnp.dot(t, tm["w1"].T, precision=_HI) + tm["b1"]
    h = h * jax.nn.sigmoid(h)
    temb = jnp.dot(h, tm["w2"].T, precision=_HI) + tm["b2"]
    y = sc + temb[:, :, None, None]
    y = y * jax.nn.sigmoid(y)
    p = raw["conv1"]
    b1 = _ref_pw(_ref_dw(y, p["b1_dw"], 2), p["b1_pw"])
    b2 = _ref_pw(_ref_dw(_ref_pw(y, p["b2_pw1"]), p["b2_dw"], 2), p["b2_pw2"])
    out = _ref_shuffle(jnp.concatenate([b1, b2], axis=1))
    return out, sc


# ----------------------------- main -----------------------------

if __name__ == "__main__":
    IN_CH, OUT_CH, T_DIM = 16, 32, 32
    N, H, W = 2, 16, 16

    root = jax.random.PRNGKey(0)
    k_params, k_x, k_t = jax.random.split(root, 3)

    raw_params = init_encoder_block(k_params, IN_CH, OUT_CH, T_DIM)
    params = prepare_params(raw_params)
    x = jax.random.normal(k_x, (N, IN_CH, H, W), jnp.float32)   # NCHW like PyTorch
    t = jax.random.normal(k_t, (N, T_DIM), jnp.float32)

    fwd = jax.jit(encoder_block_forward)
    out, shortcut = fwd(params, x, t)
    jax.block_until_ready(out)
    jax.block_until_ready(shortcut)

    assert out.shape == (N, OUT_CH, H // 2, W // 2), out.shape
    assert shortcut.shape == (N, OUT_CH // 2, H, W), shortcut.shape
    assert bool(jnp.all(jnp.isfinite(out))) and bool(jnp.all(jnp.isfinite(shortcut)))

    # Correctness vs. a pure-JAX reference of the PyTorch module (eval-mode BN); loose tol
    # covers MXU f32 matmul precision.
    out_gold, sc_gold = jax.jit(encoder_block_reference)(raw_params, x, t)
    assert float(jnp.max(jnp.abs(out - out_gold))) < 5e-2
    assert float(jnp.max(jnp.abs(shortcut - sc_gold))) < 5e-2

    print("KERNEL_OK")
</pallas_src>

<mosaic_0001>
module attributes {stable_mosaic.version = 11 : i64} {
  func.func @kernel(%arg0: i32, %arg1: memref<1x16x512xf32, #tpu.memory_space<vmem>>, %arg2: memref<1x16x512xf32, #tpu.memory_space<vmem>>, %arg3: memref<4x512xf32, #tpu.memory_space<vmem>>, %arg4: memref<256x64xf32, #tpu.memory_space<vmem>>, %arg5: memref<4x8x8xf32, #tpu.memory_space<vmem>>, %arg6: memref<8x4xf32, #tpu.memory_space<vmem>>, %arg7: memref<4x16x9xf32, #tpu.memory_space<vmem>>, %arg8: memref<16x4xf32, #tpu.memory_space<vmem>>, %arg9: memref<3x16x16xf32, #tpu.memory_space<vmem>>, %arg10: memref<16x3xf32, #tpu.memory_space<vmem>>, %arg11: memref<16x16xf32, #tpu.memory_space<vmem>>, %arg12: memref<16x1xf32, #tpu.memory_space<vmem>>, %arg13: memref<16x16xf32, #tpu.memory_space<vmem>>, %arg14: memref<16x1xf32, #tpu.memory_space<vmem>>, %arg15: memref<32x9xf32, #tpu.memory_space<vmem>>, %arg16: memref<32x1xf32, #tpu.memory_space<vmem>>, %arg17: memref<32x32xf32, #tpu.memory_space<vmem>>, %arg18: memref<32x1xf32, #tpu.memory_space<vmem>>, %arg19: memref<1x32x128xf32, #tpu.memory_space<vmem>>, %arg20: memref<1x16x512xf32, #tpu.memory_space<vmem>>) attributes {dimension_semantics = [#tpu.dimension_semantics<parallel>], iteration_bounds = array<i64: 1>, scalar_prefetch = 0 : i64, scratch_operands = 0 : i64, tpu.core_type = #tpu.core_type<tc>, window_params = [{transform_indices = @transform_0, window_bounds = array<i64: 1, 16, 512>}, {transform_indices = @transform_1, window_bounds = array<i64: 1, 16, 512>}, {pipeline_mode = #tpu.pipeline_mode<synchronous>, transform_indices = @transform_2, window_bounds = array<i64: 4, 512>}, {pipeline_mode = #tpu.pipeline_mode<synchronous>, transform_indices = @transform_3, window_bounds = array<i64: 256, 64>}, {pipeline_mode = #tpu.pipeline_mode<synchronous>, transform_indices = @transform_4, window_bounds = array<i64: 4, 8, 8>}, {pipeline_mode = #tpu.pipeline_mode<synchronous>, transform_indices = @transform_5, window_bounds = array<i64: 8, 4>}, {pipeline_mode = #tpu.pipeline_mode<synchronous>, transform_indices = @transform_6, window_bounds = array<i64: 4, 16, 9>}, {pipeline_mode = #tpu.pipeline_mode<synchronous>, transform_indices = @transform_7, window_bounds = array<i64: 16, 4>}, {pipeline_mode = #tpu.pipeline_mode<synchronous>, transform_indices = @transform_8, window_bounds = array<i64: 3, 16, 16>}, {pipeline_mode = #tpu.pipeline_mode<synchronous>, transform_indices = @transform_9, window_bounds = array<i64: 16, 3>}, {pipeline_mode = #tpu.pipeline_mode<synchronous>, transform_indices = @transform_10, window_bounds = array<i64: 16, 16>}, {pipeline_mode = #tpu.pipeline_mode<synchronous>, transform_indices = @transform_11, window_bounds = array<i64: 16, 1>}, {pipeline_mode = #tpu.pipeline_mode<synchronous>, transform_indices = @transform_12, window_bounds = array<i64: 16, 16>}, {pipeline_mode = #tpu.pipeline_mode<synchronous>, transform_indices = @transform_13, window_bounds = array<i64: 16, 1>}, {pipeline_mode = #tpu.pipeline_mode<synchronous>, transform_indices = @transform_14, window_bounds = array<i64: 32, 9>}, {pipeline_mode = #tpu.pipeline_mode<synchronous>, transform_indices = @transform_15, window_bounds = array<i64: 32, 1>}, {pipeline_mode = #tpu.pipeline_mode<synchronous>, transform_indices = @transform_16, window_bounds = array<i64: 32, 32>}, {pipeline_mode = #tpu.pipeline_mode<synchronous>, transform_indices = @transform_17, window_bounds = array<i64: 32, 1>}, {transform_indices = @transform_18, window_bounds = array<i64: 1, 32, 128>}, {transform_indices = @transform_19, window_bounds = array<i64: 1, 16, 512>}]} {
    %c0 = arith.constant 0 : index
    %c0_0 = arith.constant 0 : index
    %0 = vector.load %arg3[%c0, %c0_0] : memref<4x512xf32, #tpu.memory_space<vmem>>, vector<4x512xf32>
    %1 = vector.extract_strided_slice %0 {offsets = [0, 0], sizes = [1, 512], strides = [1, 1]} : vector<4x512xf32> to vector<1x512xf32>
    %2 = vector.extract_strided_slice %0 {offsets = [1, 0], sizes = [1, 512], strides = [1, 1]} : vector<4x512xf32> to vector<1x512xf32>
    %3 = vector.extract_strided_slice %0 {offsets = [2, 0], sizes = [1, 512], strides = [1, 1]} : vector<4x512xf32> to vector<1x512xf32>
    %4 = vector.extract_strided_slice %0 {offsets = [3, 0], sizes = [1, 512], strides = [1, 1]} : vector<4x512xf32> to vector<1x512xf32>
    %c0_1 = arith.constant 0 : index
    %c0_2 = arith.constant 0 : index
    %c0_3 = arith.constant 0 : index
    %5 = vector.load %arg1[%c0_1, %c0_2, %c0_3] : memref<1x16x512xf32, #tpu.memory_space<vmem>>, vector<1x16x512xf32>
    %6 = vector.shape_cast %5 : vector<1x16x512xf32> to vector<16x512xf32>
    %c0_4 = arith.constant 0 : index
    %c0_5 = arith.constant 0 : index
    %c0_6 = arith.constant 0 : index
    %7 = vector.load %arg5[%c0_4, %c0_5, %c0_6] : memref<4x8x8xf32, #tpu.memory_space<vmem>>, vector<1x8x8xf32>
    %8 = vector.shape_cast %7 : vector<1x8x8xf32> to vector<8x8xf32>
    %c0_7 = arith.constant 0 : index
    %c0_8 = arith.constant 0 : index
    %9 = vector.load %arg6[%c0_7, %c0_8] : memref<8x4xf32, #tpu.memory_space<vmem>>, vector<8x1xf32>
    %c0_9 = arith.constant 0 : index
    %c0_10 = arith.constant 0 : index
    %c0_11 = arith.constant 0 : index
    %10 = vector.load %arg7[%c0_9, %c0_10, %c0_11] : memref<4x16x9xf32, #tpu.memory_space<vmem>>, vector<1x16x9xf32>
    %11 = vector.shape_cast %10 : vector<1x16x9xf32> to vector<16x9xf32>
    %c0_12 = arith.constant 0 : index
    %c0_13 = arith.constant 0 : index
    %12 = vector.load %arg8[%c0_12, %c0_13] : memref<16x4xf32, #tpu.memory_space<vmem>>, vector<16x1xf32>
    %c0_14 = arith.constant 0 : index
    %c0_15 = arith.constant 0 : index
    %c0_16 = arith.constant 0 : index
    %13 = vector.load %arg9[%c0_14, %c0_15, %c0_16] : memref<3x16x16xf32, #tpu.memory_space<vmem>>, vector<1x16x16xf32>
    %14 = vector.shape_cast %13 : vector<1x16x16xf32> to vector<16x16xf32>
    %c0_17 = arith.constant 0 : index
    %c0_18 = arith.constant 0 : index
    %15 = vector.load %arg10[%c0_17, %c0_18] : memref<16x3xf32, #tpu.memory_space<vmem>>, vector<16x1xf32>
    %16 = vector.extract_strided_slice %6 {offsets = [8, 0], sizes = [8, 512], strides = [1, 1]} : vector<16x512xf32> to vector<8x512xf32>
    %cst = arith.constant dense<0.000000e+00> : vector<8x512xf32>
    %17 = tpu.matmul %8, %16, %cst {dimension_numbers = #tpu.dot_dimension_numbers<[1], [0], [0], [1], [0, 0, 1, 1], [], []>} : vector<8x8xf32>, vector<8x512xf32>, vector<8x512xf32> -> vector<8x512xf32>
    %18 = vector.broadcast %9 : vector<8x1xf32> to vector<8x512xf32>
    %19 = arith.addf %17, %18 : vector<8x512xf32>
    %20 = arith.negf %19 : vector<8x512xf32>
    %21 = math.exp %20 : vector<8x512xf32>
    %cst_19 = arith.constant 1.000000e+00 : f32
    %22 = vector.broadcast %cst_19 : f32 to vector<8x512xf32>
    %23 = arith.addf %22, %21 : vector<8x512xf32>
    %24 = arith.divf %22, %23 : vector<8x512xf32>
    %25 = arith.mulf %19, %24 : vector<8x512xf32>
    %26 = vector.extract_strided_slice %6 {offsets = [0, 0], sizes = [8, 512], strides = [1, 1]} : vector<16x512xf32> to vector<8x512xf32>
    %27 = tpu.concatenate %26, %25 in 0 : vector<8x512xf32>, vector<8x512xf32> -> vector<16x512xf32>
    %c1_i32 = arith.constant 1 : i32
    %28 = tpu.dynamic_rotate %27 by %c1_i32 dim 1 : vector<16x512xf32>, i32 -> vector<16x512xf32>
    %29 = vector.broadcast %1 : vector<1x512xf32> to vector<16x512xf32>
    %30 = arith.mulf %28, %29 : vector<16x512xf32>
    %c511_i32 = arith.constant 511 : i32
    %31 = tpu.dynamic_rotate %27 by %c511_i32 dim 1 : vector<16x512xf32>, i32 -> vector<16x512xf32>
    %32 = vector.broadcast %2 : vector<1x512xf32> to vector<16x512xf32>
    %33 = arith.mulf %31, %32 : vector<16x512xf32>
    %34 = vector.extract_strided_slice %11 {offsets = [0, 0], sizes = [16, 1], strides = [1, 1]} : vector<16x9xf32> to vector<16x1xf32>
    %35 = vector.broadcast %34 : vector<16x1xf32> to vector<16x512xf32>
    %36 = arith.mulf %30, %35 : vector<16x512xf32>
    %37 = vector.extract_strided_slice %11 {offsets = [0, 1], sizes = [16, 1], strides = [1, 1]} : vector<16x9xf32> to vector<16x1xf32>
    %38 = vector.broadcast %37 : vector<16x1xf32> to vector<16x512xf32>
    %39 = arith.mulf %27, %38 : vector<16x512xf32>
    %40 = arith.addf %36, %39 : vector<16x512xf32>
    %41 = vector.extract_strided_slice %11 {offsets = [0, 2], sizes = [16, 1], strides = [1, 1]} : vector<16x9xf32> to vector<16x1xf32>
    %42 = vector.broadcast %41 : vector<16x1xf32> to vector<16x512xf32>
    %43 = arith.mulf %33, %42 : vector<16x512xf32>
    %44 = arith.addf %40, %43 : vector<16x512xf32>
    %c16_i32 = arith.constant 16 : i32
    %45 = tpu.dynamic_rotate %44 by %c16_i32 dim 1 : vector<16x512xf32>, i32 -> vector<16x512xf32>
    %46 = vector.broadcast %3 : vector<1x512xf32> to vector<16x512xf32>
    %47 = arith.mulf %45, %46 : vector<16x512xf32>
    %48 = vector.extract_strided_slice %11 {offsets = [0, 3], sizes = [16, 1], strides = [1, 1]} : vector<16x9xf32> to vector<16x1xf32>
    %49 = vector.broadcast %48 : vector<16x1xf32> to vector<16x512xf32>
    %50 = arith.mulf %30, %49 : vector<16x512xf32>
    %51 = vector.extract_strided_slice %11 {offsets = [0, 4], sizes = [16, 1], strides = [1, 1]} : vector<16x9xf32> to vector<16x1xf32>
    %52 = vector.broadcast %51 : vector<16x1xf32> to vector<16x512xf32>
    %53 = arith.mulf %27, %52 : vector<16x512xf32>
    %54 = arith.addf %50, %53 : vector<16x512xf32>
    %55 = vector.extract_strided_slice %11 {offsets = [0, 5], sizes = [16, 1], strides = [1, 1]} : vector<16x9xf32> to vector<16x1xf32>
    %56 = vector.broadcast %55 : vector<16x1xf32> to vector<16x512xf32>
    %57 = arith.mulf %33, %56 : vector<16x512xf32>
    %58 = arith.addf %54, %57 : vector<16x512xf32>
    %59 = arith.addf %47, %58 : vector<16x512xf32>
    %60 = vector.extract_strided_slice %11 {offsets = [0, 6], sizes = [16, 1], strides = [1, 1]} : vector<16x9xf32> to vector<16x1xf32>
    %61 = vector.broadcast %60 : vector<16x1xf32> to vector<16x512xf32>
    %62 = arith.mulf %30, %61 : vector<16x512xf32>
    %63 = vector.extract_strided_slice %11 {offsets = [0, 7], sizes = [16, 1], strides = [1, 1]} : vector<16x9xf32> to vector<16x1xf32>
    %64 = vector.broadcast %63 : vector<16x1xf32> to vector<16x512xf32>
    %65 = arith.mulf %27, %64 : vector<16x512xf32>
    %66 = arith.addf %62, %65 : vector<16x512xf32>
    %67 = vector.extract_strided_slice %11 {offsets = [0, 8], sizes = [16, 1], strides = [1, 1]} : vector<16x9xf32> to vector<16x1xf32>
    %68 = vector.broadcast %67 : vector<16x1xf32> to vector<16x512xf32>
    %69 = arith.mulf %33, %68 : vector<16x512xf32>
    %70 = arith.addf %66, %69 : vector<16x512xf32>
    %c496_i32 = arith.constant 496 : i32
    %71 = tpu.dynamic_rotate %70 by %c496_i32 dim 1 : vector<16x512xf32>, i32 -> vector<16x512xf32>
    %72 = vector.broadcast %4 : vector<1x512xf32> to vector<16x512xf32>
    %73 = arith.mulf %71, %72 : vector<16x512xf32>
    %74 = arith.addf %59, %73 : vector<16x512xf32>
    %75 = vector.broadcast %12 : vector<16x1xf32> to vector<16x512xf32>
    %76 = arith.addf %74, %75 : vector<16x512xf32>
    %cst_20 = arith.constant dense<0.000000e+00> : vector<16x512xf32>
    %77 = tpu.matmul %14, %76, %cst_20 {dimension_numbers = #tpu.dot_dimension_numbers<[1], [0], [0], [1], [0, 0, 1, 1], [], []>} : vector<16x16xf32>, vector<16x512xf32>, vector<16x512xf32> -> vector<16x512xf32>
    %78 = vector.broadcast %15 : vector<16x1xf32> to vector<16x512xf32>
    %79 = arith.addf %77, %78 : vector<16x512xf32>
    %80 = arith.negf %79 : vector<16x512xf32>
    %81 = math.exp %80 : vector<16x512xf32>
    %cst_21 = arith.constant 1.000000e+00 : f32
    %82 = vector.broadcast %cst_21 : f32 to vector<16x512xf32>
    %83 = arith.addf %82, %81 : vector<16x512xf32>
    %84 = arith.divf %82, %83 : vector<16x512xf32>
    %85 = arith.mulf %79, %84 : vector<16x512xf32>
    %c1 = arith.constant 1 : index
    %c0_22 = arith.constant 0 : index
    %c0_23 = arith.constant 0 : index
    %86 = vector.load %arg5[%c1, %c0_22, %c0_23] : memref<4x8x8xf32, #tpu.memory_space<vmem>>, vector<1x8x8xf32>
    %87 = vector.shape_cast %86 : vector<1x8x8xf32> to vector<8x8xf32>
    %c0_24 = arith.constant 0 : index
    %c1_25 = arith.constant 1 : index
    %88 = vector.load %arg6[%c0_24, %c1_25] : memref<8x4xf32, #tpu.memory_space<vmem>>, vector<8x1xf32>
    %c1_26 = arith.constant 1 : index
    %c0_27 = arith.constant 0 : index
    %c0_28 = arith.constant 0 : index
    %89 = vector.load %arg7[%c1_26, %c0_27, %c0_28] : memref<4x16x9xf32, #tpu.memory_space<vmem>>, vector<1x16x9xf32>
    %90 = vector.shape_cast %89 : vector<1x16x9xf32> to vector<16x9xf32>
    %c0_29 = arith.constant 0 : index
    %c1_30 = arith.constant 1 : index
    %91 = vector.load %arg8[%c0_29, %c1_30] : memref<16x4xf32, #tpu.memory_space<vmem>>, vector<16x1xf32>
    %c1_31 = arith.constant 1 : index
    %c0_32 = arith.constant 0 : index
    %c0_33 = arith.constant 0 : index
    %92 = vector.load %arg9[%c1_31, %c0_32, %c0_33] : memref<3x16x16xf32, #tpu.memory_space<vmem>>, vector<1x16x16xf32>
    %93 = vector.shape_cast %92 : vector<1x16x16xf32> to vector<16x16xf32>
    %c0_34 = arith.constant 0 : index
    %c1_35 = arith.constant 1 : index
    %94 = vector.load %arg10[%c0_34, %c1_35] : memref<16x3xf32, #tpu.memory_space<vmem>>, vector<16x1xf32>
    %95 = vector.extract_strided_slice %85 {offsets = [8, 0], sizes = [8, 512], strides = [1, 1]} : vector<16x512xf32> to vector<8x512xf32>
    %cst_36 = arith.constant dense<0.000000e+00> : vector<8x512xf32>
    %96 = tpu.matmul %87, %95, %cst_36 {dimension_numbers = #tpu.dot_dimension_numbers<[1], [0], [0], [1], [0, 0, 1, 1], [], []>} : vector<8x8xf32>, vector<8x512xf32>, vector<8x512xf32> -> vector<8x512xf32>
    %97 = vector.broadcast %88 : vector<8x1xf32> to vector<8x512xf32>
    %98 = arith.addf %96, %97 : vector<8x512xf32>
    %99 = arith.negf %98 : vector<8x512xf32>
    %100 = math.exp %99 : vector<8x512xf32>
    %cst_37 = arith.constant 1.000000e+00 : f32
    %101 = vector.broadcast %cst_37 : f32 to vector<8x512xf32>
    %102 = arith.addf %101, %100 : vector<8x512xf32>
    %103 = arith.divf %101, %102 : vector<8x512xf32>
    %104 = arith.mulf %98, %103 : vector<8x512xf32>
    %105 = vector.extract_strided_slice %85 {offsets = [0, 0], sizes = [8, 512], strides = [1, 1]} : vector<16x512xf32> to vector<8x512xf32>
    %106 = tpu.concatenate %105, %104 in 0 : vector<8x512xf32>, vector<8x512xf32> -> vector<16x512xf32>
    %c1_i32_38 = arith.constant 1 : i32
    %107 = tpu.dynamic_rotate %106 by %c1_i32_38 dim 1 : vector<16x512xf32>, i32 -> vector<16x512xf32>
    %108 = vector.broadcast %1 : vector<1x512xf32> to vector<16x512xf32>
    %109 = arith.mulf %107, %108 : vector<16x512xf32>
    %c511_i32_39 = arith.constant 511 : i32
    %110 = tpu.dynamic_rotate %106 by %c511_i32_39 dim 1 : vector<16x512xf32>, i32 -> vector<16x512xf32>
    %111 = vector.broadcast %2 : vector<1x512xf32> to vector<16x512xf32>
    %112 = arith.mulf %110, %111 : vector<16x512xf32>
    %113 = vector.extract_strided_slice %90 {offsets = [0, 0], sizes = [16, 1], strides = [1, 1]} : vector<16x9xf32> to vector<16x1xf32>
    %114 = vector.broadcast %113 : vector<16x1xf32> to vector<16x512xf32>
    %115 = arith.mulf %109, %114 : vector<16x512xf32>
    %116 = vector.extract_strided_slice %90 {offsets = [0, 1], sizes = [16, 1], strides = [1, 1]} : vector<16x9xf32> to vector<16x1xf32>
    %117 = vector.broadcast %116 : vector<16x1xf32> to vector<16x512xf32>
    %118 = arith.mulf %106, %117 : vector<16x512xf32>
    %119 = arith.addf %115, %118 : vector<16x512xf32>
    %120 = vector.extract_strided_slice %90 {offsets = [0, 2], sizes = [16, 1], strides = [1, 1]} : vector<16x9xf32> to vector<16x1xf32>
    %121 = vector.broadcast %120 : vector<16x1xf32> to vector<16x512xf32>
    %122 = arith.mulf %112, %121 : vector<16x512xf32>
    %123 = arith.addf %119, %122 : vector<16x512xf32>
    %c16_i32_40 = arith.constant 16 : i32
    %124 = tpu.dynamic_rotate %123 by %c16_i32_40 dim 1 : vector<16x512xf32>, i32 -> vector<16x512xf32>
    %125 = vector.broadcast %3 : vector<1x512xf32> to vector<16x512xf32>
    %126 = arith.mulf %124, %125 : vector<16x512xf32>
    %127 = vector.extract_strided_slice %90 {offsets = [0, 3], sizes = [16, 1], strides = [1, 1]} : vector<16x9xf32> to vector<16x1xf32>
    %128 = vector.broadcast %127 : vector<16x1xf32> to vector<16x512xf32>
    %129 = arith.mulf %109, %128 : vector<16x512xf32>
    %130 = vector.extract_strided_slice %90 {offsets = [0, 4], sizes = [16, 1], strides = [1, 1]} : vector<16x9xf32> to vector<16x1xf32>
    %131 = vector.broadcast %130 : vector<16x1xf32> to vector<16x512xf32>
    %132 = arith.mulf %106, %131 : vector<16x512xf32>
    %133 = arith.addf %129, %132 : vector<16x512xf32>
    %134 = vector.extract_strided_slice %90 {offsets = [0, 5], sizes = [16, 1], strides = [1, 1]} : vector<16x9xf32> to vector<16x1xf32>
    %135 = vector.broadcast %134 : vector<16x1xf32> to vector<16x512xf32>
    %136 = arith.mulf %112, %135 : vector<16x512xf32>
    %137 = arith.addf %133, %136 : vector<16x512xf32>
    %138 = arith.addf %126, %137 : vector<16x512xf32>
    %139 = vector.extract_strided_slice %90 {offsets = [0, 6], sizes = [16, 1], strides = [1, 1]} : vector<16x9xf32> to vector<16x1xf32>
    %140 = vector.broadcast %139 : vector<16x1xf32> to vector<16x512xf32>
    %141 = arith.mulf %109, %140 : vector<16x512xf32>
    %142 = vector.extract_strided_slice %90 {offsets = [0, 7], sizes = [16, 1], strides = [1, 1]} : vector<16x9xf32> to vector<16x1xf32>
    %143 = vector.broadcast %142 : vector<16x1xf32> to vector<16x512xf32>
    %144 = arith.mulf %106, %143 : vector<16x512xf32>
    %145 = arith.addf %141, %144 : vector<16x512xf32>
    %146 = vector.extract_strided_slice %90 {offsets = [0, 8], sizes = [16, 1], strides = [1, 1]} : vector<16x9xf32> to vector<16x1xf32>
    %147 = vector.broadcast %146 : vector<16x1xf32> to vector<16x512xf32>
    %148 = arith.mulf %112, %147 : vector<16x512xf32>
    %149 = arith.addf %145, %148 : vector<16x512xf32>
    %c496_i32_41 = arith.constant 496 : i32
    %150 = tpu.dynamic_rotate %149 by %c496_i32_41 dim 1 : vector<16x512xf32>, i32 -> vector<16x512xf32>
    %151 = vector.broadcast %4 : vector<1x512xf32> to vector<16x512xf32>
    %152 = arith.mulf %150, %151 : vector<16x512xf32>
    %153 = arith.addf %138, %152 : vector<16x512xf32>
    %154 = vector.broadcast %91 : vector<16x1xf32> to vector<16x512xf32>
    %155 = arith.addf %153, %154 : vector<16x512xf32>
    %cst_42 = arith.constant dense<0.000000e+00> : vector<16x512xf32>
    %156 = tpu.matmul %93, %155, %cst_42 {dimension_numbers = #tpu.dot_dimension_numbers<[1], [0], [0], [1], [0, 0, 1, 1], [], []>} : vector<16x16xf32>, vector<16x512xf32>, vector<16x512xf32> -> vector<16x512xf32>
    %157 = vector.broadcast %94 : vector<16x1xf32> to vector<16x512xf32>
    %158 = arith.addf %156, %157 : vector<16x512xf32>
    %159 = arith.negf %158 : vector<16x512xf32>
    %160 = math.exp %159 : vector<16x512xf32>
    %cst_43 = arith.constant 1.000000e+00 : f32
    %161 = vector.broadcast %cst_43 : f32 to vector<16x512xf32>
    %162 = arith.addf %161, %160 : vector<16x512xf32>
    %163 = arith.divf %161, %162 : vector<16x512xf32>
    %164 = arith.mulf %158, %163 : vector<16x512xf32>
    %c2 = arith.constant 2 : index
    %c0_44 = arith.constant 0 : index
    %c0_45 = arith.constant 0 : index
    %165 = vector.load %arg5[%c2, %c0_44, %c0_45] : memref<4x8x8xf32, #tpu.memory_space<vmem>>, vector<1x8x8xf32>
    %166 = vector.shape_cast %165 : vector<1x8x8xf32> to vector<8x8xf32>
    %c0_46 = arith.constant 0 : index
    %c2_47 = arith.constant 2 : index
    %167 = vector.load %arg6[%c0_46, %c2_47] : memref<8x4xf32, #tpu.memory_space<vmem>>, vector<8x1xf32>
    %c2_48 = arith.constant 2 : index
    %c0_49 = arith.constant 0 : index
    %c0_50 = arith.constant 0 : index
    %168 = vector.load %arg7[%c2_48, %c0_49, %c0_50] : memref<4x16x9xf32, #tpu.memory_space<vmem>>, vector<1x16x9xf32>
    %169 = vector.shape_cast %168 : vector<1x16x9xf32> to vector<16x9xf32>
    %c0_51 = arith.constant 0 : index
    %c2_52 = arith.constant 2 : index
    %170 = vector.load %arg8[%c0_51, %c2_52] : memref<16x4xf32, #tpu.memory_space<vmem>>, vector<16x1xf32>
    %c2_53 = arith.constant 2 : index
    %c0_54 = arith.constant 0 : index
    %c0_55 = arith.constant 0 : index
    %171 = vector.load %arg9[%c2_53, %c0_54, %c0_55] : memref<3x16x16xf32, #tpu.memory_space<vmem>>, vector<1x16x16xf32>
    %172 = vector.shape_cast %171 : vector<1x16x16xf32> to vector<16x16xf32>
    %c0_56 = arith.constant 0 : index
    %c2_57 = arith.constant 2 : index
    %173 = vector.load %arg10[%c0_56, %c2_57] : memref<16x3xf32, #tpu.memory_space<vmem>>, vector<16x1xf32>
    %174 = vector.extract_strided_slice %164 {offsets = [8, 0], sizes = [8, 512], strides = [1, 1]} : vector<16x512xf32> to vector<8x512xf32>
    %cst_58 = arith.constant dense<0.000000e+00> : vector<8x512xf32>
    %175 = tpu.matmul %166, %174, %cst_58 {dimension_numbers = #tpu.dot_dimension_numbers<[1], [0], [0], [1], [0, 0, 1, 1], [], []>} : vector<8x8xf32>, vector<8x512xf32>, vector<8x512xf32> -> vector<8x512xf32>
    %176 = vector.broadcast %167 : vector<8x1xf32> to vector<8x512xf32>
    %177 = arith.addf %175, %176 : vector<8x512xf32>
    %178 = arith.negf %177 : vector<8x512xf32>
    %179 = math.exp %178 : vector<8x512xf32>
    %cst_59 = arith.constant 1.000000e+00 : f32
    %180 = vector.broadcast %cst_59 : f32 to vector<8x512xf32>
    %181 = arith.addf %180, %179 : vector<8x512xf32>
    %182 = arith.divf %180, %181 : vector<8x512xf32>
    %183 = arith.mulf %177, %182 : vector<8x512xf32>
    %184 = vector.extract_strided_slice %164 {offsets = [0, 0], sizes = [8, 512], strides = [1, 1]} : vector<16x512xf32> to vector<8x512xf32>
    %185 = tpu.concatenate %184, %183 in 0 : vector<8x512xf32>, vector<8x512xf32> -> vector<16x512xf32>
    %c1_i32_60 = arith.constant 1 : i32
    %186 = tpu.dynamic_rotate %185 by %c1_i32_60 dim 1 : vector<16x512xf32>, i32 -> vector<16x512xf32>
    %187 = vector.broadcast %1 : vector<1x512xf32> to vector<16x512xf32>
    %188 = arith.mulf %186, %187 : vector<16x512xf32>
    %c511_i32_61 = arith.constant 511 : i32
    %189 = tpu.dynamic_rotate %185 by %c511_i32_61 dim 1 : vector<16x512xf32>, i32 -> vector<16x512xf32>
    %190 = vector.broadcast %2 : vector<1x512xf32> to vector<16x512xf32>
    %191 = arith.mulf %189, %190 : vector<16x512xf32>
    %192 = vector.extract_strided_slice %169 {offsets = [0, 0], sizes = [16, 1], strides = [1, 1]} : vector<16x9xf32> to vector<16x1xf32>
    %193 = vector.broadcast %192 : vector<16x1xf32> to vector<16x512xf32>
    %194 = arith.mulf %188, %193 : vector<16x512xf32>
    %195 = vector.extract_strided_slice %169 {offsets = [0, 1], sizes = [16, 1], strides = [1, 1]} : vector<16x9xf32> to vector<16x1xf32>
    %196 = vector.broadcast %195 : vector<16x1xf32> to vector<16x512xf32>
    %197 = arith.mulf %185, %196 : vector<16x512xf32>
    %198 = arith.addf %194, %197 : vector<16x512xf32>
    %199 = vector.extract_strided_slice %169 {offsets = [0, 2], sizes = [16, 1], strides = [1, 1]} : vector<16x9xf32> to vector<16x1xf32>
    %200 = vector.broadcast %199 : vector<16x1xf32> to vector<16x512xf32>
    %201 = arith.mulf %191, %200 : vector<16x512xf32>
    %202 = arith.addf %198, %201 : vector<16x512xf32>
    %c16_i32_62 = arith.constant 16 : i32
    %203 = tpu.dynamic_rotate %202 by %c16_i32_62 dim 1 : vector<16x512xf32>, i32 -> vector<16x512xf32>
    %204 = vector.broadcast %3 : vector<1x512xf32> to vector<16x512xf32>
    %205 = arith.mulf %203, %204 : vector<16x512xf32>
    %206 = vector.extract_strided_slice %169 {offsets = [0, 3], sizes = [16, 1], strides = [1, 1]} : vector<16x9xf32> to vector<16x1xf32>
    %207 = vector.broadcast %206 : vector<16x1xf32> to vector<16x512xf32>
    %208 = arith.mulf %188, %207 : vector<16x512xf32>
    %209 = vector.extract_strided_slice %169 {offsets = [0, 4], sizes = [16, 1], strides = [1, 1]} : vector<16x9xf32> to vector<16x1xf32>
    %210 = vector.broadcast %209 : vector<16x1xf32> to vector<16x512xf32>
    %211 = arith.mulf %185, %210 : vector<16x512xf32>
    %212 = arith.addf %208, %211 : vector<16x512xf32>
    %213 = vector.extract_strided_slice %169 {offsets = [0, 5], sizes = [16, 1], strides = [1, 1]} : vector<16x9xf32> to vector<16x1xf32>
    %214 = vector.broadcast %213 : vector<16x1xf32> to vector<16x512xf32>
    %215 = arith.mulf %191, %214 : vector<16x512xf32>
    %216 = arith.addf %212, %215 : vector<16x512xf32>
    %217 = arith.addf %205, %216 : vector<16x512xf32>
    %218 = vector.extract_strided_slice %169 {offsets = [0, 6], sizes = [16, 1], strides = [1, 1]} : vector<16x9xf32> to vector<16x1xf32>
    %219 = vector.broadcast %218 : vector<16x1xf32> to vector<16x512xf32>
    %220 = arith.mulf %188, %219 : vector<16x512xf32>
    %221 = vector.extract_strided_slice %169 {offsets = [0, 7], sizes = [16, 1], strides = [1, 1]} : vector<16x9xf32> to vector<16x1xf32>
    %222 = vector.broadcast %221 : vector<16x1xf32> to vector<16x512xf32>
    %223 = arith.mulf %185, %222 : vector<16x512xf32>
    %224 = arith.addf %220, %223 : vector<16x512xf32>
    %225 = vector.extract_strided_slice %169 {offsets = [0, 8], sizes = [16, 1], strides = [1, 1]} : vector<16x9xf32> to vector<16x1xf32>
    %226 = vector.broadcast %225 : vector<16x1xf32> to vector<16x512xf32>
    %227 = arith.mulf %191, %226 : vector<16x512xf32>
    %228 = arith.addf %224, %227 : vector<16x512xf32>
    %c496_i32_63 = arith.constant 496 : i32
    %229 = tpu.dynamic_rotate %228 by %c496_i32_63 dim 1 : vector<16x512xf32>, i32 -> vector<16x512xf32>
    %230 = vector.broadcast %4 : vector<1x512xf32> to vector<16x512xf32>
    %231 = arith.mulf %229, %230 : vector<16x512xf32>
    %232 = arith.addf %217, %231 : vector<16x512xf32>
    %233 = vector.broadcast %170 : vector<16x1xf32> to vector<16x512xf32>
    %234 = arith.addf %232, %233 : vector<16x512xf32>
    %cst_64 = arith.constant dense<0.000000e+00> : vector<16x512xf32>
    %235 = tpu.matmul %172, %234, %cst_64 {dimension_numbers = #tpu.dot_dimension_numbers<[1], [0], [0], [1], [0, 0, 1, 1], [], []>} : vector<16x16xf32>, vector<16x512xf32>, vector<16x512xf32> -> vector<16x512xf32>
    %236 = vector.broadcast %173 : vector<16x1xf32> to vector<16x512xf32>
    %237 = arith.addf %235, %236 : vector<16x512xf32>
    %238 = arith.negf %237 : vector<16x512xf32>
    %239 = math.exp %238 : vector<16x512xf32>
    %cst_65 = arith.constant 1.000000e+00 : f32
    %240 = vector.broadcast %cst_65 : f32 to vector<16x512xf32>
    %241 = arith.addf %240, %239 : vector<16x512xf32>
    %242 = arith.divf %240, %241 : vector<16x512xf32>
    %243 = arith.mulf %237, %242 : vector<16x512xf32>
    %c3 = arith.constant 3 : index
    %c0_66 = arith.constant 0 : index
    %c0_67 = arith.constant 0 : index
    %244 = vector.load %arg5[%c3, %c0_66, %c0_67] : memref<4x8x8xf32, #tpu.memory_space<vmem>>, vector<1x8x8xf32>
    %245 = vector.shape_cast %244 : vector<1x8x8xf32> to vector<8x8xf32>
    %c0_68 = arith.constant 0 : index
    %c3_69 = arith.constant 3 : index
    %246 = vector.load %arg6[%c0_68, %c3_69] : memref<8x4xf32, #tpu.memory_space<vmem>>, vector<8x1xf32>
    %c3_70 = arith.constant 3 : index
    %c0_71 = arith.constant 0 : index
    %c0_72 = arith.constant 0 : index
    %247 = vector.load %arg7[%c3_70, %c0_71, %c0_72] : memref<4x16x9xf32, #tpu.memory_space<vmem>>, vector<1x16x9xf32>
    %248 = vector.shape_cast %247 : vector<1x16x9xf32> to vector<16x9xf32>
    %c0_73 = arith.constant 0 : index
    %c3_74 = arith.constant 3 : index
    %249 = vector.load %arg8[%c0_73, %c3_74] : memref<16x4xf32, #tpu.memory_space<vmem>>, vector<16x1xf32>
    %c0_75 = arith.constant 0 : index
    %c0_76 = arith.constant 0 : index
    %250 = vector.load %arg11[%c0_75, %c0_76] : memref<16x16xf32, #tpu.memory_space<vmem>>, vector<16x16xf32>
    %c0_77 = arith.constant 0 : index
    %c0_78 = arith.constant 0 : index
    %251 = vector.load %arg12[%c0_77, %c0_78] : memref<16x1xf32, #tpu.memory_space<vmem>>, vector<16x1xf32>
    %252 = vector.extract_strided_slice %243 {offsets = [8, 0], sizes = [8, 512], strides = [1, 1]} : vector<16x512xf32> to vector<8x512xf32>
    %cst_79 = arith.constant dense<0.000000e+00> : vector<8x512xf32>
    %253 = tpu.matmul %245, %252, %cst_79 {dimension_numbers = #tpu.dot_dimension_numbers<[1], [0], [0], [1], [0, 0, 1, 1], [], []>} : vector<8x8xf32>, vector<8x512xf32>, vector<8x512xf32> -> vector<8x512xf32>
    %254 = vector.broadcast %246 : vector<8x1xf32> to vector<8x512xf32>
    %255 = arith.addf %253, %254 : vector<8x512xf32>
    %256 = arith.negf %255 : vector<8x512xf32>
    %257 = math.exp %256 : vector<8x512xf32>
    %cst_80 = arith.constant 1.000000e+00 : f32
    %258 = vector.broadcast %cst_80 : f32 to vector<8x512xf32>
    %259 = arith.addf %258, %257 : vector<8x512xf32>
    %260 = arith.divf %258, %259 : vector<8x512xf32>
    %261 = arith.mulf %255, %260 : vector<8x512xf32>
    %262 = vector.extract_strided_slice %243 {offsets = [0, 0], sizes = [8, 512], strides = [1, 1]} : vector<16x512xf32> to vector<8x512xf32>
    %263 = tpu.concatenate %262, %261 in 0 : vector<8x512xf32>, vector<8x512xf32> -> vector<16x512xf32>
    %c1_i32_81 = arith.constant 1 : i32
    %264 = tpu.dynamic_rotate %263 by %c1_i32_81 dim 1 : vector<16x512xf32>, i32 -> vector<16x512xf32>
    %265 = vector.broadcast %1 : vector<1x512xf32> to vector<16x512xf32>
    %266 = arith.mulf %264, %265 : vector<16x512xf32>
    %c511_i32_82 = arith.constant 511 : i32
    %267 = tpu.dynamic_rotate %263 by %c511_i32_82 dim 1 : vector<16x512xf32>, i32 -> vector<16x512xf32>
    %268 = vector.broadcast %2 : vector<1x512xf32> to vector<16x512xf32>
    %269 = arith.mulf %267, %268 : vector<16x512xf32>
    %270 = vector.extract_strided_slice %248 {offsets = [0, 0], sizes = [16, 1], strides = [1, 1]} : vector<16x9xf32> to vector<16x1xf32>
    %271 = vector.broadcast %270 : vector<16x1xf32> to vector<16x512xf32>
    %272 = arith.mulf %266, %271 : vector<16x512xf32>
    %273 = vector.extract_strided_slice %248 {offsets = [0, 1], sizes = [16, 1], strides = [1, 1]} : vector<16x9xf32> to vector<16x1xf32>
    %274 = vector.broadcast %273 : vector<16x1xf32> to vector<16x512xf32>
    %275 = arith.mulf %263, %274 : vector<16x512xf32>
    %276 = arith.addf %272, %275 : vector<16x512xf32>
    %277 = vector.extract_strided_slice %248 {offsets = [0, 2], sizes = [16, 1], strides = [1, 1]} : vector<16x9xf32> to vector<16x1xf32>
    %278 = vector.broadcast %277 : vector<16x1xf32> to vector<16x512xf32>
    %279 = arith.mulf %269, %278 : vector<16x512xf32>
    %280 = arith.addf %276, %279 : vector<16x512xf32>
    %c16_i32_83 = arith.constant 16 : i32
    %281 = tpu.dynamic_rotate %280 by %c16_i32_83 dim 1 : vector<16x512xf32>, i32 -> vector<16x512xf32>
    %282 = vector.broadcast %3 : vector<1x512xf32> to vector<16x512xf32>
    %283 = arith.mulf %281, %282 : vector<16x512xf32>
    %284 = vector.extract_strided_slice %248 {offsets = [0, 3], sizes = [16, 1], strides = [1, 1]} : vector<16x9xf32> to vector<16x1xf32>
    %285 = vector.broadcast %284 : vector<16x1xf32> to vector<16x512xf32>
    %286 = arith.mulf %266, %285 : vector<16x512xf32>
    %287 = vector.extract_strided_slice %248 {offsets = [0, 4], sizes = [16, 1], strides = [1, 1]} : vector<16x9xf32> to vector<16x1xf32>
    %288 = vector.broadcast %287 : vector<16x1xf32> to vector<16x512xf32>
    %289 = arith.mulf %263, %288 : vector<16x512xf32>
    %290 = arith.addf %286, %289 : vector<16x512xf32>
    %291 = vector.extract_strided_slice %248 {offsets = [0, 5], sizes = [16, 1], strides = [1, 1]} : vector<16x9xf32> to vector<16x1xf32>
    %292 = vector.broadcast %291 : vector<16x1xf32> to vector<16x512xf32>
    %293 = arith.mulf %269, %292 : vector<16x512xf32>
    %294 = arith.addf %290, %293 : vector<16x512xf32>
    %295 = arith.addf %283, %294 : vector<16x512xf32>
    %296 = vector.extract_strided_slice %248 {offsets = [0, 6], sizes = [16, 1], strides = [1, 1]} : vector<16x9xf32> to vector<16x1xf32>
    %297 = vector.broadcast %296 : vector<16x1xf32> to vector<16x512xf32>
    %298 = arith.mulf %266, %297 : vector<16x512xf32>
    %299 = vector.extract_strided_slice %248 {offsets = [0, 7], sizes = [16, 1], strides = [1, 1]} : vector<16x9xf32> to vector<16x1xf32>
    %300 = vector.broadcast %299 : vector<16x1xf32> to vector<16x512xf32>
    %301 = arith.mulf %263, %300 : vector<16x512xf32>
    %302 = arith.addf %298, %301 : vector<16x512xf32>
    %303 = vector.extract_strided_slice %248 {offsets = [0, 8], sizes = [16, 1], strides = [1, 1]} : vector<16x9xf32> to vector<16x1xf32>
    %304 = vector.broadcast %303 : vector<16x1xf32> to vector<16x512xf32>
    %305 = arith.mulf %269, %304 : vector<16x512xf32>
    %306 = arith.addf %302, %305 : vector<16x512xf32>
    %c496_i32_84 = arith.constant 496 : i32
    %307 = tpu.dynamic_rotate %306 by %c496_i32_84 dim 1 : vector<16x512xf32>, i32 -> vector<16x512xf32>
    %308 = vector.broadcast %4 : vector<1x512xf32> to vector<16x512xf32>
    %309 = arith.mulf %307, %308 : vector<16x512xf32>
    %310 = arith.addf %295, %309 : vector<16x512xf32>
    %311 = vector.broadcast %249 : vector<16x1xf32> to vector<16x512xf32>
    %312 = arith.addf %310, %311 : vector<16x512xf32>
    %cst_85 = arith.constant dense<0.000000e+00> : vector<16x512xf32>
    %313 = tpu.matmul %250, %312, %cst_85 {dimension_numbers = #tpu.dot_dimension_numbers<[1], [0], [0], [1], [0, 0, 1, 1], [], []>} : vector<16x16xf32>, vector<16x512xf32>, vector<16x512xf32> -> vector<16x512xf32>
    %314 = vector.broadcast %251 : vector<16x1xf32> to vector<16x512xf32>
    %315 = arith.addf %313, %314 : vector<16x512xf32>
    %316 = arith.negf %315 : vector<16x512xf32>
    %317 = math.exp %316 : vector<16x512xf32>
    %cst_86 = arith.constant 1.000000e+00 : f32
    %318 = vector.broadcast %cst_86 : f32 to vector<16x512xf32>
    %319 = arith.addf %318, %317 : vector<16x512xf32>
    %320 = arith.divf %318, %319 : vector<16x512xf32>
    %321 = arith.mulf %315, %320 : vector<16x512xf32>
    %c0_87 = arith.constant 0 : index
    %c0_88 = arith.constant 0 : index
    %c0_89 = arith.constant 0 : index
    %322 = vector.load %arg20[%c0_87, %c0_88, %c0_89] : memref<1x16x512xf32, #tpu.memory_space<vmem>>, vector<1x16x512xf32>
    %323 = vector.shape_cast %322 : vector<1x16x512xf32> to vector<16x512xf32>
    %324 = vector.shape_cast %321 : vector<16x512xf32> to vector<1x16x512xf32>
    tpu.vector_store %arg20[%c0_87, %c0_88, %c0_89], %324 {strides = array<i32>} : memref<1x16x512xf32, #tpu.memory_space<vmem>>, vector<1x16x512xf32>,
    %c0_90 = arith.constant 0 : index
    %c0_91 = arith.constant 0 : index
    %c0_92 = arith.constant 0 : index
    %325 = vector.load %arg2[%c0_90, %c0_91, %c0_92] : memref<1x16x512xf32, #tpu.memory_space<vmem>>, vector<1x16x512xf32>
    %326 = vector.shape_cast %325 : vector<1x16x512xf32> to vector<16x512xf32>
    %327 = arith.addf %321, %326 : vector<16x512xf32>
    %328 = arith.negf %327 : vector<16x512xf32>
    %329 = math.exp %328 : vector<16x512xf32>
    %cst_93 = arith.constant 1.000000e+00 : f32
    %330 = vector.broadcast %cst_93 : f32 to vector<16x512xf32>
    %331 = arith.addf %330, %329 : vector<16x512xf32>
    %332 = arith.divf %330, %331 : vector<16x512xf32>
    %333 = arith.mulf %327, %332 : vector<16x512xf32>
    %c0_94 = arith.constant 0 : index
    %c0_95 = arith.constant 0 : index
    %334 = vector.load %arg13[%c0_94, %c0_95] : memref<16x16xf32, #tpu.memory_space<vmem>>, vector<16x16xf32>
    %c0_96 = arith.constant 0 : index
    %c0_97 = arith.constant 0 : index
    %335 = vector.load %arg14[%c0_96, %c0_97] : memref<16x1xf32, #tpu.memory_space<vmem>>, vector<16x1xf32>
    %cst_98 = arith.constant dense<0.000000e+00> : vector<16x512xf32>
    %336 = tpu.matmul %334, %333, %cst_98 {dimension_numbers = #tpu.dot_dimension_numbers<[1], [0], [0], [1], [0, 0, 1, 1], [], []>} : vector<16x16xf32>, vector<16x512xf32>, vector<16x512xf32> -> vector<16x512xf32>
    %337 = vector.broadcast %335 : vector<16x1xf32> to vector<16x512xf32>
    %338 = arith.addf %336, %337 : vector<16x512xf32>
    %339 = arith.negf %338 : vector<16x512xf32>
    %340 = math.exp %339 : vector<16x512xf32>
    %cst_99 = arith.constant 1.000000e+00 : f32
    %341 = vector.broadcast %cst_99 : f32 to vector<16x512xf32>
    %342 = arith.addf %341, %340 : vector<16x512xf32>
    %343 = arith.divf %341, %342 : vector<16x512xf32>
    %344 = arith.mulf %338, %343 : vector<16x512xf32>
    %345 = tpu.concatenate %333, %344 in 0 : vector<16x512xf32>, vector<16x512xf32> -> vector<32x512xf32>
    %c0_100 = arith.constant 0 : index
    %c0_101 = arith.constant 0 : index
    %346 = vector.load %arg15[%c0_100, %c0_101] : memref<32x9xf32, #tpu.memory_space<vmem>>, vector<32x9xf32>
    %c1_i32_102 = arith.constant 1 : i32
    %347 = tpu.dynamic_rotate %345 by %c1_i32_102 dim 1 : vector<32x512xf32>, i32 -> vector<32x512xf32>
    %348 = vector.broadcast %1 : vector<1x512xf32> to vector<32x512xf32>
    %349 = arith.mulf %347, %348 : vector<32x512xf32>
    %c511_i32_103 = arith.constant 511 : i32
    %350 = tpu.dynamic_rotate %345 by %c511_i32_103 dim 1 : vector<32x512xf32>, i32 -> vector<32x512xf32>
    %351 = vector.broadcast %2 : vector<1x512xf32> to vector<32x512xf32>
    %352 = arith.mulf %350, %351 : vector<32x512xf32>
    %353 = vector.extract_strided_slice %346 {offsets = [0, 0], sizes = [32, 1], strides = [1, 1]} : vector<32x9xf32> to vector<32x1xf32>
    %354 = vector.broadcast %353 : vector<32x1xf32> to vector<32x512xf32>
    %355 = arith.mulf %349, %354 : vector<32x512xf32>
    %356 = vector.extract_strided_slice %346 {offsets = [0, 1], sizes = [32, 1], strides = [1, 1]} : vector<32x9xf32> to vector<32x1xf32>
    %357 = vector.broadcast %356 : vector<32x1xf32> to vector<32x512xf32>
    %358 = arith.mulf %345, %357 : vector<32x512xf32>
    %359 = arith.addf %355, %358 : vector<32x512xf32>
    %360 = vector.extract_strided_slice %346 {offsets = [0, 2], sizes = [32, 1], strides = [1, 1]} : vector<32x9xf32> to vector<32x1xf32>
    %361 = vector.broadcast %360 : vector<32x1xf32> to vector<32x512xf32>
    %362 = arith.mulf %352, %361 : vector<32x512xf32>
    %363 = arith.addf %359, %362 : vector<32x512xf32>
    %c16_i32_104 = arith.constant 16 : i32
    %364 = tpu.dynamic_rotate %363 by %c16_i32_104 dim 1 : vector<32x512xf32>, i32 -> vector<32x512xf32>
    %365 = vector.broadcast %3 : vector<1x512xf32> to vector<32x512xf32>
    %366 = arith.mulf %364, %365 : vector<32x512xf32>
    %367 = vector.extract_strided_slice %346 {offsets = [0, 3], sizes = [32, 1], strides = [1, 1]} : vector<32x9xf32> to vector<32x1xf32>
    %368 = vector.broadcast %367 : vector<32x1xf32> to vector<32x512xf32>
    %369 = arith.mulf %349, %368 : vector<32x512xf32>
    %370 = vector.extract_strided_slice %346 {offsets = [0, 4], sizes = [32, 1], strides = [1, 1]} : vector<32x9xf32> to vector<32x1xf32>
    %371 = vector.broadcast %370 : vector<32x1xf32> to vector<32x512xf32>
    %372 = arith.mulf %345, %371 : vector<32x512xf32>
    %373 = arith.addf %369, %372 : vector<32x512xf32>
    %374 = vector.extract_strided_slice %346 {offsets = [0, 5], sizes = [32, 1], strides = [1, 1]} : vector<32x9xf32> to vector<32x1xf32>
    %375 = vector.broadcast %374 : vector<32x1xf32> to vector<32x512xf32>
    %376 = arith.mulf %352, %375 : vector<32x512xf32>
    %377 = arith.addf %373, %376 : vector<32x512xf32>
    %378 = arith.addf %366, %377 : vector<32x512xf32>
    %379 = vector.extract_strided_slice %346 {offsets = [0, 6], sizes = [32, 1], strides = [1, 1]} : vector<32x9xf32> to vector<32x1xf32>
    %380 = vector.broadcast %379 : vector<32x1xf32> to vector<32x512xf32>
    %381 = arith.mulf %349, %380 : vector<32x512xf32>
    %382 = vector.extract_strided_slice %346 {offsets = [0, 7], sizes = [32, 1], strides = [1, 1]} : vector<32x9xf32> to vector<32x1xf32>
    %383 = vector.broadcast %382 : vector<32x1xf32> to vector<32x512xf32>
    %384 = arith.mulf %345, %383 : vector<32x512xf32>
    %385 = arith.addf %381, %384 : vector<32x512xf32>
    %386 = vector.extract_strided_slice %346 {offsets = [0, 8], sizes = [32, 1], strides = [1, 1]} : vector<32x9xf32> to vector<32x1xf32>
    %387 = vector.broadcast %386 : vector<32x1xf32> to vector<32x512xf32>
    %388 = arith.mulf %352, %387 : vector<32x512xf32>
    %389 = arith.addf %385, %388 : vector<32x512xf32>
    %c496_i32_105 = arith.constant 496 : i32
    %390 = tpu.dynamic_rotate %389 by %c496_i32_105 dim 1 : vector<32x512xf32>, i32 -> vector<32x512xf32>
    %391 = vector.broadcast %4 : vector<1x512xf32> to vector<32x512xf32>
    %392 = arith.mulf %390, %391 : vector<32x512xf32>
    %393 = arith.addf %378, %392 : vector<32x512xf32>
    %c0_106 = arith.constant 0 : index
    %c0_107 = arith.constant 0 : index
    %394 = vector.load %arg4[%c0_106, %c0_107] : memref<256x64xf32, #tpu.memory_space<vmem>>, vector<256x64xf32>
    %395 = vector.extract_strided_slice %393 {offsets = [0, 0], sizes = [32, 256], strides = [1, 1]} : vector<32x512xf32> to vector<32x256xf32>
    %cst_108 = arith.constant dense<0.000000e+00> : vector<32x64xf32>
    %396 = tpu.matmul %395, %394, %cst_108 {dimension_numbers = #tpu.dot_dimension_numbers<[1], [0], [0], [1], [0, 0, 1, 1], [], []>} : vector<32x256xf32>, vector<256x64xf32>, vector<32x64xf32> -> vector<32x64xf32>
    %397 = vector.extract_strided_slice %393 {offsets = [0, 256], sizes = [32, 256], strides = [1, 1]} : vector<32x512xf32> to vector<32x256xf32>
    %cst_109 = arith.constant dense<0.000000e+00> : vector<32x64xf32>
    %398 = tpu.matmul %397, %394, %cst_109 {dimension_numbers = #tpu.dot_dimension_numbers<[1], [0], [0], [1], [0, 0, 1, 1], [], []>} : vector<32x256xf32>, vector<256x64xf32>, vector<32x64xf32> -> vector<32x64xf32>
    %399 = tpu.concatenate %396, %398 in 1 : vector<32x64xf32>, vector<32x64xf32> -> vector<32x128xf32>
    %c0_110 = arith.constant 0 : index
    %c0_111 = arith.constant 0 : index
    %400 = vector.load %arg16[%c0_110, %c0_111] : memref<32x1xf32, #tpu.memory_space<vmem>>, vector<32x1xf32>
    %401 = vector.broadcast %400 : vector<32x1xf32> to vector<32x128xf32>
    %402 = arith.addf %399, %401 : vector<32x128xf32>
    %c0_112 = arith.constant 0 : index
    %c0_113 = arith.constant 0 : index
    %403 = vector.load %arg17[%c0_112, %c0_113] : memref<32x32xf32, #tpu.memory_space<vmem>>, vector<32x32xf32>
    %c0_114 = arith.constant 0 : index
    %c0_115 = arith.constant 0 : index
    %404 = vector.load %arg18[%c0_114, %c0_115] : memref<32x1xf32, #tpu.memory_space<vmem>>, vector<32x1xf32>
    %cst_116 = arith.constant dense<0.000000e+00> : vector<32x128xf32>
    %405 = tpu.matmul %403, %402, %cst_116 {dimension_numbers = #tpu.dot_dimension_numbers<[1], [0], [0], [1], [0, 0, 1, 1], [], []>} : vector<32x32xf32>, vector<32x128xf32>, vector<32x128xf32> -> vector<32x128xf32>
    %406 = vector.broadcast %404 : vector<32x1xf32> to vector<32x128xf32>
    %407 = arith.addf %405, %406 : vector<32x128xf32>
    %408 = arith.negf %407 : vector<32x128xf32>
    %409 = math.exp %408 : vector<32x128xf32>
    %cst_117 = arith.constant 1.000000e+00 : f32
    %410 = vector.broadcast %cst_117 : f32 to vector<32x128xf32>
    %411 = arith.addf %410, %409 : vector<32x128xf32>
    %412 = arith.divf %410, %411 : vector<32x128xf32>
    %413 = arith.mulf %407, %412 : vector<32x128xf32>
    %c0_118 = arith.constant 0 : index
    %c0_119 = arith.constant 0 : index
    %c0_120 = arith.constant 0 : index
    %414 = vector.load %arg19[%c0_118, %c0_119, %c0_120] : memref<1x32x128xf32, #tpu.memory_space<vmem>>, vector<1x32x128xf32>
    %415 = vector.shape_cast %414 : vector<1x32x128xf32> to vector<32x128xf32>
    %416 = vector.shape_cast %413 : vector<32x128xf32> to vector<1x32x128xf32>
    tpu.vector_store %arg19[%c0_118, %c0_119, %c0_120], %416 {strides = array<i32>} : memref<1x32x128xf32, #tpu.memory_space<vmem>>, vector<1x32x128xf32>,
    return
  }
  func.func @transform_0(%arg0: i32) -> (i32, i32, i32) {
    %c0_i32 = arith.constant 0 : i32
    %c0_i32_0 = arith.constant 0 : i32
    %c0_i32_1 = arith.constant 0 : i32
    return %arg0, %c0_i32, %c0_i32_0 : i32, i32, i32
  }
  func.func @transform_1(%arg0: i32) -> (i32, i32, i32) {
    %c0_i32 = arith.constant 0 : i32
    %c0_i32_0 = arith.constant 0 : i32
    %c0_i32_1 = arith.constant 0 : i32
    return %arg0, %c0_i32, %c0_i32_0 : i32, i32, i32
  }
  func.func @transform_2(%arg0: i32) -> (i32, i32) {
    %c0_i32 = arith.constant 0 : i32
    %c0_i32_0 = arith.constant 0 : i32
    %c0_i32_1 = arith.constant 0 : i32
    return %c0_i32, %c0_i32_0 : i32, i32
  }
  func.func @transform_3(%arg0: i32) -> (i32, i32) {
    %c0_i32 = arith.constant 0 : i32
    %c0_i32_0 = arith.constant 0 : i32
    %c0_i32_1 = arith.constant 0 : i32
    return %c0_i32, %c0_i32_0 : i32, i32
  }
  func.func @transform_4(%arg0: i32) -> (i32, i32, i32) {
    %c0_i32 = arith.constant 0 : i32
    %c0_i32_0 = arith.constant 0 : i32
    %c0_i32_1 = arith.constant 0 : i32
    %c0_i32_2 = arith.constant 0 : i32
    return %c0_i32, %c0_i32_0, %c0_i32_1 : i32, i32, i32
  }
  func.func @transform_5(%arg0: i32) -> (i32, i32) {
    %c0_i32 = arith.constant 0 : i32
    %c0_i32_0 = arith.constant 0 : i32
    %c0_i32_1 = arith.constant 0 : i32
    return %c0_i32, %c0_i32_0 : i32, i32
  }
  func.func @transform_6(%arg0: i32) -> (i32, i32, i32) {
    %c0_i32 = arith.constant 0 : i32
    %c0_i32_0 = arith.constant 0 : i32
    %c0_i32_1 = arith.constant 0 : i32
    %c0_i32_2 = arith.constant 0 : i32
    return %c0_i32, %c0_i32_0, %c0_i32_1 : i32, i32, i32
  }
  func.func @transform_7(%arg0: i32) -> (i32, i32) {
    %c0_i32 = arith.constant 0 : i32
    %c0_i32_0 = arith.constant 0 : i32
    %c0_i32_1 = arith.constant 0 : i32
    return %c0_i32, %c0_i32_0 : i32, i32
  }
  func.func @transform_8(%arg0: i32) -> (i32, i32, i32) {
    %c0_i32 = arith.constant 0 : i32
    %c0_i32_0 = arith.constant 0 : i32
    %c0_i32_1 = arith.constant 0 : i32
    %c0_i32_2 = arith.constant 0 : i32
    return %c0_i32, %c0_i32_0, %c0_i32_1 : i32, i32, i32
  }
  func.func @transform_9(%arg0: i32) -> (i32, i32) {
    %c0_i32 = arith.constant 0 : i32
    %c0_i32_0 = arith.constant 0 : i32
    %c0_i32_1 = arith.constant 0 : i32
    return %c0_i32, %c0_i32_0 : i32, i32
  }
  func.func @transform_10(%arg0: i32) -> (i32, i32) {
    %c0_i32 = arith.constant 0 : i32
    %c0_i32_0 = arith.constant 0 : i32
    %c0_i32_1 = arith.constant 0 : i32
    return %c0_i32, %c0_i32_0 : i32, i32
  }
  func.func @transform_11(%arg0: i32) -> (i32, i32) {
    %c0_i32 = arith.constant 0 : i32
    %c0_i32_0 = arith.constant 0 : i32
    %c0_i32_1 = arith.constant 0 : i32
    return %c0_i32, %c0_i32_0 : i32, i32
  }
  func.func @transform_12(%arg0: i32) -> (i32, i32) {
    %c0_i32 = arith.constant 0 : i32
    %c0_i32_0 = arith.constant 0 : i32
    %c0_i32_1 = arith.constant 0 : i32
    return %c0_i32, %c0_i32_0 : i32, i32
  }
  func.func @transform_13(%arg0: i32) -> (i32, i32) {
    %c0_i32 = arith.constant 0 : i32
    %c0_i32_0 = arith.constant 0 : i32
    %c0_i32_1 = arith.constant 0 : i32
    return %c0_i32, %c0_i32_0 : i32, i32
  }
  func.func @transform_14(%arg0: i32) -> (i32, i32) {
    %c0_i32 = arith.constant 0 : i32
    %c0_i32_0 = arith.constant 0 : i32
    %c0_i32_1 = arith.constant 0 : i32
    return %c0_i32, %c0_i32_0 : i32, i32
  }
  func.func @transform_15(%arg0: i32) -> (i32, i32) {
    %c0_i32 = arith.constant 0 : i32
    %c0_i32_0 = arith.constant 0 : i32
    %c0_i32_1 = arith.constant 0 : i32
    return %c0_i32, %c0_i32_0 : i32, i32
  }
  func.func @transform_16(%arg0: i32) -> (i32, i32) {
    %c0_i32 = arith.constant 0 : i32
    %c0_i32_0 = arith.constant 0 : i32
    %c0_i32_1 = arith.constant 0 : i32
    return %c0_i32, %c0_i32_0 : i32, i32
  }
  func.func @transform_17(%arg0: i32) -> (i32, i32) {
    %c0_i32 = arith.constant 0 : i32
    %c0_i32_0 = arith.constant 0 : i32
    %c0_i32_1 = arith.constant 0 : i32
    return %c0_i32, %c0_i32_0 : i32, i32
  }
  func.func @transform_18(%arg0: i32) -> (i32, i32, i32) {
    %c0_i32 = arith.constant 0 : i32
    %c0_i32_0 = arith.constant 0 : i32
    %c0_i32_1 = arith.constant 0 : i32
    return %arg0, %c0_i32, %c0_i32_0 : i32, i32, i32
  }
  func.func @transform_19(%arg0: i32) -> (i32, i32, i32) {
    %c0_i32 = arith.constant 0 : i32
    %c0_i32_0 = arith.constant 0 : i32
    %c0_i32_1 = arith.constant 0 : i32
    return %arg0, %c0_i32, %c0_i32_0 : i32, i32, i32
  }
}

</mosaic_0001>

<llo_original>
// kernel: encoder_block_forward.1
$region0: #{encoder_block_forward.1}
  #allocation0 [shape = 'u32[]', space=smem, size = 0x4, offset = 0x4, fixed_abs, tag = 'smem constant byte address 0x4 - core index']
  #allocation1 [shape = 'u32[144,128]{1,0:T(1,128)}', space=vmem, size = 0x12000, scoped, tag = 'internal scratch']
  %s0 = inlined_call_operand.vmem [shape: f32[1,16,512], index: 0, kind: input, shape index: {}]
  %s1 = inlined_call_operand.vmem [shape: f32[1,16,512], index: 1, kind: input, shape index: {}]
  %s2 = inlined_call_operand.vmem [shape: f32[4,512], index: 2, kind: input, shape index: {}]
  %s3 = inlined_call_operand.vmem [shape: f32[256,64], index: 3, kind: input, shape index: {}]
  %s4 = inlined_call_operand.vmem [shape: f32[4,8,8], index: 4, kind: input, shape index: {}]
  %s5 = inlined_call_operand.vmem [shape: f32[8,4], index: 5, kind: input, shape index: {}]
  %s6 = inlined_call_operand.vmem [shape: f32[4,16,9], index: 6, kind: input, shape index: {}]
  %s7 = inlined_call_operand.vmem [shape: f32[16,4], index: 7, kind: input, shape index: {}]
  %s8 = inlined_call_operand.vmem [shape: f32[3,16,16], index: 8, kind: input, shape index: {}]
  %s9 = inlined_call_operand.vmem [shape: f32[16,3], index: 9, kind: input, shape index: {}]
  %s10 = inlined_call_operand.vmem [shape: f32[16,16], index: 10, kind: input, shape index: {}]
  %s11 = inlined_call_operand.vmem [shape: f32[16,1], index: 11, kind: input, shape index: {}]
  %s12 = inlined_call_operand.vmem [shape: f32[16,16], index: 12, kind: input, shape index: {}]
  %s13 = inlined_call_operand.vmem [shape: f32[16,1], index: 13, kind: input, shape index: {}]
  %s14 = inlined_call_operand.vmem [shape: f32[32,9], index: 14, kind: input, shape index: {}]
  %s15 = inlined_call_operand.vmem [shape: f32[32,1], index: 15, kind: input, shape index: {}]
  %s16 = inlined_call_operand.vmem [shape: f32[32,32], index: 16, kind: input, shape index: {}]
  %s17 = inlined_call_operand.vmem [shape: f32[32,1], index: 17, kind: input, shape index: {}]
  %s18 = inlined_call_operand.vmem [shape: f32[1,32,128], index: 18, kind: output, shape index: {0}]
  %s19 = inlined_call_operand.vmem [shape: f32[1,16,512], index: 19, kind: output, shape index: {1}]
  %20 = xla_tuple %s18, %s19
  %s21 = sld [smem:[#allocation0]]
  $region90: #{encoder_block_forward.1} parent=0
    _
  %s23 = ssub.s32 1, %s21
  %s24 = scalar_select 0, %s23, %s21
  // Predicated region
  $region2: #{encoder_block_forward.1} parent=0 // pred_check
    _
  $region3: #{encoder_block_forward.1} parent=0 // pred_check_branch
    %26 = sbr.rel (0) target = $region5
  $region4: #{encoder_block_forward.1} parent=0 // pred_region
    _
  $region5: #{encoder_block_forward.1} parent=0 // pred_fallthru
    _
  // Predicated region
  $region6: #{encoder_block_forward.1} parent=0 // pred_check
    _
  $region7: #{encoder_block_forward.1} parent=0 // pred_check_branch
    %28 = sbr.rel (0) target = $region9
  $region8: #{encoder_block_forward.1} parent=0 // pred_region
    _
  $region9: #{encoder_block_forward.1} parent=0 // pred_fallthru
    _
  // Predicated region
  $region10: #{encoder_block_forward.1} parent=0 // pred_check
    _
  $region11: #{encoder_block_forward.1} parent=0 // pred_check_branch
    %30 = sbr.rel (0) target = $region13
  $region12: #{encoder_block_forward.1} parent=0 // pred_region
    _
  $region13: #{encoder_block_forward.1} parent=0 // pred_fallthru
    _
  // Predicated region
  $region14: #{encoder_block_forward.1} parent=0 // pred_check
    _
  $region15: #{encoder_block_forward.1} parent=0 // pred_check_branch
    %32 = sbr.rel (0) target = $region17
  $region16: #{encoder_block_forward.1} parent=0 // pred_region
    _
  $region17: #{encoder_block_forward.1} parent=0 // pred_fallthru
    _
  // Predicated region
  $region18: #{encoder_block_forward.1} parent=0 // pred_check
    _
  $region19: #{encoder_block_forward.1} parent=0 // pred_check_branch
    %34 = sbr.rel (0) target = $region21
  $region20: #{encoder_block_forward.1} parent=0 // pred_region
    _
  $region21: #{encoder_block_forward.1} parent=0 // pred_fallthru
    _
  // Predicated region
  $region22: #{encoder_block_forward.1} parent=0 // pred_check
    _
  $region23: #{encoder_block_forward.1} parent=0 // pred_check_branch
    %36 = sbr.rel (0) target = $region25
  $region24: #{encoder_block_forward.1} parent=0 // pred_region
    _
  $region25: #{encoder_block_forward.1} parent=0 // pred_fallthru
    _
  // Predicated region
  $region26: #{encoder_block_forward.1} parent=0 // pred_check
    _
  $region27: #{encoder_block_forward.1} parent=0 // pred_check_branch
    %38 = sbr.rel (0) target = $region29
  $region28: #{encoder_block_forward.1} parent=0 // pred_region
    _
  $region29: #{encoder_block_forward.1} parent=0 // pred_fallthru
    _
  // Predicated region
  $region30: #{encoder_block_forward.1} parent=0 // pred_check
    _
  $region31: #{encoder_block_forward.1} parent=0 // pred_check_branch
    %40 = sbr.rel (0) target = $region33
  $region32: #{encoder_block_forward.1} parent=0 // pred_region
    _
  $region33: #{encoder_block_forward.1} parent=0 // pred_fallthru
    _
  // Predicated region
  $region34: #{encoder_block_forward.1} parent=0 // pred_check
    _
  $region35: #{encoder_block_forward.1} parent=0 // pred_check_branch
    %42 = sbr.rel (0) target = $region37
  $region36: #{encoder_block_forward.1} parent=0 // pred_region
    _
  $region37: #{encoder_block_forward.1} parent=0 // pred_fallthru
    _
  // Predicated region
  $region38: #{encoder_block_forward.1} parent=0 // pred_check
    _
  $region39: #{encoder_block_forward.1} parent=0 // pred_check_branch
    %44 = sbr.rel (0) target = $region41
  $region40: #{encoder_block_forward.1} parent=0 // pred_region
    _
  $region41: #{encoder_block_forward.1} parent=0 // pred_fallthru
    _
  // Predicated region
  $region42: #{encoder_block_forward.1} parent=0 // pred_check
    _
  $region43: #{encoder_block_forward.1} parent=0 // pred_check_branch
    %46 = sbr.rel (0) target = $region45
  $region44: #{encoder_block_forward.1} parent=0 // pred_region
    _
  $region45: #{encoder_block_forward.1} parent=0 // pred_fallthru
    _
  // Predicated region
  $region46: #{encoder_block_forward.1} parent=0 // pred_check
    _
  $region47: #{encoder_block_forward.1} parent=0 // pred_check_branch
    %48 = sbr.rel (0) target = $region49
  $region48: #{encoder_block_forward.1} parent=0 // pred_region
    _
  $region49: #{encoder_block_forward.1} parent=0 // pred_fallthru
    _
  // Predicated region
  $region50: #{encoder_block_forward.1} parent=0 // pred_check
    _
  $region51: #{encoder_block_forward.1} parent=0 // pred_check_branch
    %50 = sbr.rel (0) target = $region53
  $region52: #{encoder_block_forward.1} parent=0 // pred_region
    _
  $region53: #{encoder_block_forward.1} parent=0 // pred_fallthru
    _
  // Predicated region
  $region54: #{encoder_block_forward.1} parent=0 // pred_check
    _
  $region55: #{encoder_block_forward.1} parent=0 // pred_check_branch
    %52 = sbr.rel (0) target = $region57
  $region56: #{encoder_block_forward.1} parent=0 // pred_region
    _
  $region57: #{encoder_block_forward.1} parent=0 // pred_fallthru
    _
  // Predicated region
  $region58: #{encoder_block_forward.1} parent=0 // pred_check
    _
  $region59: #{encoder_block_forward.1} parent=0 // pred_check_branch
    %54 = sbr.rel (0) target = $region61
  $region60: #{encoder_block_forward.1} parent=0 // pred_region
    _
  $region61: #{encoder_block_forward.1} parent=0 // pred_fallthru
    _
  // Predicated region
  $region62: #{encoder_block_forward.1} parent=0 // pred_check
    _
  $region63: #{encoder_block_forward.1} parent=0 // pred_check_branch
    %56 = sbr.rel (0) target = $region65
  $region64: #{encoder_block_forward.1} parent=0 // pred_region
    _
  $region65: #{encoder_block_forward.1} parent=0 // pred_fallthru
    _
  // Predicated region
  $region66: #{encoder_block_forward.1} parent=0 // pred_check
    _
  $region67: #{encoder_block_forward.1} parent=0 // pred_check_branch
    %58 = sbr.rel (0) target = $region69
  $region68: #{encoder_block_forward.1} parent=0 // pred_region
    _
  $region69: #{encoder_block_forward.1} parent=0 // pred_fallthru
    _
  // Predicated region
  $region70: #{encoder_block_forward.1} parent=0 // pred_check
    _
  $region71: #{encoder_block_forward.1} parent=0 // pred_check_branch
    %60 = sbr.rel (0) target = $region73
  $region72: #{encoder_block_forward.1} parent=0 // pred_region
    _
  $region73: #{encoder_block_forward.1} parent=0 // pred_fallthru
    _
  %v61 = vld [vmem:[%s2] sm:$0xff]
  %v62 = vld [vmem:[%s2 + $0x8] sm:$0xff]
  %v63 = vld [vmem:[%s0] sm:$0xff]
  %v64 = vld [vmem:[%s0 + $0x8] sm:$0xff]
  %v65 = vld [vmem:[%s0 + $0x10] sm:$0xff]
  %v66 = vld [vmem:[%s0 + $0x18] sm:$0xff]
  %v67 = vld [vmem:[%s0 + $0x20] sm:$0xff]
  %v68 = vld [vmem:[%s0 + $0x28] sm:$0xff]
  %v69 = vld [vmem:[%s0 + $0x30] sm:$0xff]
  %v70 = vld [vmem:[%s0 + $0x38] sm:$0xff]
  %v71 = vld [vmem:[%s4] sm:$0xff]
  %v72 = vld [vmem:[%s5] sm:$0xff]
  %v73 = vld [vmem:[%s6] sm:$0xff]
  %v74 = vld [vmem:[%s6 + $0x8] sm:$0xff]
  %v75 = vld [vmem:[%s7] sm:$0xff]
  %v76 = vld [vmem:[%s7 + $0x8] sm:$0xff]
  %v77 = vld [vmem:[%s8] sm:$0xff]
  %v78 = vld [vmem:[%s8 + $0x8] sm:$0xff]
  %v79 = vld [vmem:[%s9] sm:$0xff]
  %v80 = vld [vmem:[%s9 + $0x8] sm:$0xff]
  %82 = vset.pattern.permute.xlu0 0
  %83 = vperm.xlu0 %82, %v72
  %v84 = vpop.permute.xlu0 %83
  %vm86 = vcmask 64512
  %v88 = vsel %vm86, %v71, 0
  %90 = vmatprep.subr.mxu0 %v68
  %91 = vmatpush1.msra.mxu0 %v67
  %92 = vmatprep.subr.mxu0 0.0
  %93 = vmatpush1.msra.mxu0 0.0
  %94 = vmatprep.subr.mxu0 0.0
  %95 = vmatpush1.msra.mxu0 0.0
  %96 = vmatprep.subr.mxu0 0.0
  %97 = vmatpush1.msra.mxu0 0.0
  %98 = vmatprep.subr.mxu0 0.0
  %99 = vmatpush1.msra.mxu0 0.0
  %100 = vmatprep.subr.mxu0 0.0
  %101 = vmatpush1.msra.mxu0 0.0
  %102 = vmatprep.subr.mxu0 0.0
  %103 = vmatpush1.msra.mxu0 0.0
  %104 = vmatprep.subr.mxu0 0.0
  %105 = vmatpush1.msra.mxu0 0.0
  %106 = vmatprep.subr.mxu0 0.0
  %107 = vmatpush1.msra.mxu0 0.0
  %108 = vmatprep.subr.mxu0 0.0
  %109 = vmatpush1.msra.mxu0 0.0
  %110 = vmatprep.subr.mxu0 0.0
  %111 = vmatpush1.msra.mxu0 0.0
  %112 = vmatprep.subr.mxu0 0.0
  %113 = vmatpush1.msra.mxu0 0.0
  %114 = vmatprep.subr.mxu0 0.0
  %115 = vmatpush1.msra.mxu0 0.0
  %116 = vmatprep.subr.mxu0 0.0
  %117 = vmatpush1.msra.mxu0 0.0
  %118 = vmatprep.subr.mxu0 0.0
  %119 = vmatpush1.msra.mxu0 0.0
  %120 = vmatprep.subr.mxu0 0.0
  %121 = vmatpush1.msra.mxu0 0.0
  %122 = vmatprep.subr.mxu0 0.0
  %123 = vmatpush1.msra.mxu0 0.0
  %124 = vmatprep.subr.mxu0 0.0
  %125 = vmatpush1.msra.mxu0 0.0
  %126 = vmatprep.subr.mxu0 0.0
  %127 = vmatpush1.msra.mxu0 0.0
  %128 = vmatprep.subr.mxu0 0.0
  %129 = vmatpush1.msra.mxu0 0.0
  %130 = vmatprep.subr.mxu0 0.0
  %131 = vmatpush1.msra.mxu0 0.0
  %132 = vmatprep.subr.mxu0 0.0
  %133 = vmatpush1.msra.mxu0 0.0
  %134 = vmatprep.subr.mxu0 0.0
  %135 = vmatpush1.msra.mxu0 0.0
  %136 = vmatprep.subr.mxu0 0.0
  %137 = vmatpush1.msra.mxu0 0.0
  %138 = vmatprep.subr.mxu0 0.0
  %139 = vmatpush1.msra.mxu0 0.0
  %140 = vmatprep.subr.mxu0 0.0
  %141 = vmatpush1.msra.mxu0 0.0
  %142 = vmatprep.subr.mxu0 0.0
  %143 = vmatpush1.msra.mxu0 0.0
  %144 = vmatprep.subr.mxu0 0.0
  %145 = vmatpush1.msra.mxu0 0.0
  %146 = vmatprep.subr.mxu0 0.0
  %147 = vmatpush1.msra.mxu0 0.0
  %148 = vmatprep.subr.mxu0 0.0
  %149 = vmatpush1.msra.mxu0 0.0
  %150 = vmatprep.subr.mxu0 0.0
  %151 = vmatpush1.msra.mxu0 0.0
  %152 = vmatprep.subr.mxu0 0.0
  %153 = vmatpush1.msra.mxu0 0.0
  %154 = vmatprep.mubr.f32.mxu0 0.0
  %155 = vmatmul.mubr.f32.gmra.mrb[0].mxu0 %v88
  %v156 = vpop.f32.mrb[0].mxu0
  %v157 = vadd.f32 %v84, %v156
  %v158 = vpop.f32.mrb[0].mxu0
  %v159 = vadd.f32 %v84, %v158
  %160 = vdwg.mxu0
  %161 = vmatprep.subr.mxu0 %v70
  %162 = vmatpush1.msra.mxu0 %v69
  %163 = vmatprep.subr.mxu0 0.0
  %164 = vmatpush1.msra.mxu0 0.0
  %165 = vmatprep.subr.mxu0 0.0
  %166 = vmatpush1.msra.mxu0 0.0
  %167 = vmatprep.subr.mxu0 0.0
  %168 = vmatpush1.msra.mxu0 0.0
  %169 = vmatprep.subr.mxu0 0.0
  %170 = vmatpush1.msra.mxu0 0.0
  %171 = vmatprep.subr.mxu0 0.0
  %172 = vmatpush1.msra.mxu0 0.0
  %173 = vmatprep.subr.mxu0 0.0
  %174 = vmatpush1.msra.mxu0 0.0
  %175 = vmatprep.subr.mxu0 0.0
  %176 = vmatpush1.msra.mxu0 0.0
  %177 = vmatprep.subr.mxu0 0.0
  %178 = vmatpush1.msra.mxu0 0.0
  %179 = vmatprep.subr.mxu0 0.0
  %180 = vmatpush1.msra.mxu0 0.0
  %181 = vmatprep.subr.mxu0 0.0
  %182 = vmatpush1.msra.mxu0 0.0
  %183 = vmatprep.subr.mxu0 0.0
  %184 = vmatpush1.msra.mxu0 0.0
  %185 = vmatprep.subr.mxu0 0.0
  %186 = vmatpush1.msra.mxu0 0.0
  %187 = vmatprep.subr.mxu0 0.0
  %188 = vmatpush1.msra.mxu0 0.0
  %189 = vmatprep.subr.mxu0 0.0
  %190 = vmatpush1.msra.mxu0 0.0
  %191 = vmatprep.subr.mxu0 0.0
  %192 = vmatpush1.msra.mxu0 0.0
  %193 = vmatprep.subr.mxu0 0.0
  %194 = vmatpush1.msra.mxu0 0.0
  %195 = vmatprep.subr.mxu0 0.0
  %196 = vmatpush1.msra.mxu0 0.0
  %197 = vmatprep.subr.mxu0 0.0
  %198 = vmatpush1.msra.mxu0 0.0
  %199 = vmatprep.subr.mxu0 0.0
  %200 = vmatpush1.msra.mxu0 0.0
  %201 = vmatprep.subr.mxu0 0.0
  %202 = vmatpush1.msra.mxu0 0.0
  %203 = vmatprep.subr.mxu0 0.0
  %204 = vmatpush1.msra.mxu0 0.0
  %205 = vmatprep.subr.mxu0 0.0
  %206 = vmatpush1.msra.mxu0 0.0
  %207 = vmatprep.subr.mxu0 0.0
  %208 = vmatpush1.msra.mxu0 0.0
  %209 = vmatprep.subr.mxu0 0.0
  %210 = vmatpush1.msra.mxu0 0.0
  %211 = vmatprep.subr.mxu0 0.0
  %212 = vmatpush1.msra.mxu0 0.0
  %213 = vmatprep.subr.mxu0 0.0
  %214 = vmatpush1.msra.mxu0 0.0
  %215 = vmatprep.subr.mxu0 0.0
  %216 = vmatpush1.msra.mxu0 0.0
  %217 = vmatprep.subr.mxu0 0.0
  %218 = vmatpush1.msra.mxu0 0.0
  %219 = vmatprep.subr.mxu0 0.0
  %220 = vmatpush1.msra.mxu0 0.0
  %221 = vmatprep.subr.mxu0 0.0
  %222 = vmatpush1.msra.mxu0 0.0
  %223 = vmatprep.subr.mxu0 0.0
  %224 = vmatpush1.msra.mxu0 0.0
  %225 = vmatprep.mubr.f32.mxu0 0.0
  %226 = vmatmul.mubr.f32.gmra.mrb[0].mxu0 %v88
  %v227 = vpop.f32.mrb[0].mxu0
  %v228 = vadd.f32 %v84, %v227
  %v229 = vpop.f32.mrb[0].mxu0
  %v230 = vadd.f32 %v84, %v229
  %231 = vdwg.mxu0
  %v232 = vxor.u32 %v157, 2147483648
  %v233 = vxor.u32 %v159, 2147483648
  %v234 = vxor.u32 %v228, 2147483648
  %v235 = vxor.u32 %v230, 2147483648
  %v236 = vmul.f32 %v232, 1.442695
  %v237 = vpow.pop %v236
  %v238 = vmul.f32 %v233, 1.442695
  %v239 = vpow.pop %v238
  %v240 = vmul.f32 %v234, 1.442695
  %v241 = vpow.pop %v240
  %v242 = vmul.f32 %v235, 1.442695
  %v243 = vpow.pop %v242
  %v244 = vadd.f32 %v237, 1.0
  %v245 = vadd.f32 %v239, 1.0
  %v246 = vadd.f32 %v241, 1.0
  %v247 = vadd.f32 %v243, 1.0
  %v248 = vrcp.pop %v244
  %v249 = vmul.f32 1.0, %v248
  %v250 = vrcp.pop %v245
  %v251 = vmul.f32 1.0, %v250
  %v252 = vrcp.pop %v246
  %v253 = vmul.f32 1.0, %v252
  %v254 = vrcp.pop %v247
  %v255 = vmul.f32 1.0, %v254
  %v256 = vmul.f32 %v157, %v249
  %v257 = vmul.f32 %v159, %v251
  %v258 = vmul.f32 %v228, %v253
  %v259 = vmul.f32 %v230, %v255
  %260 = vrot.lane.b32.xlu0 %v63, 1
  %v261 = vpop.permute.xlu0 %260
  %262 = vrot.lane.b32.xlu0 %v256, 1
  %v263 = vpop.permute.xlu0 %262
  %264 = vrot.lane.b32.xlu0 %v64, 1
  %v265 = vpop.permute.xlu0 %264
  %266 = vrot.lane.b32.xlu0 %v257, 1
  %v267 = vpop.permute.xlu0 %266
  %268 = vrot.lane.b32.xlu0 %v65, 1
  %v269 = vpop.permute.xlu0 %268
  %270 = vrot.lane.b32.xlu0 %v258, 1
  %v271 = vpop.permute.xlu0 %270
  %272 = vrot.lane.b32.xlu0 %v66, 1
  %v273 = vpop.permute.xlu0 %272
  %274 = vrot.lane.b32.xlu0 %v259, 1
  %v275 = vpop.permute.xlu0 %274
  %v276 = vlaneseq
  %v277 = vand.u32 %v276, 127
  %vm278 = vcmp.lt.s32.totalorder %v277, 1
  %v279 = vsel %vm278, %v269, %v273
  %v280 = vsel %vm278, %v271, %v275
  %v281 = vsel %vm278, %v265, %v269
  %v282 = vsel %vm278, %v267, %v271
  %v283 = vsel %vm278, %v261, %v265
  %v284 = vsel %vm278, %v263, %v267
  %v285 = vsel %vm278, %v273, %v261
  %v286 = vsel %vm278, %v275, %v263
  %v289 = vlaneseq
  %v290 = vshrl.u32 %v289, 7
  %v291 = vsub.s32 0, %v290
  %v292 = vrot.slane %v61, %v291
  %v293 = vlaneseq
  %v294 = vshrl.u32 %v293, 7
  %v295 = vsub.s32 4, %v294
  %v296 = vrot.slane %v61, %v295
  %v297 = vlaneseq
  %v298 = vshrl.u32 %v297, 7
  %v299 = vsub.s32 0, %v298
  %v300 = vrot.slane %v62, %v299
  %v301 = vlaneseq
  %v302 = vshrl.u32 %v301, 7
  %v303 = vsub.s32 4, %v302
  %v304 = vrot.slane %v62, %v303
  %v309 = vlaneseq
  %v310 = vshrl.u32 %v309, 7
  %v311 = vsub.s32 0, %v310
  %v312 = vrot.slane %v292, %v311
  %v313 = vlaneseq
  %v314 = vshrl.u32 %v313, 7
  %v315 = vsub.s32 0, %v314
  %v316 = vrot.slane %v296, %v315
  %v317 = vlaneseq
  %v318 = vshrl.u32 %v317, 7
  %v319 = vsub.s32 0, %v318
  %v320 = vrot.slane %v300, %v319
  %v321 = vlaneseq
  %v322 = vshrl.u32 %v321, 7
  %v323 = vsub.s32 0, %v322
  %v324 = vrot.slane %v304, %v323
  %v325 = vmul.f32 %v285, %v312
  %v326 = vmul.f32 %v283, %v316
  %v327 = vmul.f32 %v281, %v320
  %v328 = vmul.f32 %v279, %v324
  %v329 = vmul.f32 %v286, %v312
  %v330 = vmul.f32 %v284, %v316
  %v331 = vmul.f32 %v282, %v320
  %v332 = vmul.f32 %v280, %v324
  %333 = vrot.lane.b32.xlu0 %v63, 127
  %v334 = vpop.permute.xlu0 %333
  %335 = vrot.lane.b32.xlu0 %v256, 127
  %v336 = vpop.permute.xlu0 %335
  %337 = vrot.lane.b32.xlu0 %v64, 127
  %v338 = vpop.permute.xlu0 %337
  %339 = vrot.lane.b32.xlu0 %v257, 127
  %v340 = vpop.permute.xlu0 %339
  %341 = vrot.lane.b32.xlu0 %v65, 127
  %v342 = vpop.permute.xlu0 %341
  %343 = vrot.lane.b32.xlu0 %v258, 127
  %v344 = vpop.permute.xlu0 %343
  %345 = vrot.lane.b32.xlu0 %v66, 127
  %v346 = vpop.permute.xlu0 %345
  %347 = vrot.lane.b32.xlu0 %v259, 127
  %v348 = vpop.permute.xlu0 %347
  %vm349 = vcmp.lt.s32.totalorder %v277, 127
  %v350 = vsel %vm349, %v342, %v346
  %v351 = vsel %vm349, %v344, %v348
  %v352 = vsel %vm349, %v338, %v342
  %v353 = vsel %vm349, %v340, %v344
  %v354 = vsel %vm349, %v334, %v338
  %v355 = vsel %vm349, %v336, %v340
  %v356 = vsel %vm349, %v346, %v334
  %v357 = vsel %vm349, %v348, %v336
  %v358 = vlaneseq
  %v359 = vshrl.u32 %v358, 7
  %v360 = vsub.s32 1, %v359
  %v361 = vrot.slane %v61, %v360
  %v362 = vlaneseq
  %v363 = vshrl.u32 %v362, 7
  %v364 = vsub.s32 5, %v363
  %v365 = vrot.slane %v61, %v364
  %v366 = vlaneseq
  %v367 = vshrl.u32 %v366, 7
  %v368 = vsub.s32 1, %v367
  %v369 = vrot.slane %v62, %v368
  %v370 = vlaneseq
  %v371 = vshrl.u32 %v370, 7
  %v372 = vsub.s32 5, %v371
  %v373 = vrot.slane %v62, %v372
  %v378 = vlaneseq
  %v379 = vshrl.u32 %v378, 7
  %v380 = vsub.s32 1, %v379
  %v381 = vrot.slane %v361, %v380
  %v382 = vlaneseq
  %v383 = vshrl.u32 %v382, 7
  %v384 = vsub.s32 1, %v383
  %v385 = vrot.slane %v365, %v384
  %v386 = vlaneseq
  %v387 = vshrl.u32 %v386, 7
  %v388 = vsub.s32 1, %v387
  %v389 = vrot.slane %v369, %v388
  %v390 = vlaneseq
  %v391 = vshrl.u32 %v390, 7
  %v392 = vsub.s32 1, %v391
  %v393 = vrot.slane %v373, %v392
  %v394 = vmul.f32 %v354, %v381
  %v395 = vmul.f32 %v352, %v385
  %v396 = vmul.f32 %v350, %v389
  %v397 = vmul.f32 %v356, %v393
  %v398 = vmul.f32 %v355, %v381
  %v399 = vmul.f32 %v353, %v385
  %v400 = vmul.f32 %v351, %v389
  %v401 = vmul.f32 %v357, %v393
  %403 = vset.pattern.permute.xlu0 0
  %404 = vperm.xlu0 %403, %v73
  %v405 = vpop.permute.xlu0 %404
  %408 = vset.pattern.permute.xlu0 0
  %409 = vperm.xlu0 %408, %v74
  %v410 = vpop.permute.xlu0 %409
  %v412 = vmul.f32 %v325, %v405
  %v413 = vmul.f32 %v326, %v405
  %v414 = vmul.f32 %v327, %v405
  %v415 = vmul.f32 %v328, %v405
  %v416 = vmul.f32 %v329, %v410
  %v417 = vmul.f32 %v330, %v410
  %v418 = vmul.f32 %v331, %v410
  %v419 = vmul.f32 %v332, %v410
  %420 = vset.pattern.permute.xlu0 1
  %421 = vperm.xlu0 %420, %v73
  %v422 = vpop.permute.xlu0 %421
  %424 = vset.pattern.permute.xlu0 1
  %425 = vperm.xlu0 %424, %v74
  %v426 = vpop.permute.xlu0 %425
  %v428 = vmul.f32 %v63, %v422
  %v429 = vmul.f32 %v64, %v422
  %v430 = vmul.f32 %v65, %v422
  %v431 = vmul.f32 %v66, %v422
  %v432 = vmul.f32 %v256, %v426
  %v433 = vmul.f32 %v257, %v426
  %v434 = vmul.f32 %v258, %v426
  %v435 = vmul.f32 %v259, %v426
  %v436 = vadd.f32 %v412, %v428
  %v437 = vadd.f32 %v413, %v429
  %v438 = vadd.f32 %v414, %v430
  %v439 = vadd.f32 %v415, %v431
  %v440 = vadd.f32 %v416, %v432
  %v441 = vadd.f32 %v417, %v433
  %v442 = vadd.f32 %v418, %v434
  %v443 = vadd.f32 %v419, %v435
  %444 = vset.pattern.permute.xlu0 2
  %445 = vperm.xlu0 %444, %v73
  %v446 = vpop.permute.xlu0 %445
  %448 = vset.pattern.permute.xlu0 2
  %449 = vperm.xlu0 %448, %v74
  %v450 = vpop.permute.xlu0 %449
  %v452 = vmul.f32 %v394, %v446
  %v453 = vmul.f32 %v395, %v446
  %v454 = vmul.f32 %v396, %v446
  %v455 = vmul.f32 %v397, %v446
  %v456 = vmul.f32 %v398, %v450
  %v457 = vmul.f32 %v399, %v450
  %v458 = vmul.f32 %v400, %v450
  %v459 = vmul.f32 %v401, %v450
  %v460 = vadd.f32 %v436, %v452
  %v461 = vadd.f32 %v437, %v453
  %v462 = vadd.f32 %v438, %v454
  %v463 = vadd.f32 %v439, %v455
  %v464 = vadd.f32 %v440, %v456
  %v465 = vadd.f32 %v441, %v457
  %v466 = vadd.f32 %v442, %v458
  %v467 = vadd.f32 %v443, %v459
  %468 = vrot.lane.b32.xlu0 %v460, 16
  %v469 = vpop.permute.xlu0 %468
  %470 = vrot.lane.b32.xlu0 %v464, 16
  %v471 = vpop.permute.xlu0 %470
  %472 = vrot.lane.b32.xlu0 %v461, 16
  %v473 = vpop.permute.xlu0 %472
  %474 = vrot.lane.b32.xlu0 %v465, 16
  %v475 = vpop.permute.xlu0 %474
  %476 = vrot.lane.b32.xlu0 %v462, 16
  %v477 = vpop.permute.xlu0 %476
  %478 = vrot.lane.b32.xlu0 %v466, 16
  %v479 = vpop.permute.xlu0 %478
  %480 = vrot.lane.b32.xlu0 %v463, 16
  %v481 = vpop.permute.xlu0 %480
  %482 = vrot.lane.b32.xlu0 %v467, 16
  %v483 = vpop.permute.xlu0 %482
  %vm484 = vcmp.lt.s32.totalorder %v277, 16
  %v485 = vsel %vm484, %v477, %v481
  %v486 = vsel %vm484, %v479, %v483
  %v487 = vsel %vm484, %v473, %v477
  %v488 = vsel %vm484, %v475, %v479
  %v489 = vsel %vm484, %v469, %v473
  %v490 = vsel %vm484, %v471, %v475
  %v491 = vsel %vm484, %v481, %v469
  %v492 = vsel %vm484, %v483, %v471
  %v493 = vlaneseq
  %v494 = vshrl.u32 %v493, 7
  %v495 = vsub.s32 2, %v494
  %v496 = vrot.slane %v61, %v495
  %v497 = vlaneseq
  %v498 = vshrl.u32 %v497, 7
  %v499 = vsub.s32 6, %v498
  %v500 = vrot.slane %v61, %v499
  %v501 = vlaneseq
  %v502 = vshrl.u32 %v501, 7
  %v503 = vsub.s32 2, %v502
  %v504 = vrot.slane %v62, %v503
  %v505 = vlaneseq
  %v506 = vshrl.u32 %v505, 7
  %v507 = vsub.s32 6, %v506
  %v508 = vrot.slane %v62, %v507
  %v513 = vlaneseq
  %v514 = vshrl.u32 %v513, 7
  %v515 = vsub.s32 2, %v514
  %v516 = vrot.slane %v496, %v515
  %v517 = vlaneseq
  %v518 = vshrl.u32 %v517, 7
  %v519 = vsub.s32 2, %v518
  %v520 = vrot.slane %v500, %v519
  %v521 = vlaneseq
  %v522 = vshrl.u32 %v521, 7
  %v523 = vsub.s32 2, %v522
  %v524 = vrot.slane %v504, %v523
  %v525 = vlaneseq
  %v526 = vshrl.u32 %v525, 7
  %v527 = vsub.s32 2, %v526
  %v528 = vrot.slane %v508, %v527
  %v529 = vmul.f32 %v491, %v516
  %v530 = vmul.f32 %v489, %v520
  %v531 = vmul.f32 %v487, %v524
  %v532 = vmul.f32 %v485, %v528
  %v533 = vmul.f32 %v492, %v516
  %v534 = vmul.f32 %v490, %v520
  %v535 = vmul.f32 %v488, %v524
  %v536 = vmul.f32 %v486, %v528
  %537 = vset.pattern.permute.xlu0 3
  %538 = vperm.xlu0 %537, %v73
  %v539 = vpop.permute.xlu0 %538
  %541 = vset.pattern.permute.xlu0 3
  %542 = vperm.xlu0 %541, %v74
  %v543 = vpop.permute.xlu0 %542
  %v545 = vmul.f32 %v325, %v539
  %v546 = vmul.f32 %v326, %v539
  %v547 = vmul.f32 %v327, %v539
  %v548 = vmul.f32 %v328, %v539
  %v549 = vmul.f32 %v329, %v543
  %v550 = vmul.f32 %v330, %v543
  %v551 = vmul.f32 %v331, %v543
  %v552 = vmul.f32 %v332, %v543
  %553 = vset.pattern.permute.xlu0 4
  %554 = vperm.xlu0 %553, %v73
  %v555 = vpop.permute.xlu0 %554
  %557 = vset.pattern.permute.xlu0 4
  %558 = vperm.xlu0 %557, %v74
  %v559 = vpop.permute.xlu0 %558
  %v561 = vmul.f32 %v63, %v555
  %v562 = vmul.f32 %v64, %v555
  %v563 = vmul.f32 %v65, %v555
  %v564 = vmul.f32 %v66, %v555
  %v565 = vmul.f32 %v256, %v559
  %v566 = vmul.f32 %v257, %v559
  %v567 = vmul.f32 %v258, %v559
  %v568 = vmul.f32 %v259, %v559
  %v569 = vadd.f32 %v545, %v561
  %v570 = vadd.f32 %v546, %v562
  %v571 = vadd.f32 %v547, %v563
  %v572 = vadd.f32 %v548, %v564
  %v573 = vadd.f32 %v549, %v565
  %v574 = vadd.f32 %v550, %v566
  %v575 = vadd.f32 %v551, %v567
  %v576 = vadd.f32 %v552, %v568
  %577 = vset.pattern.permute.xlu0 5
  %578 = vperm.xlu0 %577, %v73
  %v579 = vpop.permute.xlu0 %578
  %581 = vset.pattern.permute.xlu0 5
  %582 = vperm.xlu0 %581, %v74
  %v583 = vpop.permute.xlu0 %582
  %v585 = vmul.f32 %v394, %v579
  %v586 = vmul.f32 %v395, %v579
  %v587 = vmul.f32 %v396, %v579
  %v588 = vmul.f32 %v397, %v579
  %v589 = vmul.f32 %v398, %v583
  %v590 = vmul.f32 %v399, %v583
  %v591 = vmul.f32 %v400, %v583
  %v592 = vmul.f32 %v401, %v583
  %v593 = vadd.f32 %v569, %v585
  %v594 = vadd.f32 %v570, %v586
  %v595 = vadd.f32 %v571, %v587
  %v596 = vadd.f32 %v572, %v588
  %v597 = vadd.f32 %v573, %v589
  %v598 = vadd.f32 %v574, %v590
  %v599 = vadd.f32 %v575, %v591
  %v600 = vadd.f32 %v576, %v592
  %v601 = vadd.f32 %v529, %v593
  %v602 = vadd.f32 %v530, %v594
  %v603 = vadd.f32 %v531, %v595
  %v604 = vadd.f32 %v532, %v596
  %v605 = vadd.f32 %v533, %v597
  %v606 = vadd.f32 %v534, %v598
  %v607 = vadd.f32 %v535, %v599
  %v608 = vadd.f32 %v536, %v600
  %609 = vset.pattern.permute.xlu0 6
  %610 = vperm.xlu0 %609, %v73
  %v611 = vpop.permute.xlu0 %610
  %613 = vset.pattern.permute.xlu0 6
  %614 = vperm.xlu0 %613, %v74
  %v615 = vpop.permute.xlu0 %614
  %v617 = vmul.f32 %v325, %v611
  %v618 = vmul.f32 %v326, %v611
  %v619 = vmul.f32 %v327, %v611
  %v620 = vmul.f32 %v328, %v611
  %v621 = vmul.f32 %v329, %v615
  %v622 = vmul.f32 %v330, %v615
  %v623 = vmul.f32 %v331, %v615
  %v624 = vmul.f32 %v332, %v615
  %625 = vset.pattern.permute.xlu0 7
  %626 = vperm.xlu0 %625, %v73
  %v627 = vpop.permute.xlu0 %626
  %629 = vset.pattern.permute.xlu0 7
  %630 = vperm.xlu0 %629, %v74
  %v631 = vpop.permute.xlu0 %630
  %v633 = vmul.f32 %v63, %v627
  %v634 = vmul.f32 %v64, %v627
  %v635 = vmul.f32 %v65, %v627
  %v636 = vmul.f32 %v66, %v627
  %v637 = vmul.f32 %v256, %v631
  %v638 = vmul.f32 %v257, %v631
  %v639 = vmul.f32 %v258, %v631
  %v640 = vmul.f32 %v259, %v631
  %v641 = vadd.f32 %v617, %v633
  %v642 = vadd.f32 %v618, %v634
  %v643 = vadd.f32 %v619, %v635
  %v644 = vadd.f32 %v620, %v636
  %v645 = vadd.f32 %v621, %v637
  %v646 = vadd.f32 %v622, %v638
  %v647 = vadd.f32 %v623, %v639
  %v648 = vadd.f32 %v624, %v640
  %649 = vset.pattern.permute.xlu0 8
  %650 = vperm.xlu0 %649, %v73
  %v651 = vpop.permute.xlu0 %650
  %653 = vset.pattern.permute.xlu0 8
  %654 = vperm.xlu0 %653, %v74
  %v655 = vpop.permute.xlu0 %654
  %v657 = vmul.f32 %v394, %v651
  %v658 = vmul.f32 %v395, %v651
  %v659 = vmul.f32 %v396, %v651
  %v660 = vmul.f32 %v397, %v651
  %v661 = vmul.f32 %v398, %v655
  %v662 = vmul.f32 %v399, %v655
  %v663 = vmul.f32 %v400, %v655
  %v664 = vmul.f32 %v401, %v655
  %v665 = vadd.f32 %v641, %v657
  %v666 = vadd.f32 %v642, %v658
  %v667 = vadd.f32 %v643, %v659
  %v668 = vadd.f32 %v644, %v660
  %v669 = vadd.f32 %v645, %v661
  %v670 = vadd.f32 %v646, %v662
  %v671 = vadd.f32 %v647, %v663
  %v672 = vadd.f32 %v648, %v664
  %673 = vrot.lane.b32.xlu0 %v665, 112
  %v674 = vpop.permute.xlu0 %673
  %675 = vrot.lane.b32.xlu0 %v669, 112
  %v676 = vpop.permute.xlu0 %675
  %677 = vrot.lane.b32.xlu0 %v666, 112
  %v678 = vpop.permute.xlu0 %677
  %679 = vrot.lane.b32.xlu0 %v670, 112
  %v680 = vpop.permute.xlu0 %679
  %681 = vrot.lane.b32.xlu0 %v667, 112
  %v682 = vpop.permute.xlu0 %681
  %683 = vrot.lane.b32.xlu0 %v671, 112
  %v684 = vpop.permute.xlu0 %683
  %685 = vrot.lane.b32.xlu0 %v668, 112
  %v686 = vpop.permute.xlu0 %685
  %687 = vrot.lane.b32.xlu0 %v672, 112
  %v688 = vpop.permute.xlu0 %687
  %vm689 = vcmp.lt.s32.totalorder %v277, 112
  %v690 = vsel %vm689, %v682, %v686
  %v691 = vsel %vm689, %v684, %v688
  %v692 = vsel %vm689, %v678, %v682
  %v693 = vsel %vm689, %v680, %v684
  %v694 = vsel %vm689, %v674, %v678
  %v695 = vsel %vm689, %v676, %v680
  %v696 = vsel %vm689, %v686, %v674
  %v697 = vsel %vm689, %v688, %v676
  %v698 = vlaneseq
  %v699 = vshrl.u32 %v698, 7
  %v700 = vsub.s32 3, %v699
  %v701 = vrot.slane %v61, %v700
  %v702 = vlaneseq
  %v703 = vshrl.u32 %v702, 7
  %v704 = vsub.s32 7, %v703
  %v705 = vrot.slane %v61, %v704
  %v706 = vlaneseq
  %v707 = vshrl.u32 %v706, 7
  %v708 = vsub.s32 3, %v707
  %v709 = vrot.slane %v62, %v708
  %v710 = vlaneseq
  %v711 = vshrl.u32 %v710, 7
  %v712 = vsub.s32 7, %v711
  %v713 = vrot.slane %v62, %v712
  %v718 = vlaneseq
  %v719 = vshrl.u32 %v718, 7
  %v720 = vsub.s32 3, %v719
  %v721 = vrot.slane %v701, %v720
  %v722 = vlaneseq
  %v723 = vshrl.u32 %v722, 7
  %v724 = vsub.s32 3, %v723
  %v725 = vrot.slane %v705, %v724
  %v726 = vlaneseq
  %v727 = vshrl.u32 %v726, 7
  %v728 = vsub.s32 3, %v727
  %v729 = vrot.slane %v709, %v728
  %v730 = vlaneseq
  %v731 = vshrl.u32 %v730, 7
  %v732 = vsub.s32 3, %v731
  %v733 = vrot.slane %v713, %v732
  %v734 = vmul.f32 %v694, %v721
  %v735 = vmul.f32 %v692, %v725
  %v736 = vmul.f32 %v690, %v729
  %v737 = vmul.f32 %v696, %v733
  %v738 = vmul.f32 %v695, %v721
  %v739 = vmul.f32 %v693, %v725
  %v740 = vmul.f32 %v691, %v729
  %v741 = vmul.f32 %v697, %v733
  %v742 = vadd.f32 %v601, %v734
  %v743 = vadd.f32 %v602, %v735
  %v744 = vadd.f32 %v603, %v736
  %v745 = vadd.f32 %v604, %v737
  %v746 = vadd.f32 %v605, %v738
  %v747 = vadd.f32 %v606, %v739
  %v748 = vadd.f32 %v607, %v740
  %v749 = vadd.f32 %v608, %v741
  %751 = vset.pattern.permute.xlu0 0
  %752 = vperm.xlu0 %751, %v75
  %v753 = vpop.permute.xlu0 %752
  %756 = vset.pattern.permute.xlu0 0
  %757 = vperm.xlu0 %756, %v76
  %v758 = vpop.permute.xlu0 %757
  %v760 = vadd.f32 %v742, %v753
  %v761 = vadd.f32 %v743, %v753
  %v762 = vadd.f32 %v744, %v753
  %v763 = vadd.f32 %v745, %v753
  %v764 = vadd.f32 %v746, %v758
  %v765 = vadd.f32 %v747, %v758
  %v766 = vadd.f32 %v748, %v758
  %v767 = vadd.f32 %v749, %v758
  %769 = vset.pattern.permute.xlu0 0
  %770 = vperm.xlu0 %769, %v79
  %v771 = vpop.permute.xlu0 %770
  %774 = vset.pattern.permute.xlu0 0
  %775 = vperm.xlu0 %774, %v80
  %v776 = vpop.permute.xlu0 %775
  %vm778 = vcmask 130048
  %v780 = vsel %vm778, %v77, 0
  %v783 = vsel %vm778, %v78, 0
  %785 = vmatprep.subr.mxu0 %v761
  %786 = vmatpush1.msra.mxu0 %v760
  %787 = vmatprep.subr.mxu0 %v765
  %788 = vmatpush1.msra.mxu0 %v764
  %789 = vmatprep.subr.mxu0 0.0
  %790 = vmatpush1.msra.mxu0 0.0
  %791 = vmatprep.subr.mxu0 0.0
  %792 = vmatpush1.msra.mxu0 0.0
  %793 = vmatprep.subr.mxu0 0.0
  %794 = vmatpush1.msra.mxu0 0.0
  %795 = vmatprep.subr.mxu0 0.0
  %796 = vmatpush1.msra.mxu0 0.0
  %797 = vmatprep.subr.mxu0 0.0
  %798 = vmatpush1.msra.mxu0 0.0
  %799 = vmatprep.subr.mxu0 0.0
  %800 = vmatpush1.msra.mxu0 0.0
  %801 = vmatprep.subr.mxu0 0.0
  %802 = vmatpush1.msra.mxu0 0.0
  %803 = vmatprep.subr.mxu0 0.0
  %804 = vmatpush1.msra.mxu0 0.0
  %805 = vmatprep.subr.mxu0 0.0
  %806 = vmatpush1.msra.mxu0 0.0
  %807 = vmatprep.subr.mxu0 0.0
  %808 = vmatpush1.msra.mxu0 0.0
  %809 = vmatprep.subr.mxu0 0.0
  %810 = vmatpush1.msra.mxu0 0.0
  %811 = vmatprep.subr.mxu0 0.0
  %812 = vmatpush1.msra.mxu0 0.0
  %813 = vmatprep.subr.mxu0 0.0
  %814 = vmatpush1.msra.mxu0 0.0
  %815 = vmatprep.subr.mxu0 0.0
  %816 = vmatpush1.msra.mxu0 0.0
  %817 = vmatprep.subr.mxu0 0.0
  %818 = vmatpush1.msra.mxu0 0.0
  %819 = vmatprep.subr.mxu0 0.0
  %820 = vmatpush1.msra.mxu0 0.0
  %821 = vmatprep.subr.mxu0 0.0
  %822 = vmatpush1.msra.mxu0 0.0
  %823 = vmatprep.subr.mxu0 0.0
  %824 = vmatpush1.msra.mxu0 0.0
  %825 = vmatprep.subr.mxu0 0.0
  %826 = vmatpush1.msra.mxu0 0.0
  %827 = vmatprep.subr.mxu0 0.0
  %828 = vmatpush1.msra.mxu0 0.0
  %829 = vmatprep.subr.mxu0 0.0
  %830 = vmatpush1.msra.mxu0 0.0
  %831 = vmatprep.subr.mxu0 0.0
  %832 = vmatpush1.msra.mxu0 0.0
  %833 = vmatprep.subr.mxu0 0.0
  %834 = vmatpush1.msra.mxu0 0.0
  %835 = vmatprep.subr.mxu0 0.0
  %836 = vmatpush1.msra.mxu0 0.0
  %837 = vmatprep.subr.mxu0 0.0
  %838 = vmatpush1.msra.mxu0 0.0
  %839 = vmatprep.subr.mxu0 0.0
  %840 = vmatpush1.msra.mxu0 0.0
  %841 = vmatprep.subr.mxu0 0.0
  %842 = vmatpush1.msra.mxu0 0.0
  %843 = vmatprep.subr.mxu0 0.0
  %844 = vmatpush1.msra.mxu0 0.0
  %845 = vmatprep.subr.mxu0 0.0
  %846 = vmatpush1.msra.mxu0 0.0
  %847 = vmatprep.subr.mxu0 0.0
  %848 = vmatpush1.msra.mxu0 0.0
  %849 = vmatprep.mubr.f32.mxu0 0.0
  %850 = vmatmul.mubr.f32.gmra.mrb[0].mxu0 %v780
  %v851 = vpop.f32.mrb[0].mxu0
  %v852 = vadd.f32 %v771, %v851
  %v853 = vpop.f32.mrb[0].mxu0
  %v854 = vadd.f32 %v771, %v853
  %855 = vmatprep.mubr.f32.mxu0 0.0
  %856 = vmatmul.mubr.f32.gmra.mrb[0].mxu0 %v783
  %v857 = vpop.f32.mrb[0].mxu0
  %v858 = vadd.f32 %v776, %v857
  %v859 = vpop.f32.mrb[0].mxu0
  %v860 = vadd.f32 %v776, %v859
  %861 = vdwg.mxu0
  %862 = vmatprep.subr.mxu0 %v763
  %863 = vmatpush1.msra.mxu0 %v762
  %864 = vmatprep.subr.mxu0 %v767
  %865 = vmatpush1.msra.mxu0 %v766
  %866 = vmatprep.subr.mxu0 0.0
  %867 = vmatpush1.msra.mxu0 0.0
  %868 = vmatprep.subr.mxu0 0.0
  %869 = vmatpush1.msra.mxu0 0.0
  %870 = vmatprep.subr.mxu0 0.0
  %871 = vmatpush1.msra.mxu0 0.0
  %872 = vmatprep.subr.mxu0 0.0
  %873 = vmatpush1.msra.mxu0 0.0
  %874 = vmatprep.subr.mxu0 0.0
  %875 = vmatpush1.msra.mxu0 0.0
  %876 = vmatprep.subr.mxu0 0.0
  %877 = vmatpush1.msra.mxu0 0.0
  %878 = vmatprep.subr.mxu0 0.0
  %879 = vmatpush1.msra.mxu0 0.0
  %880 = vmatprep.subr.mxu0 0.0
  %881 = vmatpush1.msra.mxu0 0.0
  %882 = vmatprep.subr.mxu0 0.0
  %883 = vmatpush1.msra.mxu0 0.0
  %884 = vmatprep.subr.mxu0 0.0
  %885 = vmatpush1.msra.mxu0 0.0
  %886 = vmatprep.subr.mxu0 0.0
  %887 = vmatpush1.msra.mxu0 0.0
  %888 = vmatprep.subr.mxu0 0.0
  %889 = vmatpush1.msra.mxu0 0.0
  %890 = vmatprep.subr.mxu0 0.0
  %891 = vmatpush1.msra.mxu0 0.0
  %892 = vmatprep.subr.mxu0 0.0
  %893 = vmatpush1.msra.mxu0 0.0
  %894 = vmatprep.subr.mxu0 0.0
  %895 = vmatpush1.msra.mxu0 0.0
  %896 = vmatprep.subr.mxu0 0.0
  %897 = vmatpush1.msra.mxu0 0.0
  %898 = vmatprep.subr.mxu0 0.0
  %899 = vmatpush1.msra.mxu0 0.0
  %900 = vmatprep.subr.mxu0 0.0
  %901 = vmatpush1.msra.mxu0 0.0
  %902 = vmatprep.subr.mxu0 0.0
  %903 = vmatpush1.msra.mxu0 0.0
  %904 = vmatprep.subr.mxu0 0.0
  %905 = vmatpush1.msra.mxu0 0.0
  %906 = vmatprep.subr.mxu0 0.0
  %907 = vmatpush1.msra.mxu0 0.0
  %908 = vmatprep.subr.mxu0 0.0
  %909 = vmatpush1.msra.mxu0 0.0
  %910 = vmatprep.subr.mxu0 0.0
  %911 = vmatpush1.msra.mxu0 0.0
  %912 = vmatprep.subr.mxu0 0.0
  %913 = vmatpush1.msra.mxu0 0.0
  %914 = vmatprep.subr.mxu0 0.0
  %915 = vmatpush1.msra.mxu0 0.0
  %916 = vmatprep.subr.mxu0 0.0
  %917 = vmatpush1.msra.mxu0 0.0
  %918 = vmatprep.subr.mxu0 0.0
  %919 = vmatpush1.msra.mxu0 0.0
  %920 = vmatprep.subr.mxu0 0.0
  %921 = vmatpush1.msra.mxu0 0.0
  %922 = vmatprep.subr.mxu0 0.0
  %923 = vmatpush1.msra.mxu0 0.0
  %924 = vmatprep.subr.mxu0 0.0
  %925 = vmatpush1.msra.mxu0 0.0
  %926 = vmatprep.mubr.f32.mxu0 0.0
  %927 = vmatmul.mubr.f32.gmra.mrb[0].mxu0 %v780
  %v928 = vpop.f32.mrb[0].mxu0
  %v929 = vadd.f32 %v771, %v928
  %v930 = vpop.f32.mrb[0].mxu0
  %v931 = vadd.f32 %v771, %v930
  %932 = vmatprep.mubr.f32.mxu0 0.0
  %933 = vmatmul.mubr.f32.gmra.mrb[0].mxu0 %v783
  %v934 = vpop.f32.mrb[0].mxu0
  %v935 = vadd.f32 %v776, %v934
  %v936 = vpop.f32.mrb[0].mxu0
  %v937 = vadd.f32 %v776, %v936
  %938 = vdwg.mxu0
  %v939 = vxor.u32 %v852, 2147483648
  %v940 = vxor.u32 %v854, 2147483648
  %v941 = vxor.u32 %v929, 2147483648
  %v942 = vxor.u32 %v931, 2147483648
  %v943 = vxor.u32 %v858, 2147483648
  %v944 = vxor.u32 %v860, 2147483648
  %v945 = vxor.u32 %v935, 2147483648
  %v946 = vxor.u32 %v937, 2147483648
  %v947 = vmul.f32 %v939, 1.442695
  %v948 = vpow.pop %v947
  %v949 = vmul.f32 %v940, 1.442695
  %v950 = vpow.pop %v949
  %v951 = vmul.f32 %v941, 1.442695
  %v952 = vpow.pop %v951
  %v953 = vmul.f32 %v942, 1.442695
  %v954 = vpow.pop %v953
  %v955 = vmul.f32 %v943, 1.442695
  %v956 = vpow.pop %v955
  %v957 = vmul.f32 %v944, 1.442695
  %v958 = vpow.pop %v957
  %v959 = vmul.f32 %v945, 1.442695
  %v960 = vpow.pop %v959
  %v961 = vmul.f32 %v946, 1.442695
  %v962 = vpow.pop %v961
  %v963 = vadd.f32 %v948, 1.0
  %v964 = vadd.f32 %v950, 1.0
  %v965 = vadd.f32 %v952, 1.0
  %v966 = vadd.f32 %v954, 1.0
  %v967 = vadd.f32 %v956, 1.0
  %v968 = vadd.f32 %v958, 1.0
  %v969 = vadd.f32 %v960, 1.0
  %v970 = vadd.f32 %v962, 1.0
  %v971 = vrcp.pop %v963
  %v972 = vmul.f32 1.0, %v971
  %v973 = vrcp.pop %v964
  %v974 = vmul.f32 1.0, %v973
  %v975 = vrcp.pop %v965
  %v976 = vmul.f32 1.0, %v975
  %v977 = vrcp.pop %v966
  %v978 = vmul.f32 1.0, %v977
  %v979 = vrcp.pop %v967
  %v980 = vmul.f32 1.0, %v979
  %v981 = vrcp.pop %v968
  %v982 = vmul.f32 1.0, %v981
  %v983 = vrcp.pop %v969
  %v984 = vmul.f32 1.0, %v983
  %v985 = vrcp.pop %v970
  %v986 = vmul.f32 1.0, %v985
  %v987 = vmul.f32 %v852, %v972
  %v988 = vmul.f32 %v854, %v974
  %v989 = vmul.f32 %v929, %v976
  %v990 = vmul.f32 %v931, %v978
  %v991 = vmul.f32 %v858, %v980
  %v992 = vmul.f32 %v860, %v982
  %v993 = vmul.f32 %v935, %v984
  %v994 = vmul.f32 %v937, %v986
  %s995 = scalar_lea.vmem %s4, 8
  %v996 = vld [vmem:[%s995] sm:$0xff]
  %s997 = scalar_lea.vmem %s6, 16
  %v998 = vld [vmem:[%s997] sm:$0xff]
  %v999 = vld [vmem:[%s997 + $0x8] sm:$0xff]
  %s1000 = scalar_lea.vmem %s8, 16
  %v1001 = vld [vmem:[%s1000] sm:$0xff]
  %v1002 = vld [vmem:[%s1000 + $0x8] sm:$0xff]
  %1003 = vset.pattern.permute.xlu0 1
  %1004 = vperm.xlu0 %1003, %v72
  %v1005 = vpop.permute.xlu0 %1004
  %v1008 = vsel %vm86, %v996, 0
  %1010 = vmatprep.subr.mxu0 %v992
  %1011 = vmatpush1.msra.mxu0 %v991
  %1012 = vmatprep.subr.mxu0 0.0
  %1013 = vmatpush1.msra.mxu0 0.0
  %1014 = vmatprep.subr.mxu0 0.0
  %1015 = vmatpush1.msra.mxu0 0.0
  %1016 = vmatprep.subr.mxu0 0.0
  %1017 = vmatpush1.msra.mxu0 0.0
  %1018 = vmatprep.subr.mxu0 0.0
  %1019 = vmatpush1.msra.mxu0 0.0
  %1020 = vmatprep.subr.mxu0 0.0
  %1021 = vmatpush1.msra.mxu0 0.0
  %1022 = vmatprep.subr.mxu0 0.0
  %1023 = vmatpush1.msra.mxu0 0.0
  %1024 = vmatprep.subr.mxu0 0.0
  %1025 = vmatpush1.msra.mxu0 0.0
  %1026 = vmatprep.subr.mxu0 0.0
  %1027 = vmatpush1.msra.mxu0 0.0
  %1028 = vmatprep.subr.mxu0 0.0
  %1029 = vmatpush1.msra.mxu0 0.0
  %1030 = vmatprep.subr.mxu0 0.0
  %1031 = vmatpush1.msra.mxu0 0.0
  %1032 = vmatprep.subr.mxu0 0.0
  %1033 = vmatpush1.msra.mxu0 0.0
  %1034 = vmatprep.subr.mxu0 0.0
  %1035 = vmatpush1.msra.mxu0 0.0
  %1036 = vmatprep.subr.mxu0 0.0
  %1037 = vmatpush1.msra.mxu0 0.0
  %1038 = vmatprep.subr.mxu0 0.0
  %1039 = vmatpush1.msra.mxu0 0.0
  %1040 = vmatprep.subr.mxu0 0.0
  %1041 = vmatpush1.msra.mxu0 0.0
  %1042 = vmatprep.subr.mxu0 0.0
  %1043 = vmatpush1.msra.mxu0 0.0
  %1044 = vmatprep.subr.mxu0 0.0
  %1045 = vmatpush1.msra.mxu0 0.0
  %1046 = vmatprep.subr.mxu0 0.0
  %1047 = vmatpush1.msra.mxu0 0.0
  %1048 = vmatprep.subr.mxu0 0.0
  %1049 = vmatpush1.msra.mxu0 0.0
  %1050 = vmatprep.subr.mxu0 0.0
  %1051 = vmatpush1.msra.mxu0 0.0
  %1052 = vmatprep.subr.mxu0 0.0
  %1053 = vmatpush1.msra.mxu0 0.0
  %1054 = vmatprep.subr.mxu0 0.0
  %1055 = vmatpush1.msra.mxu0 0.0
  %1056 = vmatprep.subr.mxu0 0.0
  %1057 = vmatpush1.msra.mxu0 0.0
  %1058 = vmatprep.subr.mxu0 0.0
  %1059 = vmatpush1.msra.mxu0 0.0
  %1060 = vmatprep.subr.mxu0 0.0
  %1061 = vmatpush1.msra.mxu0 0.0
  %1062 = vmatprep.subr.mxu0 0.0
  %1063 = vmatpush1.msra.mxu0 0.0
  %1064 = vmatprep.subr.mxu0 0.0
  %1065 = vmatpush1.msra.mxu0 0.0
  %1066 = vmatprep.subr.mxu0 0.0
  %1067 = vmatpush1.msra.mxu0 0.0
  %1068 = vmatprep.subr.mxu0 0.0
  %1069 = vmatpush1.msra.mxu0 0.0
  %1070 = vmatprep.subr.mxu0 0.0
  %1071 = vmatpush1.msra.mxu0 0.0
  %1072 = vmatprep.subr.mxu0 0.0
  %1073 = vmatpush1.msra.mxu0 0.0
  %1074 = vmatprep.mubr.f32.mxu0 0.0
  %1075 = vmatmul.mubr.f32.gmra.mrb[0].mxu0 %v1008
  %v1076 = vpop.f32.mrb[0].mxu0
  %v1077 = vadd.f32 %v1005, %v1076
  %v1078 = vpop.f32.mrb[0].mxu0
  %v1079 = vadd.f32 %v1005, %v1078
  %1080 = vdwg.mxu0
  %1081 = vmatprep.subr.mxu0 %v994
  %1082 = vmatpush1.msra.mxu0 %v993
  %1083 = vmatprep.subr.mxu0 0.0
  %1084 = vmatpush1.msra.mxu0 0.0
  %1085 = vmatprep.subr.mxu0 0.0
  %1086 = vmatpush1.msra.mxu0 0.0
  %1087 = vmatprep.subr.mxu0 0.0
  %1088 = vmatpush1.msra.mxu0 0.0
  %1089 = vmatprep.subr.mxu0 0.0
  %1090 = vmatpush1.msra.mxu0 0.0
  %1091 = vmatprep.subr.mxu0 0.0
  %1092 = vmatpush1.msra.mxu0 0.0
  %1093 = vmatprep.subr.mxu0 0.0
  %1094 = vmatpush1.msra.mxu0 0.0
  %1095 = vmatprep.subr.mxu0 0.0
  %1096 = vmatpush1.msra.mxu0 0.0
  %1097 = vmatprep.subr.mxu0 0.0
  %1098 = vmatpush1.msra.mxu0 0.0
  %1099 = vmatprep.subr.mxu0 0.0
  %1100 = vmatpush1.msra.mxu0 0.0
  %1101 = vmatprep.subr.mxu0 0.0
  %1102 = vmatpush1.msra.mxu0 0.0
  %1103 = vmatprep.subr.mxu0 0.0
  %1104 = vmatpush1.msra.mxu0 0.0
  %1105 = vmatprep.subr.mxu0 0.0
  %1106 = vmatpush1.msra.mxu0 0.0
  %1107 = vmatprep.subr.mxu0 0.0
  %1108 = vmatpush1.msra.mxu0 0.0
  %1109 = vmatprep.subr.mxu0 0.0
  %1110 = vmatpush1.msra.mxu0 0.0
  %1111 = vmatprep.subr.mxu0 0.0
  %1112 = vmatpush1.msra.mxu0 0.0
  %1113 = vmatprep.subr.mxu0 0.0
  %1114 = vmatpush1.msra.mxu0 0.0
  %1115 = vmatprep.subr.mxu0 0.0
  %1116 = vmatpush1.msra.mxu0 0.0
  %1117 = vmatprep.subr.mxu0 0.0
  %1118 = vmatpush1.msra.mxu0 0.0
  %1119 = vmatprep.subr.mxu0 0.0
  %1120 = vmatpush1.msra.mxu0 0.0
  %1121 = vmatprep.subr.mxu0 0.0
  %1122 = vmatpush1.msra.mxu0 0.0
  %1123 = vmatprep.subr.mxu0 0.0
  %1124 = vmatpush1.msra.mxu0 0.0
  %1125 = vmatprep.subr.mxu0 0.0
  %1126 = vmatpush1.msra.mxu0 0.0
  %1127 = vmatprep.subr.mxu0 0.0
  %1128 = vmatpush1.msra.mxu0 0.0
  %1129 = vmatprep.subr.mxu0 0.0
  %1130 = vmatpush1.msra.mxu0 0.0
  %1131 = vmatprep.subr.mxu0 0.0
  %1132 = vmatpush1.msra.mxu0 0.0
  %1133 = vmatprep.subr.mxu0 0.0
  %1134 = vmatpush1.msra.mxu0 0.0
  %1135 = vmatprep.subr.mxu0 0.0
  %1136 = vmatpush1.msra.mxu0 0.0
  %1137 = vmatprep.subr.mxu0 0.0
  %1138 = vmatpush1.msra.mxu0 0.0
  %1139 = vmatprep.subr.mxu0 0.0
  %1140 = vmatpush1.msra.mxu0 0.0
  %1141 = vmatprep.subr.mxu0 0.0
  %1142 = vmatpush1.msra.mxu0 0.0
  %1143 = vmatprep.subr.mxu0 0.0
  %1144 = vmatpush1.msra.mxu0 0.0
  %1145 = vmatprep.mubr.f32.mxu0 0.0
  %1146 = vmatmul.mubr.f32.gmra.mrb[0].mxu0 %v1008
  %v1147 = vpop.f32.mrb[0].mxu0
  %v1148 = vadd.f32 %v1005, %v1147
  %v1149 = vpop.f32.mrb[0].mxu0
  %v1150 = vadd.f32 %v1005, %v1149
  %1151 = vdwg.mxu0
  %v1152 = vxor.u32 %v1077, 2147483648
  %v1153 = vxor.u32 %v1079, 2147483648
  %v1154 = vxor.u32 %v1148, 2147483648
  %v1155 = vxor.u32 %v1150, 2147483648
  %v1156 = vmul.f32 %v1152, 1.442695
  %v1157 = vpow.pop %v1156
  %v1158 = vmul.f32 %v1153, 1.442695
  %v1159 = vpow.pop %v1158
  %v1160 = vmul.f32 %v1154, 1.442695
  %v1161 = vpow.pop %v1160
  %v1162 = vmul.f32 %v1155, 1.442695
  %v1163 = vpow.pop %v1162
  %v1164 = vadd.f32 %v1157, 1.0
  %v1165 = vadd.f32 %v1159, 1.0
  %v1166 = vadd.f32 %v1161, 1.0
  %v1167 = vadd.f32 %v1163, 1.0
  %v1168 = vrcp.pop %v1164
  %v1169 = vmul.f32 1.0, %v1168
  %v1170 = vrcp.pop %v1165
  %v1171 = vmul.f32 1.0, %v1170
  %v1172 = vrcp.pop %v1166
  %v1173 = vmul.f32 1.0, %v1172
  %v1174 = vrcp.pop %v1167
  %v1175 = vmul.f32 1.0, %v1174
  %v1176 = vmul.f32 %v1077, %v1169
  %v1177 = vmul.f32 %v1079, %v1171
  %v1178 = vmul.f32 %v1148, %v1173
  %v1179 = vmul.f32 %v1150, %v1175
  %1180 = vrot.lane.b32.xlu0 %v987, 1
  %v1181 = vpop.permute.xlu0 %1180
  %1182 = vrot.lane.b32.xlu0 %v1176, 1
  %v1183 = vpop.permute.xlu0 %1182
  %1184 = vrot.lane.b32.xlu0 %v988, 1
  %v1185 = vpop.permute.xlu0 %1184
  %1186 = vrot.lane.b32.xlu0 %v1177, 1
  %v1187 = vpop.permute.xlu0 %1186
  %1188 = vrot.lane.b32.xlu0 %v989, 1
  %v1189 = vpop.permute.xlu0 %1188
  %1190 = vrot.lane.b32.xlu0 %v1178, 1
  %v1191 = vpop.permute.xlu0 %1190
  %1192 = vrot.lane.b32.xlu0 %v990, 1
  %v1193 = vpop.permute.xlu0 %1192
  %1194 = vrot.lane.b32.xlu0 %v1179, 1
  %v1195 = vpop.permute.xlu0 %1194
  %v1196 = vsel %vm278, %v1189, %v1193
  %v1197 = vsel %vm278, %v1191, %v1195
  %v1198 = vsel %vm278, %v1185, %v1189
  %v1199 = vsel %vm278, %v1187, %v1191
  %v1200 = vsel %vm278, %v1181, %v1185
  %v1201 = vsel %vm278, %v1183, %v1187
  %v1202 = vsel %vm278, %v1193, %v1181
  %v1203 = vsel %vm278, %v1195, %v1183
  %v1204 = vmul.f32 %v1202, %v312
  %v1205 = vmul.f32 %v1200, %v316
  %v1206 = vmul.f32 %v1198, %v320
  %v1207 = vmul.f32 %v1196, %v324
  %v1208 = vmul.f32 %v1203, %v312
  %v1209 = vmul.f32 %v1201, %v316
  %v1210 = vmul.f32 %v1199, %v320
  %v1211 = vmul.f32 %v1197, %v324
  %1212 = vrot.lane.b32.xlu0 %v987, 127
  %v1213 = vpop.permute.xlu0 %1212
  %1214 = vrot.lane.b32.xlu0 %v1176, 127
  %v1215 = vpop.permute.xlu0 %1214
  %1216 = vrot.lane.b32.xlu0 %v988, 127
  %v1217 = vpop.permute.xlu0 %1216
  %1218 = vrot.lane.b32.xlu0 %v1177, 127
  %v1219 = vpop.permute.xlu0 %1218
  %1220 = vrot.lane.b32.xlu0 %v989, 127
  %v1221 = vpop.permute.xlu0 %1220
  %1222 = vrot.lane.b32.xlu0 %v1178, 127
  %v1223 = vpop.permute.xlu0 %1222
  %1224 = vrot.lane.b32.xlu0 %v990, 127
  %v1225 = vpop.permute.xlu0 %1224
  %1226 = vrot.lane.b32.xlu0 %v1179, 127
  %v1227 = vpop.permute.xlu0 %1226
  %v1228 = vsel %vm349, %v1221, %v1225
  %v1229 = vsel %vm349, %v1223, %v1227
  %v1230 = vsel %vm349, %v1217, %v1221
  %v1231 = vsel %vm349, %v1219, %v1223
  %v1232 = vsel %vm349, %v1213, %v1217
  %v1233 = vsel %vm349, %v1215, %v1219
  %v1234 = vsel %vm349, %v1225, %v1213
  %v1235 = vsel %vm349, %v1227, %v1215
  %v1236 = vmul.f32 %v1232, %v381
  %v1237 = vmul.f32 %v1230, %v385
  %v1238 = vmul.f32 %v1228, %v389
  %v1239 = vmul.f32 %v1234, %v393
  %v1240 = vmul.f32 %v1233, %v381
  %v1241 = vmul.f32 %v1231, %v385
  %v1242 = vmul.f32 %v1229, %v389
  %v1243 = vmul.f32 %v1235, %v393
  %1245 = vset.pattern.permute.xlu0 0
  %1246 = vperm.xlu0 %1245, %v998
  %v1247 = vpop.permute.xlu0 %1246
  %1250 = vset.pattern.permute.xlu0 0
  %1251 = vperm.xlu0 %1250, %v999
  %v1252 = vpop.permute.xlu0 %1251
  %v1254 = vmul.f32 %v1204, %v1247
  %v1255 = vmul.f32 %v1205, %v1247
  %v1256 = vmul.f32 %v1206, %v1247
  %v1257 = vmul.f32 %v1207, %v1247
  %v1258 = vmul.f32 %v1208, %v1252
  %v1259 = vmul.f32 %v1209, %v1252
  %v1260 = vmul.f32 %v1210, %v1252
  %v1261 = vmul.f32 %v1211, %v1252
  %1262 = vset.pattern.permute.xlu0 1
  %1263 = vperm.xlu0 %1262, %v998
  %v1264 = vpop.permute.xlu0 %1263
  %1266 = vset.pattern.permute.xlu0 1
  %1267 = vperm.xlu0 %1266, %v999
  %v1268 = vpop.permute.xlu0 %1267
  %v1270 = vmul.f32 %v987, %v1264
  %v1271 = vmul.f32 %v988, %v1264
  %v1272 = vmul.f32 %v989, %v1264
  %v1273 = vmul.f32 %v990, %v1264
  %v1274 = vmul.f32 %v1176, %v1268
  %v1275 = vmul.f32 %v1177, %v1268
  %v1276 = vmul.f32 %v1178, %v1268
  %v1277 = vmul.f32 %v1179, %v1268
  %v1278 = vadd.f32 %v1254, %v1270
  %v1279 = vadd.f32 %v1255, %v1271
  %v1280 = vadd.f32 %v1256, %v1272
  %v1281 = vadd.f32 %v1257, %v1273
  %v1282 = vadd.f32 %v1258, %v1274
  %v1283 = vadd.f32 %v1259, %v1275
  %v1284 = vadd.f32 %v1260, %v1276
  %v1285 = vadd.f32 %v1261, %v1277
  %1286 = vset.pattern.permute.xlu0 2
  %1287 = vperm.xlu0 %1286, %v998
  %v1288 = vpop.permute.xlu0 %1287
  %1290 = vset.pattern.permute.xlu0 2
  %1291 = vperm.xlu0 %1290, %v999
  %v1292 = vpop.permute.xlu0 %1291
  %v1294 = vmul.f32 %v1236, %v1288
  %v1295 = vmul.f32 %v1237, %v1288
  %v1296 = vmul.f32 %v1238, %v1288
  %v1297 = vmul.f32 %v1239, %v1288
  %v1298 = vmul.f32 %v1240, %v1292
  %v1299 = vmul.f32 %v1241, %v1292
  %v1300 = vmul.f32 %v1242, %v1292
  %v1301 = vmul.f32 %v1243, %v1292
  %v1302 = vadd.f32 %v1278, %v1294
  %v1303 = vadd.f32 %v1279, %v1295
  %v1304 = vadd.f32 %v1280, %v1296
  %v1305 = vadd.f32 %v1281, %v1297
  %v1306 = vadd.f32 %v1282, %v1298
  %v1307 = vadd.f32 %v1283, %v1299
  %v1308 = vadd.f32 %v1284, %v1300
  %v1309 = vadd.f32 %v1285, %v1301
  %1310 = vrot.lane.b32.xlu0 %v1302, 16
  %v1311 = vpop.permute.xlu0 %1310
  %1312 = vrot.lane.b32.xlu0 %v1306, 16
  %v1313 = vpop.permute.xlu0 %1312
  %1314 = vrot.lane.b32.xlu0 %v1303, 16
  %v1315 = vpop.permute.xlu0 %1314
  %1316 = vrot.lane.b32.xlu0 %v1307, 16
  %v1317 = vpop.permute.xlu0 %1316
  %1318 = vrot.lane.b32.xlu0 %v1304, 16
  %v1319 = vpop.permute.xlu0 %1318
  %1320 = vrot.lane.b32.xlu0 %v1308, 16
  %v1321 = vpop.permute.xlu0 %1320
  %1322 = vrot.lane.b32.xlu0 %v1305, 16
  %v1323 = vpop.permute.xlu0 %1322
  %1324 = vrot.lane.b32.xlu0 %v1309, 16
  %v1325 = vpop.permute.xlu0 %1324
  %v1326 = vsel %vm484, %v1319, %v1323
  %v1327 = vsel %vm484, %v1321, %v1325
  %v1328 = vsel %vm484, %v1315, %v1319
  %v1329 = vsel %vm484, %v1317, %v1321
  %v1330 = vsel %vm484, %v1311, %v1315
  %v1331 = vsel %vm484, %v1313, %v1317
  %v1332 = vsel %vm484, %v1323, %v1311
  %v1333 = vsel %vm484, %v1325, %v1313
  %v1334 = vmul.f32 %v1332, %v516
  %v1335 = vmul.f32 %v1330, %v520
  %v1336 = vmul.f32 %v1328, %v524
  %v1337 = vmul.f32 %v1326, %v528
  %v1338 = vmul.f32 %v1333, %v516
  %v1339 = vmul.f32 %v1331, %v520
  %v1340 = vmul.f32 %v1329, %v524
  %v1341 = vmul.f32 %v1327, %v528
  %1342 = vset.pattern.permute.xlu0 3
  %1343 = vperm.xlu0 %1342, %v998
  %v1344 = vpop.permute.xlu0 %1343
  %1346 = vset.pattern.permute.xlu0 3
  %1347 = vperm.xlu0 %1346, %v999
  %v1348 = vpop.permute.xlu0 %1347
  %v1350 = vmul.f32 %v1204, %v1344
  %v1351 = vmul.f32 %v1205, %v1344
  %v1352 = vmul.f32 %v1206, %v1344
  %v1353 = vmul.f32 %v1207, %v1344
  %v1354 = vmul.f32 %v1208, %v1348
  %v1355 = vmul.f32 %v1209, %v1348
  %v1356 = vmul.f32 %v1210, %v1348
  %v1357 = vmul.f32 %v1211, %v1348
  %1358 = vset.pattern.permute.xlu0 4
  %1359 = vperm.xlu0 %1358, %v998
  %v1360 = vpop.permute.xlu0 %1359
  %1362 = vset.pattern.permute.xlu0 4
  %1363 = vperm.xlu0 %1362, %v999
  %v1364 = vpop.permute.xlu0 %1363
  %v1366 = vmul.f32 %v987, %v1360
  %v1367 = vmul.f32 %v988, %v1360
  %v1368 = vmul.f32 %v989, %v1360
  %v1369 = vmul.f32 %v990, %v1360
  %v1370 = vmul.f32 %v1176, %v1364
  %v1371 = vmul.f32 %v1177, %v1364
  %v1372 = vmul.f32 %v1178, %v1364
  %v1373 = vmul.f32 %v1179, %v1364
  %v1374 = vadd.f32 %v1350, %v1366
  %v1375 = vadd.f32 %v1351, %v1367
  %v1376 = vadd.f32 %v1352, %v1368
  %v1377 = vadd.f32 %v1353, %v1369
  %v1378 = vadd.f32 %v1354, %v1370
  %v1379 = vadd.f32 %v1355, %v1371
  %v1380 = vadd.f32 %v1356, %v1372
  %v1381 = vadd.f32 %v1357, %v1373
  %1382 = vset.pattern.permute.xlu0 5
  %1383 = vperm.xlu0 %1382, %v998
  %v1384 = vpop.permute.xlu0 %1383
  %1386 = vset.pattern.permute.xlu0 5
  %1387 = vperm.xlu0 %1386, %v999
  %v1388 = vpop.permute.xlu0 %1387
  %v1390 = vmul.f32 %v1236, %v1384
  %v1391 = vmul.f32 %v1237, %v1384
  %v1392 = vmul.f32 %v1238, %v1384
  %v1393 = vmul.f32 %v1239, %v1384
  %v1394 = vmul.f32 %v1240, %v1388
  %v1395 = vmul.f32 %v1241, %v1388
  %v1396 = vmul.f32 %v1242, %v1388
  %v1397 = vmul.f32 %v1243, %v1388
  %v1398 = vadd.f32 %v1374, %v1390
  %v1399 = vadd.f32 %v1375, %v1391
  %v1400 = vadd.f32 %v1376, %v1392
  %v1401 = vadd.f32 %v1377, %v1393
  %v1402 = vadd.f32 %v1378, %v1394
  %v1403 = vadd.f32 %v1379, %v1395
  %v1404 = vadd.f32 %v1380, %v1396
  %v1405 = vadd.f32 %v1381, %v1397
  %v1406 = vadd.f32 %v1334, %v1398
  %v1407 = vadd.f32 %v1335, %v1399
  %v1408 = vadd.f32 %v1336, %v1400
  %v1409 = vadd.f32 %v1337, %v1401
  %v1410 = vadd.f32 %v1338, %v1402
  %v1411 = vadd.f32 %v1339, %v1403
  %v1412 = vadd.f32 %v1340, %v1404
  %v1413 = vadd.f32 %v1341, %v1405
  %1414 = vset.pattern.permute.xlu0 6
  %1415 = vperm.xlu0 %1414, %v998
  %v1416 = vpop.permute.xlu0 %1415
  %1418 = vset.pattern.permute.xlu0 6
  %1419 = vperm.xlu0 %1418, %v999
  %v1420 = vpop.permute.xlu0 %1419
  %v1422 = vmul.f32 %v1204, %v1416
  %v1423 = vmul.f32 %v1205, %v1416
  %v1424 = vmul.f32 %v1206, %v1416
  %v1425 = vmul.f32 %v1207, %v1416
  %v1426 = vmul.f32 %v1208, %v1420
  %v1427 = vmul.f32 %v1209, %v1420
  %v1428 = vmul.f32 %v1210, %v1420
  %v1429 = vmul.f32 %v1211, %v1420
  %1430 = vset.pattern.permute.xlu0 7
  %1431 = vperm.xlu0 %1430, %v998
  %v1432 = vpop.permute.xlu0 %1431
  %1434 = vset.pattern.permute.xlu0 7
  %1435 = vperm.xlu0 %1434, %v999
  %v1436 = vpop.permute.xlu0 %1435
  %v1438 = vmul.f32 %v987, %v1432
  %v1439 = vmul.f32 %v988, %v1432
  %v1440 = vmul.f32 %v989, %v1432
  %v1441 = vmul.f32 %v990, %v1432
  %v1442 = vmul.f32 %v1176, %v1436
  %v1443 = vmul.f32 %v1177, %v1436
  %v1444 = vmul.f32 %v1178, %v1436
  %v1445 = vmul.f32 %v1179, %v1436
  %v1446 = vadd.f32 %v1422, %v1438
  %v1447 = vadd.f32 %v1423, %v1439
  %v1448 = vadd.f32 %v1424, %v1440
  %v1449 = vadd.f32 %v1425, %v1441
  %v1450 = vadd.f32 %v1426, %v1442
  %v1451 = vadd.f32 %v1427, %v1443
  %v1452 = vadd.f32 %v1428, %v1444
  %v1453 = vadd.f32 %v1429, %v1445
  %1454 = vset.pattern.permute.xlu0 8
  %1455 = vperm.xlu0 %1454, %v998
  %v1456 = vpop.permute.xlu0 %1455
  %1458 = vset.pattern.permute.xlu0 8
  %1459 = vperm.xlu0 %1458, %v999
  %v1460 = vpop.permute.xlu0 %1459
  %v1462 = vmul.f32 %v1236, %v1456
  %v1463 = vmul.f32 %v1237, %v1456
  %v1464 = vmul.f32 %v1238, %v1456
  %v1465 = vmul.f32 %v1239, %v1456
  %v1466 = vmul.f32 %v1240, %v1460
  %v1467 = vmul.f32 %v1241, %v1460
  %v1468 = vmul.f32 %v1242, %v1460
  %v1469 = vmul.f32 %v1243, %v1460
  %v1470 = vadd.f32 %v1446, %v1462
  %v1471 = vadd.f32 %v1447, %v1463
  %v1472 = vadd.f32 %v1448, %v1464
  %v1473 = vadd.f32 %v1449, %v1465
  %v1474 = vadd.f32 %v1450, %v1466
  %v1475 = vadd.f32 %v1451, %v1467
  %v1476 = vadd.f32 %v1452, %v1468
  %v1477 = vadd.f32 %v1453, %v1469
  %1478 = vrot.lane.b32.xlu0 %v1470, 112
  %v1479 = vpop.permute.xlu0 %1478
  %1480 = vrot.lane.b32.xlu0 %v1474, 112
  %v1481 = vpop.permute.xlu0 %1480
  %1482 = vrot.lane.b32.xlu0 %v1471, 112
  %v1483 = vpop.permute.xlu0 %1482
  %1484 = vrot.lane.b32.xlu0 %v1475, 112
  %v1485 = vpop.permute.xlu0 %1484
  %1486 = vrot.lane.b32.xlu0 %v1472, 112
  %v1487 = vpop.permute.xlu0 %1486
  %1488 = vrot.lane.b32.xlu0 %v1476, 112
  %v1489 = vpop.permute.xlu0 %1488
  %1490 = vrot.lane.b32.xlu0 %v1473, 112
  %v1491 = vpop.permute.xlu0 %1490
  %1492 = vrot.lane.b32.xlu0 %v1477, 112
  %v1493 = vpop.permute.xlu0 %1492
  %v1494 = vsel %vm689, %v1487, %v1491
  %v1495 = vsel %vm689, %v1489, %v1493
  %v1496 = vsel %vm689, %v1483, %v1487
  %v1497 = vsel %vm689, %v1485, %v1489
  %v1498 = vsel %vm689, %v1479, %v1483
  %v1499 = vsel %vm689, %v1481, %v1485
  %v1500 = vsel %vm689, %v1491, %v1479
  %v1501 = vsel %vm689, %v1493, %v1481
  %v1502 = vmul.f32 %v1498, %v721
  %v1503 = vmul.f32 %v1496, %v725
  %v1504 = vmul.f32 %v1494, %v729
  %v1505 = vmul.f32 %v1500, %v733
  %v1506 = vmul.f32 %v1499, %v721
  %v1507 = vmul.f32 %v1497, %v725
  %v1508 = vmul.f32 %v1495, %v729
  %v1509 = vmul.f32 %v1501, %v733
  %v1510 = vadd.f32 %v1406, %v1502
  %v1511 = vadd.f32 %v1407, %v1503
  %v1512 = vadd.f32 %v1408, %v1504
  %v1513 = vadd.f32 %v1409, %v1505
  %v1514 = vadd.f32 %v1410, %v1506
  %v1515 = vadd.f32 %v1411, %v1507
  %v1516 = vadd.f32 %v1412, %v1508
  %v1517 = vadd.f32 %v1413, %v1509
  %1518 = vset.pattern.permute.xlu0 1
  %1519 = vperm.xlu0 %1518, %v75
  %v1520 = vpop.permute.xlu0 %1519
  %1522 = vset.pattern.permute.xlu0 1
  %1523 = vperm.xlu0 %1522, %v76
  %v1524 = vpop.permute.xlu0 %1523
  %v1526 = vadd.f32 %v1510, %v1520
  %v1527 = vadd.f32 %v1511, %v1520
  %v1528 = vadd.f32 %v1512, %v1520
  %v1529 = vadd.f32 %v1513, %v1520
  %v1530 = vadd.f32 %v1514, %v1524
  %v1531 = vadd.f32 %v1515, %v1524
  %v1532 = vadd.f32 %v1516, %v1524
  %v1533 = vadd.f32 %v1517, %v1524
  %1534 = vset.pattern.permute.xlu0 1
  %1535 = vperm.xlu0 %1534, %v79
  %v1536 = vpop.permute.xlu0 %1535
  %1538 = vset.pattern.permute.xlu0 1
  %1539 = vperm.xlu0 %1538, %v80
  %v1540 = vpop.permute.xlu0 %1539
  %v1543 = vsel %vm778, %v1001, 0
  %v1546 = vsel %vm778, %v1002, 0
  %1548 = vmatprep.subr.mxu0 %v1527
  %1549 = vmatpush1.msra.mxu0 %v1526
  %1550 = vmatprep.subr.mxu0 %v1531
  %1551 = vmatpush1.msra.mxu0 %v1530
  %1552 = vmatprep.subr.mxu0 0.0
  %1553 = vmatpush1.msra.mxu0 0.0
  %1554 = vmatprep.subr.mxu0 0.0
  %1555 = vmatpush1.msra.mxu0 0.0
  %1556 = vmatprep.subr.mxu0 0.0
  %1557 = vmatpush1.msra.mxu0 0.0
  %1558 = vmatprep.subr.mxu0 0.0
  %1559 = vmatpush1.msra.mxu0 0.0
  %1560 = vmatprep.subr.mxu0 0.0
  %1561 = vmatpush1.msra.mxu0 0.0
  %1562 = vmatprep.subr.mxu0 0.0
  %1563 = vmatpush1.msra.mxu0 0.0
  %1564 = vmatprep.subr.mxu0 0.0
  %1565 = vmatpush1.msra.mxu0 0.0
  %1566 = vmatprep.subr.mxu0 0.0
  %1567 = vmatpush1.msra.mxu0 0.0
  %1568 = vmatprep.subr.mxu0 0.0
  %1569 = vmatpush1.msra.mxu0 0.0
  %1570 = vmatprep.subr.mxu0 0.0
  %1571 = vmatpush1.msra.mxu0 0.0
  %1572 = vmatprep.subr.mxu0 0.0
  %1573 = vmatpush1.msra.mxu0 0.0
  %1574 = vmatprep.subr.mxu0 0.0
  %1575 = vmatpush1.msra.mxu0 0.0
  %1576 = vmatprep.subr.mxu0 0.0
  %1577 = vmatpush1.msra.mxu0 0.0
  %1578 = vmatprep.subr.mxu0 0.0
  %1579 = vmatpush1.msra.mxu0 0.0
  %1580 = vmatprep.subr.mxu0 0.0
  %1581 = vmatpush1.msra.mxu0 0.0
  %1582 = vmatprep.subr.mxu0 0.0
  %1583 = vmatpush1.msra.mxu0 0.0
  %1584 = vmatprep.subr.mxu0 0.0
  %1585 = vmatpush1.msra.mxu0 0.0
  %1586 = vmatprep.subr.mxu0 0.0
  %1587 = vmatpush1.msra.mxu0 0.0
  %1588 = vmatprep.subr.mxu0 0.0
  %1589 = vmatpush1.msra.mxu0 0.0
  %1590 = vmatprep.subr.mxu0 0.0
  %1591 = vmatpush1.msra.mxu0 0.0
  %1592 = vmatprep.subr.mxu0 0.0
  %1593 = vmatpush1.msra.mxu0 0.0
  %1594 = vmatprep.subr.mxu0 0.0
  %1595 = vmatpush1.msra.mxu0 0.0
  %1596 = vmatprep.subr.mxu0 0.0
  %1597 = vmatpush1.msra.mxu0 0.0
  %1598 = vmatprep.subr.mxu0 0.0
  %1599 = vmatpush1.msra.mxu0 0.0
  %1600 = vmatprep.subr.mxu0 0.0
  %1601 = vmatpush1.msra.mxu0 0.0
  %1602 = vmatprep.subr.mxu0 0.0
  %1603 = vmatpush1.msra.mxu0 0.0
  %1604 = vmatprep.subr.mxu0 0.0
  %1605 = vmatpush1.msra.mxu0 0.0
  %1606 = vmatprep.subr.mxu0 0.0
  %1607 = vmatpush1.msra.mxu0 0.0
  %1608 = vmatprep.subr.mxu0 0.0
  %1609 = vmatpush1.msra.mxu0 0.0
  %1610 = vmatprep.subr.mxu0 0.0
  %1611 = vmatpush1.msra.mxu0 0.0
  %1612 = vmatprep.mubr.f32.mxu0 0.0
  %1613 = vmatmul.mubr.f32.gmra.mrb[0].mxu0 %v1543
  %v1614 = vpop.f32.mrb[0].mxu0
  %v1615 = vadd.f32 %v1536, %v1614
  %v1616 = vpop.f32.mrb[0].mxu0
  %v1617 = vadd.f32 %v1536, %v1616
  %1618 = vmatprep.mubr.f32.mxu0 0.0
  %1619 = vmatmul.mubr.f32.gmra.mrb[0].mxu0 %v1546
  %v1620 = vpop.f32.mrb[0].mxu0
  %v1621 = vadd.f32 %v1540, %v1620
  %v1622 = vpop.f32.mrb[0].mxu0
  %v1623 = vadd.f32 %v1540, %v1622
  %1624 = vdwg.mxu0
  %1625 = vmatprep.subr.mxu0 %v1529
  %1626 = vmatpush1.msra.mxu0 %v1528
  %1627 = vmatprep.subr.mxu0 %v1533
  %1628 = vmatpush1.msra.mxu0 %v1532
  %1629 = vmatprep.subr.mxu0 0.0
  %1630 = vmatpush1.msra.mxu0 0.0
  %1631 = vmatprep.subr.mxu0 0.0
  %1632 = vmatpush1.msra.mxu0 0.0
  %1633 = vmatprep.subr.mxu0 0.0
  %1634 = vmatpush1.msra.mxu0 0.0
  %1635 = vmatprep.subr.mxu0 0.0
  %1636 = vmatpush1.msra.mxu0 0.0
  %1637 = vmatprep.subr.mxu0 0.0
  %1638 = vmatpush1.msra.mxu0 0.0
  %1639 = vmatprep.subr.mxu0 0.0
  %1640 = vmatpush1.msra.mxu0 0.0
  %1641 = vmatprep.subr.mxu0 0.0
  %1642 = vmatpush1.msra.mxu0 0.0
  %1643 = vmatprep.subr.mxu0 0.0
  %1644 = vmatpush1.msra.mxu0 0.0
  %1645 = vmatprep.subr.mxu0 0.0
  %1646 = vmatpush1.msra.mxu0 0.0
  %1647 = vmatprep.subr.mxu0 0.0
  %1648 = vmatpush1.msra.mxu0 0.0
  %1649 = vmatprep.subr.mxu0 0.0
  %1650 = vmatpush1.msra.mxu0 0.0
  %1651 = vmatprep.subr.mxu0 0.0
  %1652 = vmatpush1.msra.mxu0 0.0
  %1653 = vmatprep.subr.mxu0 0.0
  %1654 = vmatpush1.msra.mxu0 0.0
  %1655 = vmatprep.subr.mxu0 0.0
  %1656 = vmatpush1.msra.mxu0 0.0
  %1657 = vmatprep.subr.mxu0 0.0
  %1658 = vmatpush1.msra.mxu0 0.0
  %1659 = vmatprep.subr.mxu0 0.0
  %1660 = vmatpush1.msra.mxu0 0.0
  %1661 = vmatprep.subr.mxu0 0.0
  %1662 = vmatpush1.msra.mxu0 0.0
  %1663 = vmatprep.subr.mxu0 0.0
  %1664 = vmatpush1.msra.mxu0 0.0
  %1665 = vmatprep.subr.mxu0 0.0
  %1666 = vmatpush1.msra.mxu0 0.0
  %1667 = vmatprep.subr.mxu0 0.0
  %1668 = vmatpush1.msra.mxu0 0.0
  %1669 = vmatprep.subr.mxu0 0.0
  %1670 = vmatpush1.msra.mxu0 0.0
  %1671 = vmatprep.subr.mxu0 0.0
  %1672 = vmatpush1.msra.mxu0 0.0
  %1673 = vmatprep.subr.mxu0 0.0
  %1674 = vmatpush1.msra.mxu0 0.0
  %1675 = vmatprep.subr.mxu0 0.0
  %1676 = vmatpush1.msra.mxu0 0.0
  %1677 = vmatprep.subr.mxu0 0.0
  %1678 = vmatpush1.msra.mxu0 0.0
  %1679 = vmatprep.subr.mxu0 0.0
  %1680 = vmatpush1.msra.mxu0 0.0
  %1681 = vmatprep.subr.mxu0 0.0
  %1682 = vmatpush1.msra.mxu0 0.0
  %1683 = vmatprep.subr.mxu0 0.0
  %1684 = vmatpush1.msra.mxu0 0.0
  %1685 = vmatprep.subr.mxu0 0.0
  %1686 = vmatpush1.msra.mxu0 0.0
  %1687 = vmatprep.subr.mxu0 0.0
  %1688 = vmatpush1.msra.mxu0 0.0
  %1689 = vmatprep.mubr.f32.mxu0 0.0
  %1690 = vmatmul.mubr.f32.gmra.mrb[0].mxu0 %v1543
  %v1691 = vpop.f32.mrb[0].mxu0
  %v1692 = vadd.f32 %v1536, %v1691
  %v1693 = vpop.f32.mrb[0].mxu0
  %v1694 = vadd.f32 %v1536, %v1693
  %1695 = vmatprep.mubr.f32.mxu0 0.0
  %1696 = vmatmul.mubr.f32.gmra.mrb[0].mxu0 %v1546
  %v1697 = vpop.f32.mrb[0].mxu0
  %v1698 = vadd.f32 %v1540, %v1697
  %v1699 = vpop.f32.mrb[0].mxu0
  %v1700 = vadd.f32 %v1540, %v1699
  %1701 = vdwg.mxu0
  %v1702 = vxor.u32 %v1615, 2147483648
  %v1703 = vxor.u32 %v1617, 2147483648
  %v1704 = vxor.u32 %v1692, 2147483648
  %v1705 = vxor.u32 %v1694, 2147483648
  %v1706 = vxor.u32 %v1621, 2147483648
  %v1707 = vxor.u32 %v1623, 2147483648
  %v1708 = vxor.u32 %v1698, 2147483648
  %v1709 = vxor.u32 %v1700, 2147483648
  %v1710 = vmul.f32 %v1702, 1.442695
  %v1711 = vpow.pop %v1710
  %v1712 = vmul.f32 %v1703, 1.442695
  %v1713 = vpow.pop %v1712
  %v1714 = vmul.f32 %v1704, 1.442695
  %v1715 = vpow.pop %v1714
  %v1716 = vmul.f32 %v1705, 1.442695
  %v1717 = vpow.pop %v1716
  %v1718 = vmul.f32 %v1706, 1.442695
  %v1719 = vpow.pop %v1718
  %v1720 = vmul.f32 %v1707, 1.442695
  %v1721 = vpow.pop %v1720
  %v1722 = vmul.f32 %v1708, 1.442695
  %v1723 = vpow.pop %v1722
  %v1724 = vmul.f32 %v1709, 1.442695
  %v1725 = vpow.pop %v1724
  %v1726 = vadd.f32 %v1711, 1.0
  %v1727 = vadd.f32 %v1713, 1.0
  %v1728 = vadd.f32 %v1715, 1.0
  %v1729 = vadd.f32 %v1717, 1.0
  %v1730 = vadd.f32 %v1719, 1.0
  %v1731 = vadd.f32 %v1721, 1.0
  %v1732 = vadd.f32 %v1723, 1.0
  %v1733 = vadd.f32 %v1725, 1.0
  %v1734 = vrcp.pop %v1726
  %v1735 = vmul.f32 1.0, %v1734
  %v1736 = vrcp.pop %v1727
  %v1737 = vmul.f32 1.0, %v1736
  %v1738 = vrcp.pop %v1728
  %v1739 = vmul.f32 1.0, %v1738
  %v1740 = vrcp.pop %v1729
  %v1741 = vmul.f32 1.0, %v1740
  %v1742 = vrcp.pop %v1730
  %v1743 = vmul.f32 1.0, %v1742
  %v1744 = vrcp.pop %v1731
  %v1745 = vmul.f32 1.0, %v1744
  %v1746 = vrcp.pop %v1732
  %v1747 = vmul.f32 1.0, %v1746
  %v1748 = vrcp.pop %v1733
  %v1749 = vmul.f32 1.0, %v1748
  %v1750 = vmul.f32 %v1615, %v1735
  %v1751 = vmul.f32 %v1617, %v1737
  %v1752 = vmul.f32 %v1692, %v1739
  %v1753 = vmul.f32 %v1694, %v1741
  %v1754 = vmul.f32 %v1621, %v1743
  %v1755 = vmul.f32 %v1623, %v1745
  %v1756 = vmul.f32 %v1698, %v1747
  %v1757 = vmul.f32 %v1700, %v1749
  %s1758 = scalar_lea.vmem %s4, 16
  %v1759 = vld [vmem:[%s1758] sm:$0xff]
  %s1760 = scalar_lea.vmem %s6, 32
  %v1761 = vld [vmem:[%s1760] sm:$0xff]
  %v1762 = vld [vmem:[%s1760 + $0x8] sm:$0xff]
  %s1763 = scalar_lea.vmem %s8, 32
  %v1764 = vld [vmem:[%s1763] sm:$0xff]
  %v1765 = vld [vmem:[%s1763 + $0x8] sm:$0xff]
  %1766 = vset.pattern.permute.xlu0 2
  %1767 = vperm.xlu0 %1766, %v72
  %v1768 = vpop.permute.xlu0 %1767
  %v1771 = vsel %vm86, %v1759, 0
  %1773 = vmatprep.subr.mxu0 %v1755
  %1774 = vmatpush1.msra.mxu0 %v1754
  %1775 = vmatprep.subr.mxu0 0.0
  %1776 = vmatpush1.msra.mxu0 0.0
  %1777 = vmatprep.subr.mxu0 0.0
  %1778 = vmatpush1.msra.mxu0 0.0
  %1779 = vmatprep.subr.mxu0 0.0
  %1780 = vmatpush1.msra.mxu0 0.0
  %1781 = vmatprep.subr.mxu0 0.0
  %1782 = vmatpush1.msra.mxu0 0.0
  %1783 = vmatprep.subr.mxu0 0.0
  %1784 = vmatpush1.msra.mxu0 0.0
  %1785 = vmatprep.subr.mxu0 0.0
  %1786 = vmatpush1.msra.mxu0 0.0
  %1787 = vmatprep.subr.mxu0 0.0
  %1788 = vmatpush1.msra.mxu0 0.0
  %1789 = vmatprep.subr.mxu0 0.0
  %1790 = vmatpush1.msra.mxu0 0.0
  %1791 = vmatprep.subr.mxu0 0.0
  %1792 = vmatpush1.msra.mxu0 0.0
  %1793 = vmatprep.subr.mxu0 0.0
  %1794 = vmatpush1.msra.mxu0 0.0
  %1795 = vmatprep.subr.mxu0 0.0
  %1796 = vmatpush1.msra.mxu0 0.0
  %1797 = vmatprep.subr.mxu0 0.0
  %1798 = vmatpush1.msra.mxu0 0.0
  %1799 = vmatprep.subr.mxu0 0.0
  %1800 = vmatpush1.msra.mxu0 0.0
  %1801 = vmatprep.subr.mxu0 0.0
  %1802 = vmatpush1.msra.mxu0 0.0
  %1803 = vmatprep.subr.mxu0 0.0
  %1804 = vmatpush1.msra.mxu0 0.0
  %1805 = vmatprep.subr.mxu0 0.0
  %1806 = vmatpush1.msra.mxu0 0.0
  %1807 = vmatprep.subr.mxu0 0.0
  %1808 = vmatpush1.msra.mxu0 0.0
  %1809 = vmatprep.subr.mxu0 0.0
  %1810 = vmatpush1.msra.mxu0 0.0
  %1811 = vmatprep.subr.mxu0 0.0
  %1812 = vmatpush1.msra.mxu0 0.0
  %1813 = vmatprep.subr.mxu0 0.0
  %1814 = vmatpush1.msra.mxu0 0.0
  %1815 = vmatprep.subr.mxu0 0.0
  %1816 = vmatpush1.msra.mxu0 0.0
  %1817 = vmatprep.subr.mxu0 0.0
  %1818 = vmatpush1.msra.mxu0 0.0
  %1819 = vmatprep.subr.mxu0 0.0
  %1820 = vmatpush1.msra.mxu0 0.0
  %1821 = vmatprep.subr.mxu0 0.0
  %1822 = vmatpush1.msra.mxu0 0.0
  %1823 = vmatprep.subr.mxu0 0.0
  %1824 = vmatpush1.msra.mxu0 0.0
  %1825 = vmatprep.subr.mxu0 0.0
  %1826 = vmatpush1.msra.mxu0 0.0
  %1827 = vmatprep.subr.mxu0 0.0
  %1828 = vmatpush1.msra.mxu0 0.0
  %1829 = vmatprep.subr.mxu0 0.0
  %1830 = vmatpush1.msra.mxu0 0.0
  %1831 = vmatprep.subr.mxu0 0.0
  %1832 = vmatpush1.msra.mxu0 0.0
  %1833 = vmatprep.subr.mxu0 0.0
  %1834 = vmatpush1.msra.mxu0 0.0
  %1835 = vmatprep.subr.mxu0 0.0
  %1836 = vmatpush1.msra.mxu0 0.0
  %1837 = vmatprep.mubr.f32.mxu0 0.0
  %1838 = vmatmul.mubr.f32.gmra.mrb[0].mxu0 %v1771
  %v1839 = vpop.f32.mrb[0].mxu0
  %v1840 = vadd.f32 %v1768, %v1839
  %v1841 = vpop.f32.mrb[0].mxu0
  %v1842 = vadd.f32 %v1768, %v1841
  %1843 = vdwg.mxu0
  %1844 = vmatprep.subr.mxu0 %v1757
  %1845 = vmatpush1.msra.mxu0 %v1756
  %1846 = vmatprep.subr.mxu0 0.0
  %1847 = vmatpush1.msra.mxu0 0.0
  %1848 = vmatprep.subr.mxu0 0.0
  %1849 = vmatpush1.msra.mxu0 0.0
  %1850 = vmatprep.subr.mxu0 0.0
  %1851 = vmatpush1.msra.mxu0 0.0
  %1852 = vmatprep.subr.mxu0 0.0
  %1853 = vmatpush1.msra.mxu0 0.0
  %1854 = vmatprep.subr.mxu0 0.0
  %1855 = vmatpush1.msra.mxu0 0.0
  %1856 = vmatprep.subr.mxu0 0.0
  %1857 = vmatpush1.msra.mxu0 0.0
  %1858 = vmatprep.subr.mxu0 0.0
  %1859 = vmatpush1.msra.mxu0 0.0
  %1860 = vmatprep.subr.mxu0 0.0
  %1861 = vmatpush1.msra.mxu0 0.0
  %1862 = vmatprep.subr.mxu0 0.0
  %1863 = vmatpush1.msra.mxu0 0.0
  %1864 = vmatprep.subr.mxu0 0.0
  %1865 = vmatpush1.msra.mxu0 0.0
  %1866 = vmatprep.subr.mxu0 0.0
  %1867 = vmatpush1.msra.mxu0 0.0
  %1868 = vmatprep.subr.mxu0 0.0
  %1869 = vmatpush1.msra.mxu0 0.0
  %1870 = vmatprep.subr.mxu0 0.0
  %1871 = vmatpush1.msra.mxu0 0.0
  %1872 = vmatprep.subr.mxu0 0.0
  %1873 = vmatpush1.msra.mxu0 0.0
  %1874 = vmatprep.subr.mxu0 0.0
  %1875 = vmatpush1.msra.mxu0 0.0
  %1876 = vmatprep.subr.mxu0 0.0
  %1877 = vmatpush1.msra.mxu0 0.0
  %1878 = vmatprep.subr.mxu0 0.0
  %1879 = vmatpush1.msra.mxu0 0.0
  %1880 = vmatprep.subr.mxu0 0.0
  %1881 = vmatpush1.msra.mxu0 0.0
  %1882 = vmatprep.subr.mxu0 0.0
  %1883 = vmatpush1.msra.mxu0 0.0
  %1884 = vmatprep.subr.mxu0 0.0
  %1885 = vmatpush1.msra.mxu0 0.0
  %1886 = vmatprep.subr.mxu0 0.0
  %1887 = vmatpush1.msra.mxu0 0.0
  %1888 = vmatprep.subr.mxu0 0.0
  %1889 = vmatpush1.msra.mxu0 0.0
  %1890 = vmatprep.subr.mxu0 0.0
  %1891 = vmatpush1.msra.mxu0 0.0
  %1892 = vmatprep.subr.mxu0 0.0
  %1893 = vmatpush1.msra.mxu0 0.0
  %1894 = vmatprep.subr.mxu0 0.0
  %1895 = vmatpush1.msra.mxu0 0.0
  %1896 = vmatprep.subr.mxu0 0.0
  %1897 = vmatpush1.msra.mxu0 0.0
  %1898 = vmatprep.subr.mxu0 0.0
  %1899 = vmatpush1.msra.mxu0 0.0
  %1900 = vmatprep.subr.mxu0 0.0
  %1901 = vmatpush1.msra.mxu0 0.0
  %1902 = vmatprep.subr.mxu0 0.0
  %1903 = vmatpush1.msra.mxu0 0.0
  %1904 = vmatprep.subr.mxu0 0.0
  %1905 = vmatpush1.msra.mxu0 0.0
  %1906 = vmatprep.subr.mxu0 0.0
  %1907 = vmatpush1.msra.mxu0 0.0
  %1908 = vmatprep.mubr.f32.mxu0 0.0
  %1909 = vmatmul.mubr.f32.gmra.mrb[0].mxu0 %v1771
  %v1910 = vpop.f32.mrb[0].mxu0
  %v1911 = vadd.f32 %v1768, %v1910
  %v1912 = vpop.f32.mrb[0].mxu0
  %v1913 = vadd.f32 %v1768, %v1912
  %1914 = vdwg.mxu0
  %v1915 = vxor.u32 %v1840, 2147483648
  %v1916 = vxor.u32 %v1842, 2147483648
  %v1917 = vxor.u32 %v1911, 2147483648
  %v1918 = vxor.u32 %v1913, 2147483648
  %v1919 = vmul.f32 %v1915, 1.442695
  %v1920 = vpow.pop %v1919
  %v1921 = vmul.f32 %v1916, 1.442695
  %v1922 = vpow.pop %v1921
  %v1923 = vmul.f32 %v1917, 1.442695
  %v1924 = vpow.pop %v1923
  %v1925 = vmul.f32 %v1918, 1.442695
  %v1926 = vpow.pop %v1925
  %v1927 = vadd.f32 %v1920, 1.0
  %v1928 = vadd.f32 %v1922, 1.0
  %v1929 = vadd.f32 %v1924, 1.0
  %v1930 = vadd.f32 %v1926, 1.0
  %v1931 = vrcp.pop %v1927
  %v1932 = vmul.f32 1.0, %v1931
  %v1933 = vrcp.pop %v1928
  %v1934 = vmul.f32 1.0, %v1933
  %v1935 = vrcp.pop %v1929
  %v1936 = vmul.f32 1.0, %v1935
  %v1937 = vrcp.pop %v1930
  %v1938 = vmul.f32 1.0, %v1937
  %v1939 = vmul.f32 %v1840, %v1932
  %v1940 = vmul.f32 %v1842, %v1934
  %v1941 = vmul.f32 %v1911, %v1936
  %v1942 = vmul.f32 %v1913, %v1938
  %1943 = vrot.lane.b32.xlu0 %v1750, 1
  %v1944 = vpop.permute.xlu0 %1943
  %1945 = vrot.lane.b32.xlu0 %v1939, 1
  %v1946 = vpop.permute.xlu0 %1945
  %1947 = vrot.lane.b32.xlu0 %v1751, 1
  %v1948 = vpop.permute.xlu0 %1947
  %1949 = vrot.lane.b32.xlu0 %v1940, 1
  %v1950 = vpop.permute.xlu0 %1949
  %1951 = vrot.lane.b32.xlu0 %v1752, 1
  %v1952 = vpop.permute.xlu0 %1951
  %1953 = vrot.lane.b32.xlu0 %v1941, 1
  %v1954 = vpop.permute.xlu0 %1953
  %1955 = vrot.lane.b32.xlu0 %v1753, 1
  %v1956 = vpop.permute.xlu0 %1955
  %1957 = vrot.lane.b32.xlu0 %v1942, 1
  %v1958 = vpop.permute.xlu0 %1957
  %v1959 = vsel %vm278, %v1952, %v1956
  %v1960 = vsel %vm278, %v1954, %v1958
  %v1961 = vsel %vm278, %v1948, %v1952
  %v1962 = vsel %vm278, %v1950, %v1954
  %v1963 = vsel %vm278, %v1944, %v1948
  %v1964 = vsel %vm278, %v1946, %v1950
  %v1965 = vsel %vm278, %v1956, %v1944
  %v1966 = vsel %vm278, %v1958, %v1946
  %v1967 = vmul.f32 %v1965, %v312
  %v1968 = vmul.f32 %v1963, %v316
  %v1969 = vmul.f32 %v1961, %v320
  %v1970 = vmul.f32 %v1959, %v324
  %v1971 = vmul.f32 %v1966, %v312
  %v1972 = vmul.f32 %v1964, %v316
  %v1973 = vmul.f32 %v1962, %v320
  %v1974 = vmul.f32 %v1960, %v324
  %1975 = vrot.lane.b32.xlu0 %v1750, 127
  %v1976 = vpop.permute.xlu0 %1975
  %1977 = vrot.lane.b32.xlu0 %v1939, 127
  %v1978 = vpop.permute.xlu0 %1977
  %1979 = vrot.lane.b32.xlu0 %v1751, 127
  %v1980 = vpop.permute.xlu0 %1979
  %1981 = vrot.lane.b32.xlu0 %v1940, 127
  %v1982 = vpop.permute.xlu0 %1981
  %1983 = vrot.lane.b32.xlu0 %v1752, 127
  %v1984 = vpop.permute.xlu0 %1983
  %1985 = vrot.lane.b32.xlu0 %v1941, 127
  %v1986 = vpop.permute.xlu0 %1985
  %1987 = vrot.lane.b32.xlu0 %v1753, 127
  %v1988 = vpop.permute.xlu0 %1987
  %1989 = vrot.lane.b32.xlu0 %v1942, 127
  %v1990 = vpop.permute.xlu0 %1989
  %v1991 = vsel %vm349, %v1984, %v1988
  %v1992 = vsel %vm349, %v1986, %v1990
  %v1993 = vsel %vm349, %v1980, %v1984
  %v1994 = vsel %vm349, %v1982, %v1986
  %v1995 = vsel %vm349, %v1976, %v1980
  %v1996 = vsel %vm349, %v1978, %v1982
  %v1997 = vsel %vm349, %v1988, %v1976
  %v1998 = vsel %vm349, %v1990, %v1978
  %v1999 = vmul.f32 %v1995, %v381
  %v2000 = vmul.f32 %v1993, %v385
  %v2001 = vmul.f32 %v1991, %v389
  %v2002 = vmul.f32 %v1997, %v393
  %v2003 = vmul.f32 %v1996, %v381
  %v2004 = vmul.f32 %v1994, %v385
  %v2005 = vmul.f32 %v1992, %v389
  %v2006 = vmul.f32 %v1998, %v393
  %2008 = vset.pattern.permute.xlu0 0
  %2009 = vperm.xlu0 %2008, %v1761
  %v2010 = vpop.permute.xlu0 %2009
  %2013 = vset.pattern.permute.xlu0 0
  %2014 = vperm.xlu0 %2013, %v1762
  %v2015 = vpop.permute.xlu0 %2014
  %v2017 = vmul.f32 %v1967, %v2010
  %v2018 = vmul.f32 %v1968, %v2010
  %v2019 = vmul.f32 %v1969, %v2010
  %v2020 = vmul.f32 %v1970, %v2010
  %v2021 = vmul.f32 %v1971, %v2015
  %v2022 = vmul.f32 %v1972, %v2015
  %v2023 = vmul.f32 %v1973, %v2015
  %v2024 = vmul.f32 %v1974, %v2015
  %2025 = vset.pattern.permute.xlu0 1
  %2026 = vperm.xlu0 %2025, %v1761
  %v2027 = vpop.permute.xlu0 %2026
  %2029 = vset.pattern.permute.xlu0 1
  %2030 = vperm.xlu0 %2029, %v1762
  %v2031 = vpop.permute.xlu0 %2030
  %v2033 = vmul.f32 %v1750, %v2027
  %v2034 = vmul.f32 %v1751, %v2027
  %v2035 = vmul.f32 %v1752, %v2027
  %v2036 = vmul.f32 %v1753, %v2027
  %v2037 = vmul.f32 %v1939, %v2031
  %v2038 = vmul.f32 %v1940, %v2031
  %v2039 = vmul.f32 %v1941, %v2031
  %v2040 = vmul.f32 %v1942, %v2031
  %v2041 = vadd.f32 %v2017, %v2033
  %v2042 = vadd.f32 %v2018, %v2034
  %v2043 = vadd.f32 %v2019, %v2035
  %v2044 = vadd.f32 %v2020, %v2036
  %v2045 = vadd.f32 %v2021, %v2037
  %v2046 = vadd.f32 %v2022, %v2038
  %v2047 = vadd.f32 %v2023, %v2039
  %v2048 = vadd.f32 %v2024, %v2040
  %2049 = vset.pattern.permute.xlu0 2
  %2050 = vperm.xlu0 %2049, %v1761
  %v2051 = vpop.permute.xlu0 %2050
  %2053 = vset.pattern.permute.xlu0 2
  %2054 = vperm.xlu0 %2053, %v1762
  %v2055 = vpop.permute.xlu0 %2054
  %v2057 = vmul.f32 %v1999, %v2051
  %v2058 = vmul.f32 %v2000, %v2051
  %v2059 = vmul.f32 %v2001, %v2051
  %v2060 = vmul.f32 %v2002, %v2051
  %v2061 = vmul.f32 %v2003, %v2055
  %v2062 = vmul.f32 %v2004, %v2055
  %v2063 = vmul.f32 %v2005, %v2055
  %v2064 = vmul.f32 %v2006, %v2055
  %v2065 = vadd.f32 %v2041, %v2057
  %v2066 = vadd.f32 %v2042, %v2058
  %v2067 = vadd.f32 %v2043, %v2059
  %v2068 = vadd.f32 %v2044, %v2060
  %v2069 = vadd.f32 %v2045, %v2061
  %v2070 = vadd.f32 %v2046, %v2062
  %v2071 = vadd.f32 %v2047, %v2063
  %v2072 = vadd.f32 %v2048, %v2064
  %2073 = vrot.lane.b32.xlu0 %v2065, 16
  %v2074 = vpop.permute.xlu0 %2073
  %2075 = vrot.lane.b32.xlu0 %v2069, 16
  %v2076 = vpop.permute.xlu0 %2075
  %2077 = vrot.lane.b32.xlu0 %v2066, 16
  %v2078 = vpop.permute.xlu0 %2077
  %2079 = vrot.lane.b32.xlu0 %v2070, 16
  %v2080 = vpop.permute.xlu0 %2079
  %2081 = vrot.lane.b32.xlu0 %v2067, 16
  %v2082 = vpop.permute.xlu0 %2081
  %2083 = vrot.lane.b32.xlu0 %v2071, 16
  %v2084 = vpop.permute.xlu0 %2083
  %2085 = vrot.lane.b32.xlu0 %v2068, 16
  %v2086 = vpop.permute.xlu0 %2085
  %2087 = vrot.lane.b32.xlu0 %v2072, 16
  %v2088 = vpop.permute.xlu0 %2087
  %v2089 = vsel %vm484, %v2082, %v2086
  %v2090 = vsel %vm484, %v2084, %v2088
  %v2091 = vsel %vm484, %v2078, %v2082
  %v2092 = vsel %vm484, %v2080, %v2084
  %v2093 = vsel %vm484, %v2074, %v2078
  %v2094 = vsel %vm484, %v2076, %v2080
  %v2095 = vsel %vm484, %v2086, %v2074
  %v2096 = vsel %vm484, %v2088, %v2076
  %v2097 = vmul.f32 %v2095, %v516
  %v2098 = vmul.f32 %v2093, %v520
  %v2099 = vmul.f32 %v2091, %v524
  %v2100 = vmul.f32 %v2089, %v528
  %v2101 = vmul.f32 %v2096, %v516
  %v2102 = vmul.f32 %v2094, %v520
  %v2103 = vmul.f32 %v2092, %v524
  %v2104 = vmul.f32 %v2090, %v528
  %2105 = vset.pattern.permute.xlu0 3
  %2106 = vperm.xlu0 %2105, %v1761
  %v2107 = vpop.permute.xlu0 %2106
  %2109 = vset.pattern.permute.xlu0 3
  %2110 = vperm.xlu0 %2109, %v1762
  %v2111 = vpop.permute.xlu0 %2110
  %v2113 = vmul.f32 %v1967, %v2107
  %v2114 = vmul.f32 %v1968, %v2107
  %v2115 = vmul.f32 %v1969, %v2107
  %v2116 = vmul.f32 %v1970, %v2107
  %v2117 = vmul.f32 %v1971, %v2111
  %v2118 = vmul.f32 %v1972, %v2111
  %v2119 = vmul.f32 %v1973, %v2111
  %v2120 = vmul.f32 %v1974, %v2111
  %2121 = vset.pattern.permute.xlu0 4
  %2122 = vperm.xlu0 %2121, %v1761
  %v2123 = vpop.permute.xlu0 %2122
  %2125 = vset.pattern.permute.xlu0 4
  %2126 = vperm.xlu0 %2125, %v1762
  %v2127 = vpop.permute.xlu0 %2126
  %v2129 = vmul.f32 %v1750, %v2123
  %v2130 = vmul.f32 %v1751, %v2123
  %v2131 = vmul.f32 %v1752, %v2123
  %v2132 = vmul.f32 %v1753, %v2123
  %v2133 = vmul.f32 %v1939, %v2127
  %v2134 = vmul.f32 %v1940, %v2127
  %v2135 = vmul.f32 %v1941, %v2127
  %v2136 = vmul.f32 %v1942, %v2127
  %v2137 = vadd.f32 %v2113, %v2129
  %v2138 = vadd.f32 %v2114, %v2130
  %v2139 = vadd.f32 %v2115, %v2131
  %v2140 = vadd.f32 %v2116, %v2132
  %v2141 = vadd.f32 %v2117, %v2133
  %v2142 = vadd.f32 %v2118, %v2134
  %v2143 = vadd.f32 %v2119, %v2135
  %v2144 = vadd.f32 %v2120, %v2136
  %2145 = vset.pattern.permute.xlu0 5
  %2146 = vperm.xlu0 %2145, %v1761
  %v2147 = vpop.permute.xlu0 %2146
  %2149 = vset.pattern.permute.xlu0 5
  %2150 = vperm.xlu0 %2149, %v1762
  %v2151 = vpop.permute.xlu0 %2150
  %v2153 = vmul.f32 %v1999, %v2147
  %v2154 = vmul.f32 %v2000, %v2147
  %v2155 = vmul.f32 %v2001, %v2147
  %v2156 = vmul.f32 %v2002, %v2147
  %v2157 = vmul.f32 %v2003, %v2151
  %v2158 = vmul.f32 %v2004, %v2151
  %v2159 = vmul.f32 %v2005, %v2151
  %v2160 = vmul.f32 %v2006, %v2151
  %v2161 = vadd.f32 %v2137, %v2153
  %v2162 = vadd.f32 %v2138, %v2154
  %v2163 = vadd.f32 %v2139, %v2155
  %v2164 = vadd.f32 %v2140, %v2156
  %v2165 = vadd.f32 %v2141, %v2157
  %v2166 = vadd.f32 %v2142, %v2158
  %v2167 = vadd.f32 %v2143, %v2159
  %v2168 = vadd.f32 %v2144, %v2160
  %v2169 = vadd.f32 %v2097, %v2161
  %v2170 = vadd.f32 %v2098, %v2162
  %v2171 = vadd.f32 %v2099, %v2163
  %v2172 = vadd.f32 %v2100, %v2164
  %v2173 = vadd.f32 %v2101, %v2165
  %v2174 = vadd.f32 %v2102, %v2166
  %v2175 = vadd.f32 %v2103, %v2167
  %v2176 = vadd.f32 %v2104, %v2168
  %2177 = vset.pattern.permute.xlu0 6
  %2178 = vperm.xlu0 %2177, %v1761
  %v2179 = vpop.permute.xlu0 %2178
  %2181 = vset.pattern.permute.xlu0 6
  %2182 = vperm.xlu0 %2181, %v1762
  %v2183 = vpop.permute.xlu0 %2182
  %v2185 = vmul.f32 %v1967, %v2179
  %v2186 = vmul.f32 %v1968, %v2179
  %v2187 = vmul.f32 %v1969, %v2179
  %v2188 = vmul.f32 %v1970, %v2179
  %v2189 = vmul.f32 %v1971, %v2183
  %v2190 = vmul.f32 %v1972, %v2183
  %v2191 = vmul.f32 %v1973, %v2183
  %v2192 = vmul.f32 %v1974, %v2183
  %2193 = vset.pattern.permute.xlu0 7
  %2194 = vperm.xlu0 %2193, %v1761
  %v2195 = vpop.permute.xlu0 %2194
  %2197 = vset.pattern.permute.xlu0 7
  %2198 = vperm.xlu0 %2197, %v1762
  %v2199 = vpop.permute.xlu0 %2198
  %v2201 = vmul.f32 %v1750, %v2195
  %v2202 = vmul.f32 %v1751, %v2195
  %v2203 = vmul.f32 %v1752, %v2195
  %v2204 = vmul.f32 %v1753, %v2195
  %v2205 = vmul.f32 %v1939, %v2199
  %v2206 = vmul.f32 %v1940, %v2199
  %v2207 = vmul.f32 %v1941, %v2199
  %v2208 = vmul.f32 %v1942, %v2199
  %v2209 = vadd.f32 %v2185, %v2201
  %v2210 = vadd.f32 %v2186, %v2202
  %v2211 = vadd.f32 %v2187, %v2203
  %v2212 = vadd.f32 %v2188, %v2204
  %v2213 = vadd.f32 %v2189, %v2205
  %v2214 = vadd.f32 %v2190, %v2206
  %v2215 = vadd.f32 %v2191, %v2207
  %v2216 = vadd.f32 %v2192, %v2208
  %2217 = vset.pattern.permute.xlu0 8
  %2218 = vperm.xlu0 %2217, %v1761
  %v2219 = vpop.permute.xlu0 %2218
  %2221 = vset.pattern.permute.xlu0 8
  %2222 = vperm.xlu0 %2221, %v1762
  %v2223 = vpop.permute.xlu0 %2222
  %v2225 = vmul.f32 %v1999, %v2219
  %v2226 = vmul.f32 %v2000, %v2219
  %v2227 = vmul.f32 %v2001, %v2219
  %v2228 = vmul.f32 %v2002, %v2219
  %v2229 = vmul.f32 %v2003, %v2223
  %v2230 = vmul.f32 %v2004, %v2223
  %v2231 = vmul.f32 %v2005, %v2223
  %v2232 = vmul.f32 %v2006, %v2223
  %v2233 = vadd.f32 %v2209, %v2225
  %v2234 = vadd.f32 %v2210, %v2226
  %v2235 = vadd.f32 %v2211, %v2227
  %v2236 = vadd.f32 %v2212, %v2228
  %v2237 = vadd.f32 %v2213, %v2229
  %v2238 = vadd.f32 %v2214, %v2230
  %v2239 = vadd.f32 %v2215, %v2231
  %v2240 = vadd.f32 %v2216, %v2232
  %2241 = vrot.lane.b32.xlu0 %v2233, 112
  %v2242 = vpop.permute.xlu0 %2241
  %2243 = vrot.lane.b32.xlu0 %v2237, 112
  %v2244 = vpop.permute.xlu0 %2243
  %2245 = vrot.lane.b32.xlu0 %v2234, 112
  %v2246 = vpop.permute.xlu0 %2245
  %2247 = vrot.lane.b32.xlu0 %v2238, 112
  %v2248 = vpop.permute.xlu0 %2247
  %2249 = vrot.lane.b32.xlu0 %v2235, 112
  %v2250 = vpop.permute.xlu0 %2249
  %2251 = vrot.lane.b32.xlu0 %v2239, 112
  %v2252 = vpop.permute.xlu0 %2251
  %2253 = vrot.lane.b32.xlu0 %v2236, 112
  %v2254 = vpop.permute.xlu0 %2253
  %2255 = vrot.lane.b32.xlu0 %v2240, 112
  %v2256 = vpop.permute.xlu0 %2255
  %v2257 = vsel %vm689, %v2250, %v2254
  %v2258 = vsel %vm689, %v2252, %v2256
  %v2259 = vsel %vm689, %v2246, %v2250
  %v2260 = vsel %vm689, %v2248, %v2252
  %v2261 = vsel %vm689, %v2242, %v2246
  %v2262 = vsel %vm689, %v2244, %v2248
  %v2263 = vsel %vm689, %v2254, %v2242
  %v2264 = vsel %vm689, %v2256, %v2244
  %v2265 = vmul.f32 %v2261, %v721
  %v2266 = vmul.f32 %v2259, %v725
  %v2267 = vmul.f32 %v2257, %v729
  %v2268 = vmul.f32 %v2263, %v733
  %v2269 = vmul.f32 %v2262, %v721
  %v2270 = vmul.f32 %v2260, %v725
  %v2271 = vmul.f32 %v2258, %v729
  %v2272 = vmul.f32 %v2264, %v733
  %v2273 = vadd.f32 %v2169, %v2265
  %v2274 = vadd.f32 %v2170, %v2266
  %v2275 = vadd.f32 %v2171, %v2267
  %v2276 = vadd.f32 %v2172, %v2268
  %v2277 = vadd.f32 %v2173, %v2269
  %v2278 = vadd.f32 %v2174, %v2270
  %v2279 = vadd.f32 %v2175, %v2271
  %v2280 = vadd.f32 %v2176, %v2272
  %2281 = vset.pattern.permute.xlu0 2
  %2282 = vperm.xlu0 %2281, %v75
  %v2283 = vpop.permute.xlu0 %2282
  %2285 = vset.pattern.permute.xlu0 2
  %2286 = vperm.xlu0 %2285, %v76
  %v2287 = vpop.permute.xlu0 %2286
  %v2289 = vadd.f32 %v2273, %v2283
  %v2290 = vadd.f32 %v2274, %v2283
  %v2291 = vadd.f32 %v2275, %v2283
  %v2292 = vadd.f32 %v2276, %v2283
  %v2293 = vadd.f32 %v2277, %v2287
  %v2294 = vadd.f32 %v2278, %v2287
  %v2295 = vadd.f32 %v2279, %v2287
  %v2296 = vadd.f32 %v2280, %v2287
  %2297 = vset.pattern.permute.xlu0 2
  %2298 = vperm.xlu0 %2297, %v79
  %v2299 = vpop.permute.xlu0 %2298
  %2301 = vset.pattern.permute.xlu0 2
  %2302 = vperm.xlu0 %2301, %v80
  %v2303 = vpop.permute.xlu0 %2302
  %v2306 = vsel %vm778, %v1764, 0
  %v2309 = vsel %vm778, %v1765, 0
  %2311 = vmatprep.subr.mxu0 %v2290
  %2312 = vmatpush1.msra.mxu0 %v2289
  %2313 = vmatprep.subr.mxu0 %v2294
  %2314 = vmatpush1.msra.mxu0 %v2293
  %2315 = vmatprep.subr.mxu0 0.0
  %2316 = vmatpush1.msra.mxu0 0.0
  %2317 = vmatprep.subr.mxu0 0.0
  %2318 = vmatpush1.msra.mxu0 0.0
  %2319 = vmatprep.subr.mxu0 0.0
  %2320 = vmatpush1.msra.mxu0 0.0
  %2321 = vmatprep.subr.mxu0 0.0
  %2322 = vmatpush1.msra.mxu0 0.0
  %2323 = vmatprep.subr.mxu0 0.0
  %2324 = vmatpush1.msra.mxu0 0.0
  %2325 = vmatprep.subr.mxu0 0.0
  %2326 = vmatpush1.msra.mxu0 0.0
  %2327 = vmatprep.subr.mxu0 0.0
  %2328 = vmatpush1.msra.mxu0 0.0
  %2329 = vmatprep.subr.mxu0 0.0
  %2330 = vmatpush1.msra.mxu0 0.0
  %2331 = vmatprep.subr.mxu0 0.0
  %2332 = vmatpush1.msra.mxu0 0.0
  %2333 = vmatprep.subr.mxu0 0.0
  %2334 = vmatpush1.msra.mxu0 0.0
  %2335 = vmatprep.subr.mxu0 0.0
  %2336 = vmatpush1.msra.mxu0 0.0
  %2337 = vmatprep.subr.mxu0 0.0
  %2338 = vmatpush1.msra.mxu0 0.0
  %2339 = vmatprep.subr.mxu0 0.0
  %2340 = vmatpush1.msra.mxu0 0.0
  %2341 = vmatprep.subr.mxu0 0.0
  %2342 = vmatpush1.msra.mxu0 0.0
  %2343 = vmatprep.subr.mxu0 0.0
  %2344 = vmatpush1.msra.mxu0 0.0
  %2345 = vmatprep.subr.mxu0 0.0
  %2346 = vmatpush1.msra.mxu0 0.0
  %2347 = vmatprep.subr.mxu0 0.0
  %2348 = vmatpush1.msra.mxu0 0.0
  %2349 = vmatprep.subr.mxu0 0.0
  %2350 = vmatpush1.msra.mxu0 0.0
  %2351 = vmatprep.subr.mxu0 0.0
  %2352 = vmatpush1.msra.mxu0 0.0
  %2353 = vmatprep.subr.mxu0 0.0
  %2354 = vmatpush1.msra.mxu0 0.0
  %2355 = vmatprep.subr.mxu0 0.0
  %2356 = vmatpush1.msra.mxu0 0.0
  %2357 = vmatprep.subr.mxu0 0.0
  %2358 = vmatpush1.msra.mxu0 0.0
  %2359 = vmatprep.subr.mxu0 0.0
  %2360 = vmatpush1.msra.mxu0 0.0
  %2361 = vmatprep.subr.mxu0 0.0
  %2362 = vmatpush1.msra.mxu0 0.0
  %2363 = vmatprep.subr.mxu0 0.0
  %2364 = vmatpush1.msra.mxu0 0.0
  %2365 = vmatprep.subr.mxu0 0.0
  %2366 = vmatpush1.msra.mxu0 0.0
  %2367 = vmatprep.subr.mxu0 0.0
  %2368 = vmatpush1.msra.mxu0 0.0
  %2369 = vmatprep.subr.mxu0 0.0
  %2370 = vmatpush1.msra.mxu0 0.0
  %2371 = vmatprep.subr.mxu0 0.0
  %2372 = vmatpush1.msra.mxu0 0.0
  %2373 = vmatprep.subr.mxu0 0.0
  %2374 = vmatpush1.msra.mxu0 0.0
  %2375 = vmatprep.mubr.f32.mxu0 0.0
  %2376 = vmatmul.mubr.f32.gmra.mrb[0].mxu0 %v2306
  %v2377 = vpop.f32.mrb[0].mxu0
  %v2378 = vadd.f32 %v2299, %v2377
  %v2379 = vpop.f32.mrb[0].mxu0
  %v2380 = vadd.f32 %v2299, %v2379
  %2381 = vmatprep.mubr.f32.mxu0 0.0
  %2382 = vmatmul.mubr.f32.gmra.mrb[0].mxu0 %v2309
  %v2383 = vpop.f32.mrb[0].mxu0
  %v2384 = vadd.f32 %v2303, %v2383
  %v2385 = vpop.f32.mrb[0].mxu0
  %v2386 = vadd.f32 %v2303, %v2385
  %2387 = vdwg.mxu0
  %2388 = vmatprep.subr.mxu0 %v2292
  %2389 = vmatpush1.msra.mxu0 %v2291
  %2390 = vmatprep.subr.mxu0 %v2296
  %2391 = vmatpush1.msra.mxu0 %v2295
  %2392 = vmatprep.subr.mxu0 0.0
  %2393 = vmatpush1.msra.mxu0 0.0
  %2394 = vmatprep.subr.mxu0 0.0
  %2395 = vmatpush1.msra.mxu0 0.0
  %2396 = vmatprep.subr.mxu0 0.0
  %2397 = vmatpush1.msra.mxu0 0.0
  %2398 = vmatprep.subr.mxu0 0.0
  %2399 = vmatpush1.msra.mxu0 0.0
  %2400 = vmatprep.subr.mxu0 0.0
  %2401 = vmatpush1.msra.mxu0 0.0
  %2402 = vmatprep.subr.mxu0 0.0
  %2403 = vmatpush1.msra.mxu0 0.0
  %2404 = vmatprep.subr.mxu0 0.0
  %2405 = vmatpush1.msra.mxu0 0.0
  %2406 = vmatprep.subr.mxu0 0.0
  %2407 = vmatpush1.msra.mxu0 0.0
  %2408 = vmatprep.subr.mxu0 0.0
  %2409 = vmatpush1.msra.mxu0 0.0
  %2410 = vmatprep.subr.mxu0 0.0
  %2411 = vmatpush1.msra.mxu0 0.0
  %2412 = vmatprep.subr.mxu0 0.0
  %2413 = vmatpush1.msra.mxu0 0.0
  %2414 = vmatprep.subr.mxu0 0.0
  %2415 = vmatpush1.msra.mxu0 0.0
  %2416 = vmatprep.subr.mxu0 0.0
  %2417 = vmatpush1.msra.mxu0 0.0
  %2418 = vmatprep.subr.mxu0 0.0
  %2419 = vmatpush1.msra.mxu0 0.0
  %2420 = vmatprep.subr.mxu0 0.0
  %2421 = vmatpush1.msra.mxu0 0.0
  %2422 = vmatprep.subr.mxu0 0.0
  %2423 = vmatpush1.msra.mxu0 0.0
  %2424 = vmatprep.subr.mxu0 0.0
  %2425 = vmatpush1.msra.mxu0 0.0
  %2426 = vmatprep.subr.mxu0 0.0
  %2427 = vmatpush1.msra.mxu0 0.0
  %2428 = vmatprep.subr.mxu0 0.0
  %2429 = vmatpush1.msra.mxu0 0.0
  %2430 = vmatprep.subr.mxu0 0.0
  %2431 = vmatpush1.msra.mxu0 0.0
  %2432 = vmatprep.subr.mxu0 0.0
  %2433 = vmatpush1.msra.mxu0 0.0
  %2434 = vmatprep.subr.mxu0 0.0
  %2435 = vmatpush1.msra.mxu0 0.0
  %2436 = vmatprep.subr.mxu0 0.0
  %2437 = vmatpush1.msra.mxu0 0.0
  %2438 = vmatprep.subr.mxu0 0.0
  %2439 = vmatpush1.msra.mxu0 0.0
  %2440 = vmatprep.subr.mxu0 0.0
  %2441 = vmatpush1.msra.mxu0 0.0
  %2442 = vmatprep.subr.mxu0 0.0
  %2443 = vmatpush1.msra.mxu0 0.0
  %2444 = vmatprep.subr.mxu0 0.0
  %2445 = vmatpush1.msra.mxu0 0.0
  %2446 = vmatprep.subr.mxu0 0.0
  %2447 = vmatpush1.msra.mxu0 0.0
  %2448 = vmatprep.subr.mxu0 0.0
  %2449 = vmatpush1.msra.mxu0 0.0
  %2450 = vmatprep.subr.mxu0 0.0
  %2451 = vmatpush1.msra.mxu0 0.0
  %2452 = vmatprep.mubr.f32.mxu0 0.0
  %2453 = vmatmul.mubr.f32.gmra.mrb[0].mxu0 %v2306
  %v2454 = vpop.f32.mrb[0].mxu0
  %v2455 = vadd.f32 %v2299, %v2454
  %v2456 = vpop.f32.mrb[0].mxu0
  %v2457 = vadd.f32 %v2299, %v2456
  %2458 = vmatprep.mubr.f32.mxu0 0.0
  %2459 = vmatmul.mubr.f32.gmra.mrb[0].mxu0 %v2309
  %v2460 = vpop.f32.mrb[0].mxu0
  %v2461 = vadd.f32 %v2303, %v2460
  %v2462 = vpop.f32.mrb[0].mxu0
  %v2463 = vadd.f32 %v2303, %v2462
  %2464 = vdwg.mxu0
  %v2465 = vxor.u32 %v2378, 2147483648
  %v2466 = vxor.u32 %v2380, 2147483648
  %v2467 = vxor.u32 %v2455, 2147483648
  %v2468 = vxor.u32 %v2457, 2147483648
  %v2469 = vxor.u32 %v2384, 2147483648
  %v2470 = vxor.u32 %v2386, 2147483648
  %v2471 = vxor.u32 %v2461, 2147483648
  %v2472 = vxor.u32 %v2463, 2147483648
  %v2473 = vmul.f32 %v2465, 1.442695
  %v2474 = vpow.pop %v2473
  %v2475 = vmul.f32 %v2466, 1.442695
  %v2476 = vpow.pop %v2475
  %v2477 = vmul.f32 %v2467, 1.442695
  %v2478 = vpow.pop %v2477
  %v2479 = vmul.f32 %v2468, 1.442695
  %v2480 = vpow.pop %v2479
  %v2481 = vmul.f32 %v2469, 1.442695
  %v2482 = vpow.pop %v2481
  %v2483 = vmul.f32 %v2470, 1.442695
  %v2484 = vpow.pop %v2483
  %v2485 = vmul.f32 %v2471, 1.442695
  %v2486 = vpow.pop %v2485
  %v2487 = vmul.f32 %v2472, 1.442695
  %v2488 = vpow.pop %v2487
  %v2489 = vadd.f32 %v2474, 1.0
  %v2490 = vadd.f32 %v2476, 1.0
  %v2491 = vadd.f32 %v2478, 1.0
  %v2492 = vadd.f32 %v2480, 1.0
  %v2493 = vadd.f32 %v2482, 1.0
  %v2494 = vadd.f32 %v2484, 1.0
  %v2495 = vadd.f32 %v2486, 1.0
  %v2496 = vadd.f32 %v2488, 1.0
  %v2497 = vrcp.pop %v2489
  %v2498 = vmul.f32 1.0, %v2497
  %v2499 = vrcp.pop %v2490
  %v2500 = vmul.f32 1.0, %v2499
  %v2501 = vrcp.pop %v2491
  %v2502 = vmul.f32 1.0, %v2501
  %v2503 = vrcp.pop %v2492
  %v2504 = vmul.f32 1.0, %v2503
  %v2505 = vrcp.pop %v2493
  %v2506 = vmul.f32 1.0, %v2505
  %v2507 = vrcp.pop %v2494
  %v2508 = vmul.f32 1.0, %v2507
  %v2509 = vrcp.pop %v2495
  %v2510 = vmul.f32 1.0, %v2509
  %v2511 = vrcp.pop %v2496
  %v2512 = vmul.f32 1.0, %v2511
  %v2513 = vmul.f32 %v2378, %v2498
  %v2514 = vmul.f32 %v2380, %v2500
  %v2515 = vmul.f32 %v2455, %v2502
  %v2516 = vmul.f32 %v2457, %v2504
  %v2517 = vmul.f32 %v2384, %v2506
  %v2518 = vmul.f32 %v2386, %v2508
  %v2519 = vmul.f32 %v2461, %v2510
  %v2520 = vmul.f32 %v2463, %v2512
  %s2521 = scalar_lea.vmem %s4, 24
  %v2522 = vld [vmem:[%s2521] sm:$0xff]
  %s2523 = scalar_lea.vmem %s6, 48
  %v2524 = vld [vmem:[%s2523] sm:$0xff]
  %v2525 = vld [vmem:[%s2523 + $0x8] sm:$0xff]
  %v2526 = vld [vmem:[%s10] sm:$0xff]
  %v2527 = vld [vmem:[%s10 + $0x8] sm:$0xff]
  %v2528 = vld [vmem:[%s11] sm:$0xff]
  %v2529 = vld [vmem:[%s11 + $0x8] sm:$0xff]
  %2530 = vset.pattern.permute.xlu0 3
  %2531 = vperm.xlu0 %2530, %v72
  %v2532 = vpop.permute.xlu0 %2531
  %v2535 = vsel %vm86, %v2522, 0
  %2537 = vmatprep.subr.mxu0 %v2518
  %2538 = vmatpush1.msra.mxu0 %v2517
  %2539 = vmatprep.subr.mxu0 0.0
  %2540 = vmatpush1.msra.mxu0 0.0
  %2541 = vmatprep.subr.mxu0 0.0
  %2542 = vmatpush1.msra.mxu0 0.0
  %2543 = vmatprep.subr.mxu0 0.0
  %2544 = vmatpush1.msra.mxu0 0.0
  %2545 = vmatprep.subr.mxu0 0.0
  %2546 = vmatpush1.msra.mxu0 0.0
  %2547 = vmatprep.subr.mxu0 0.0
  %2548 = vmatpush1.msra.mxu0 0.0
  %2549 = vmatprep.subr.mxu0 0.0
  %2550 = vmatpush1.msra.mxu0 0.0
  %2551 = vmatprep.subr.mxu0 0.0
  %2552 = vmatpush1.msra.mxu0 0.0
  %2553 = vmatprep.subr.mxu0 0.0
  %2554 = vmatpush1.msra.mxu0 0.0
  %2555 = vmatprep.subr.mxu0 0.0
  %2556 = vmatpush1.msra.mxu0 0.0
  %2557 = vmatprep.subr.mxu0 0.0
  %2558 = vmatpush1.msra.mxu0 0.0
  %2559 = vmatprep.subr.mxu0 0.0
  %2560 = vmatpush1.msra.mxu0 0.0
  %2561 = vmatprep.subr.mxu0 0.0
  %2562 = vmatpush1.msra.mxu0 0.0
  %2563 = vmatprep.subr.mxu0 0.0
  %2564 = vmatpush1.msra.mxu0 0.0
  %2565 = vmatprep.subr.mxu0 0.0
  %2566 = vmatpush1.msra.mxu0 0.0
  %2567 = vmatprep.subr.mxu0 0.0
  %2568 = vmatpush1.msra.mxu0 0.0
  %2569 = vmatprep.subr.mxu0 0.0
  %2570 = vmatpush1.msra.mxu0 0.0
  %2571 = vmatprep.subr.mxu0 0.0
  %2572 = vmatpush1.msra.mxu0 0.0
  %2573 = vmatprep.subr.mxu0 0.0
  %2574 = vmatpush1.msra.mxu0 0.0
  %2575 = vmatprep.subr.mxu0 0.0
  %2576 = vmatpush1.msra.mxu0 0.0
  %2577 = vmatprep.subr.mxu0 0.0
  %2578 = vmatpush1.msra.mxu0 0.0
  %2579 = vmatprep.subr.mxu0 0.0
  %2580 = vmatpush1.msra.mxu0 0.0
  %2581 = vmatprep.subr.mxu0 0.0
  %2582 = vmatpush1.msra.mxu0 0.0
  %2583 = vmatprep.subr.mxu0 0.0
  %2584 = vmatpush1.msra.mxu0 0.0
  %2585 = vmatprep.subr.mxu0 0.0
  %2586 = vmatpush1.msra.mxu0 0.0
  %2587 = vmatprep.subr.mxu0 0.0
  %2588 = vmatpush1.msra.mxu0 0.0
  %2589 = vmatprep.subr.mxu0 0.0
  %2590 = vmatpush1.msra.mxu0 0.0
  %2591 = vmatprep.subr.mxu0 0.0
  %2592 = vmatpush1.msra.mxu0 0.0
  %2593 = vmatprep.subr.mxu0 0.0
  %2594 = vmatpush1.msra.mxu0 0.0
  %2595 = vmatprep.subr.mxu0 0.0
  %2596 = vmatpush1.msra.mxu0 0.0
  %2597 = vmatprep.subr.mxu0 0.0
  %2598 = vmatpush1.msra.mxu0 0.0
  %2599 = vmatprep.subr.mxu0 0.0
  %2600 = vmatpush1.msra.mxu0 0.0
  %2601 = vmatprep.mubr.f32.mxu0 0.0
  %2602 = vmatmul.mubr.f32.gmra.mrb[0].mxu0 %v2535
  %v2603 = vpop.f32.mrb[0].mxu0
  %v2604 = vadd.f32 %v2532, %v2603
  %v2605 = vpop.f32.mrb[0].mxu0
  %v2606 = vadd.f32 %v2532, %v2605
  %2607 = vdwg.mxu0
  %2608 = vmatprep.subr.mxu0 %v2520
  %2609 = vmatpush1.msra.mxu0 %v2519
  %2610 = vmatprep.subr.mxu0 0.0
  %2611 = vmatpush1.msra.mxu0 0.0
  %2612 = vmatprep.subr.mxu0 0.0
  %2613 = vmatpush1.msra.mxu0 0.0
  %2614 = vmatprep.subr.mxu0 0.0
  %2615 = vmatpush1.msra.mxu0 0.0
  %2616 = vmatprep.subr.mxu0 0.0
  %2617 = vmatpush1.msra.mxu0 0.0
  %2618 = vmatprep.subr.mxu0 0.0
  %2619 = vmatpush1.msra.mxu0 0.0
  %2620 = vmatprep.subr.mxu0 0.0
  %2621 = vmatpush1.msra.mxu0 0.0
  %2622 = vmatprep.subr.mxu0 0.0
  %2623 = vmatpush1.msra.mxu0 0.0
  %2624 = vmatprep.subr.mxu0 0.0
  %2625 = vmatpush1.msra.mxu0 0.0
  %2626 = vmatprep.subr.mxu0 0.0
  %2627 = vmatpush1.msra.mxu0 0.0
  %2628 = vmatprep.subr.mxu0 0.0
  %2629 = vmatpush1.msra.mxu0 0.0
  %2630 = vmatprep.subr.mxu0 0.0
  %2631 = vmatpush1.msra.mxu0 0.0
  %2632 = vmatprep.subr.mxu0 0.0
  %2633 = vmatpush1.msra.mxu0 0.0
  %2634 = vmatprep.subr.mxu0 0.0
  %2635 = vmatpush1.msra.mxu0 0.0
  %2636 = vmatprep.subr.mxu0 0.0
  %2637 = vmatpush1.msra.mxu0 0.0
  %2638 = vmatprep.subr.mxu0 0.0
  %2639 = vmatpush1.msra.mxu0 0.0
  %2640 = vmatprep.subr.mxu0 0.0
  %2641 = vmatpush1.msra.mxu0 0.0
  %2642 = vmatprep.subr.mxu0 0.0
  %2643 = vmatpush1.msra.mxu0 0.0
  %2644 = vmatprep.subr.mxu0 0.0
  %2645 = vmatpush1.msra.mxu0 0.0
  %2646 = vmatprep.subr.mxu0 0.0
  %2647 = vmatpush1.msra.mxu0 0.0
  %2648 = vmatprep.subr.mxu0 0.0
  %2649 = vmatpush1.msra.mxu0 0.0
  %2650 = vmatprep.subr.mxu0 0.0
  %2651 = vmatpush1.msra.mxu0 0.0
  %2652 = vmatprep.subr.mxu0 0.0
  %2653 = vmatpush1.msra.mxu0 0.0
  %2654 = vmatprep.subr.mxu0 0.0
  %2655 = vmatpush1.msra.mxu0 0.0
  %2656 = vmatprep.subr.mxu0 0.0
  %2657 = vmatpush1.msra.mxu0 0.0
  %2658 = vmatprep.subr.mxu0 0.0
  %2659 = vmatpush1.msra.mxu0 0.0
  %2660 = vmatprep.subr.mxu0 0.0
  %2661 = vmatpush1.msra.mxu0 0.0
  %2662 = vmatprep.subr.mxu0 0.0
  %2663 = vmatpush1.msra.mxu0 0.0
  %2664 = vmatprep.subr.mxu0 0.0
  %2665 = vmatpush1.msra.mxu0 0.0
  %2666 = vmatprep.subr.mxu0 0.0
  %2667 = vmatpush1.msra.mxu0 0.0
  %2668 = vmatprep.subr.mxu0 0.0
  %2669 = vmatpush1.msra.mxu0 0.0
  %2670 = vmatprep.subr.mxu0 0.0
  %2671 = vmatpush1.msra.mxu0 0.0
  %2672 = vmatprep.mubr.f32.mxu0 0.0
  %2673 = vmatmul.mubr.f32.gmra.mrb[0].mxu0 %v2535
  %v2674 = vpop.f32.mrb[0].mxu0
  %v2675 = vadd.f32 %v2532, %v2674
  %v2676 = vpop.f32.mrb[0].mxu0
  %v2677 = vadd.f32 %v2532, %v2676
  %2678 = vdwg.mxu0
  %v2679 = vxor.u32 %v2604, 2147483648
  %v2680 = vxor.u32 %v2606, 2147483648
  %v2681 = vxor.u32 %v2675, 2147483648
  %v2682 = vxor.u32 %v2677, 2147483648
  %v2683 = vmul.f32 %v2679, 1.442695
  %v2684 = vpow.pop %v2683
  %v2685 = vmul.f32 %v2680, 1.442695
  %v2686 = vpow.pop %v2685
  %v2687 = vmul.f32 %v2681, 1.442695
  %v2688 = vpow.pop %v2687
  %v2689 = vmul.f32 %v2682, 1.442695
  %v2690 = vpow.pop %v2689
  %v2691 = vadd.f32 %v2684, 1.0
  %v2692 = vadd.f32 %v2686, 1.0
  %v2693 = vadd.f32 %v2688, 1.0
  %v2694 = vadd.f32 %v2690, 1.0
  %v2695 = vrcp.pop %v2691
  %v2696 = vmul.f32 1.0, %v2695
  %v2697 = vrcp.pop %v2692
  %v2698 = vmul.f32 1.0, %v2697
  %v2699 = vrcp.pop %v2693
  %v2700 = vmul.f32 1.0, %v2699
  %v2701 = vrcp.pop %v2694
  %v2702 = vmul.f32 1.0, %v2701
  %v2703 = vmul.f32 %v2604, %v2696
  %v2704 = vmul.f32 %v2606, %v2698
  %v2705 = vmul.f32 %v2675, %v2700
  %v2706 = vmul.f32 %v2677, %v2702
  %2707 = vrot.lane.b32.xlu0 %v2513, 1
  %v2708 = vpop.permute.xlu0 %2707
  %2709 = vrot.lane.b32.xlu0 %v2703, 1
  %v2710 = vpop.permute.xlu0 %2709
  %2711 = vrot.lane.b32.xlu0 %v2514, 1
  %v2712 = vpop.permute.xlu0 %2711
  %2713 = vrot.lane.b32.xlu0 %v2704, 1
  %v2714 = vpop.permute.xlu0 %2713
  %2715 = vrot.lane.b32.xlu0 %v2515, 1
  %v2716 = vpop.permute.xlu0 %2715
  %2717 = vrot.lane.b32.xlu0 %v2705, 1
  %v2718 = vpop.permute.xlu0 %2717
  %2719 = vrot.lane.b32.xlu0 %v2516, 1
  %v2720 = vpop.permute.xlu0 %2719
  %2721 = vrot.lane.b32.xlu0 %v2706, 1
  %v2722 = vpop.permute.xlu0 %2721
  %v2723 = vsel %vm278, %v2716, %v2720
  %v2724 = vsel %vm278, %v2718, %v2722
  %v2725 = vsel %vm278, %v2712, %v2716
  %v2726 = vsel %vm278, %v2714, %v2718
  %v2727 = vsel %vm278, %v2708, %v2712
  %v2728 = vsel %vm278, %v2710, %v2714
  %v2729 = vsel %vm278, %v2720, %v2708
  %v2730 = vsel %vm278, %v2722, %v2710
  %v2731 = vmul.f32 %v2729, %v312
  %v2732 = vmul.f32 %v2727, %v316
  %v2733 = vmul.f32 %v2725, %v320
  %v2734 = vmul.f32 %v2723, %v324
  %v2735 = vmul.f32 %v2730, %v312
  %v2736 = vmul.f32 %v2728, %v316
  %v2737 = vmul.f32 %v2726, %v320
  %v2738 = vmul.f32 %v2724, %v324
  %2739 = vrot.lane.b32.xlu0 %v2513, 127
  %v2740 = vpop.permute.xlu0 %2739
  %2741 = vrot.lane.b32.xlu0 %v2703, 127
  %v2742 = vpop.permute.xlu0 %2741
  %2743 = vrot.lane.b32.xlu0 %v2514, 127
  %v2744 = vpop.permute.xlu0 %2743
  %2745 = vrot.lane.b32.xlu0 %v2704, 127
  %v2746 = vpop.permute.xlu0 %2745
  %2747 = vrot.lane.b32.xlu0 %v2515, 127
  %v2748 = vpop.permute.xlu0 %2747
  %2749 = vrot.lane.b32.xlu0 %v2705, 127
  %v2750 = vpop.permute.xlu0 %2749
  %2751 = vrot.lane.b32.xlu0 %v2516, 127
  %v2752 = vpop.permute.xlu0 %2751
  %2753 = vrot.lane.b32.xlu0 %v2706, 127
  %v2754 = vpop.permute.xlu0 %2753
  %v2755 = vsel %vm349, %v2748, %v2752
  %v2756 = vsel %vm349, %v2750, %v2754
  %v2757 = vsel %vm349, %v2744, %v2748
  %v2758 = vsel %vm349, %v2746, %v2750
  %v2759 = vsel %vm349, %v2740, %v2744
  %v2760 = vsel %vm349, %v2742, %v2746
  %v2761 = vsel %vm349, %v2752, %v2740
  %v2762 = vsel %vm349, %v2754, %v2742
  %v2763 = vmul.f32 %v2759, %v381
  %v2764 = vmul.f32 %v2757, %v385
  %v2765 = vmul.f32 %v2755, %v389
  %v2766 = vmul.f32 %v2761, %v393
  %v2767 = vmul.f32 %v2760, %v381
  %v2768 = vmul.f32 %v2758, %v385
  %v2769 = vmul.f32 %v2756, %v389
  %v2770 = vmul.f32 %v2762, %v393
  %2772 = vset.pattern.permute.xlu0 0
  %2773 = vperm.xlu0 %2772, %v2524
  %v2774 = vpop.permute.xlu0 %2773
  %2777 = vset.pattern.permute.xlu0 0
  %2778 = vperm.xlu0 %2777, %v2525
  %v2779 = vpop.permute.xlu0 %2778
  %v2781 = vmul.f32 %v2731, %v2774
  %v2782 = vmul.f32 %v2732, %v2774
  %v2783 = vmul.f32 %v2733, %v2774
  %v2784 = vmul.f32 %v2734, %v2774
  %v2785 = vmul.f32 %v2735, %v2779
  %v2786 = vmul.f32 %v2736, %v2779
  %v2787 = vmul.f32 %v2737, %v2779
  %v2788 = vmul.f32 %v2738, %v2779
  %2789 = vset.pattern.permute.xlu0 1
  %2790 = vperm.xlu0 %2789, %v2524
  %v2791 = vpop.permute.xlu0 %2790
  %2793 = vset.pattern.permute.xlu0 1
  %2794 = vperm.xlu0 %2793, %v2525
  %v2795 = vpop.permute.xlu0 %2794
  %v2797 = vmul.f32 %v2513, %v2791
  %v2798 = vmul.f32 %v2514, %v2791
  %v2799 = vmul.f32 %v2515, %v2791
  %v2800 = vmul.f32 %v2516, %v2791
  %v2801 = vmul.f32 %v2703, %v2795
  %v2802 = vmul.f32 %v2704, %v2795
  %v2803 = vmul.f32 %v2705, %v2795
  %v2804 = vmul.f32 %v2706, %v2795
  %v2805 = vadd.f32 %v2781, %v2797
  %v2806 = vadd.f32 %v2782, %v2798
  %v2807 = vadd.f32 %v2783, %v2799
  %v2808 = vadd.f32 %v2784, %v2800
  %v2809 = vadd.f32 %v2785, %v2801
  %v2810 = vadd.f32 %v2786, %v2802
  %v2811 = vadd.f32 %v2787, %v2803
  %v2812 = vadd.f32 %v2788, %v2804
  %2813 = vset.pattern.permute.xlu0 2
  %2814 = vperm.xlu0 %2813, %v2524
  %v2815 = vpop.permute.xlu0 %2814
  %2817 = vset.pattern.permute.xlu0 2
  %2818 = vperm.xlu0 %2817, %v2525
  %v2819 = vpop.permute.xlu0 %2818
  %v2821 = vmul.f32 %v2763, %v2815
  %v2822 = vmul.f32 %v2764, %v2815
  %v2823 = vmul.f32 %v2765, %v2815
  %v2824 = vmul.f32 %v2766, %v2815
  %v2825 = vmul.f32 %v2767, %v2819
  %v2826 = vmul.f32 %v2768, %v2819
  %v2827 = vmul.f32 %v2769, %v2819
  %v2828 = vmul.f32 %v2770, %v2819
  %v2829 = vadd.f32 %v2805, %v2821
  %v2830 = vadd.f32 %v2806, %v2822
  %v2831 = vadd.f32 %v2807, %v2823
  %v2832 = vadd.f32 %v2808, %v2824
  %v2833 = vadd.f32 %v2809, %v2825
  %v2834 = vadd.f32 %v2810, %v2826
  %v2835 = vadd.f32 %v2811, %v2827
  %v2836 = vadd.f32 %v2812, %v2828
  %2837 = vrot.lane.b32.xlu0 %v2829, 16
  %v2838 = vpop.permute.xlu0 %2837
  %2839 = vrot.lane.b32.xlu0 %v2833, 16
  %v2840 = vpop.permute.xlu0 %2839
  %2841 = vrot.lane.b32.xlu0 %v2830, 16
  %v2842 = vpop.permute.xlu0 %2841
  %2843 = vrot.lane.b32.xlu0 %v2834, 16
  %v2844 = vpop.permute.xlu0 %2843
  %2845 = vrot.lane.b32.xlu0 %v2831, 16
  %v2846 = vpop.permute.xlu0 %2845
  %2847 = vrot.lane.b32.xlu0 %v2835, 16
  %v2848 = vpop.permute.xlu0 %2847
  %2849 = vrot.lane.b32.xlu0 %v2832, 16
  %v2850 = vpop.permute.xlu0 %2849
  %2851 = vrot.lane.b32.xlu0 %v2836, 16
  %v2852 = vpop.permute.xlu0 %2851
  %v2853 = vsel %vm484, %v2846, %v2850
  %v2854 = vsel %vm484, %v2848, %v2852
  %v2855 = vsel %vm484, %v2842, %v2846
  %v2856 = vsel %vm484, %v2844, %v2848
  %v2857 = vsel %vm484, %v2838, %v2842
  %v2858 = vsel %vm484, %v2840, %v2844
  %v2859 = vsel %vm484, %v2850, %v2838
  %v2860 = vsel %vm484, %v2852, %v2840
  %v2861 = vmul.f32 %v2859, %v516
  %v2862 = vmul.f32 %v2857, %v520
  %v2863 = vmul.f32 %v2855, %v524
  %v2864 = vmul.f32 %v2853, %v528
  %v2865 = vmul.f32 %v2860, %v516
  %v2866 = vmul.f32 %v2858, %v520
  %v2867 = vmul.f32 %v2856, %v524
  %v2868 = vmul.f32 %v2854, %v528
  %2869 = vset.pattern.permute.xlu0 3
  %2870 = vperm.xlu0 %2869, %v2524
  %v2871 = vpop.permute.xlu0 %2870
  %2873 = vset.pattern.permute.xlu0 3
  %2874 = vperm.xlu0 %2873, %v2525
  %v2875 = vpop.permute.xlu0 %2874
  %v2877 = vmul.f32 %v2731, %v2871
  %v2878 = vmul.f32 %v2732, %v2871
  %v2879 = vmul.f32 %v2733, %v2871
  %v2880 = vmul.f32 %v2734, %v2871
  %v2881 = vmul.f32 %v2735, %v2875
  %v2882 = vmul.f32 %v2736, %v2875
  %v2883 = vmul.f32 %v2737, %v2875
  %v2884 = vmul.f32 %v2738, %v2875
  %2885 = vset.pattern.permute.xlu0 4
  %2886 = vperm.xlu0 %2885, %v2524
  %v2887 = vpop.permute.xlu0 %2886
  %2889 = vset.pattern.permute.xlu0 4
  %2890 = vperm.xlu0 %2889, %v2525
  %v2891 = vpop.permute.xlu0 %2890
  %v2893 = vmul.f32 %v2513, %v2887
  %v2894 = vmul.f32 %v2514, %v2887
  %v2895 = vmul.f32 %v2515, %v2887
  %v2896 = vmul.f32 %v2516, %v2887
  %v2897 = vmul.f32 %v2703, %v2891
  %v2898 = vmul.f32 %v2704, %v2891
  %v2899 = vmul.f32 %v2705, %v2891
  %v2900 = vmul.f32 %v2706, %v2891
  %v2901 = vadd.f32 %v2877, %v2893
  %v2902 = vadd.f32 %v2878, %v2894
  %v2903 = vadd.f32 %v2879, %v2895
  %v2904 = vadd.f32 %v2880, %v2896
  %v2905 = vadd.f32 %v2881, %v2897
  %v2906 = vadd.f32 %v2882, %v2898
  %v2907 = vadd.f32 %v2883, %v2899
  %v2908 = vadd.f32 %v2884, %v2900
  %2909 = vset.pattern.permute.xlu0 5
  %2910 = vperm.xlu0 %2909, %v2524
  %v2911 = vpop.permute.xlu0 %2910
  %2913 = vset.pattern.permute.xlu0 5
  %2914 = vperm.xlu0 %2913, %v2525
  %v2915 = vpop.permute.xlu0 %2914
  %v2917 = vmul.f32 %v2763, %v2911
  %v2918 = vmul.f32 %v2764, %v2911
  %v2919 = vmul.f32 %v2765, %v2911
  %v2920 = vmul.f32 %v2766, %v2911
  %v2921 = vmul.f32 %v2767, %v2915
  %v2922 = vmul.f32 %v2768, %v2915
  %v2923 = vmul.f32 %v2769, %v2915
  %v2924 = vmul.f32 %v2770, %v2915
  %v2925 = vadd.f32 %v2901, %v2917
  %v2926 = vadd.f32 %v2902, %v2918
  %v2927 = vadd.f32 %v2903, %v2919
  %v2928 = vadd.f32 %v2904, %v2920
  %v2929 = vadd.f32 %v2905, %v2921
  %v2930 = vadd.f32 %v2906, %v2922
  %v2931 = vadd.f32 %v2907, %v2923
  %v2932 = vadd.f32 %v2908, %v2924
  %v2933 = vadd.f32 %v2861, %v2925
  %v2934 = vadd.f32 %v2862, %v2926
  %v2935 = vadd.f32 %v2863, %v2927
  %v2936 = vadd.f32 %v2864, %v2928
  %v2937 = vadd.f32 %v2865, %v2929
  %v2938 = vadd.f32 %v2866, %v2930
  %v2939 = vadd.f32 %v2867, %v2931
  %v2940 = vadd.f32 %v2868, %v2932
  %2941 = vset.pattern.permute.xlu0 6
  %2942 = vperm.xlu0 %2941, %v2524
  %v2943 = vpop.permute.xlu0 %2942
  %2945 = vset.pattern.permute.xlu0 6
  %2946 = vperm.xlu0 %2945, %v2525
  %v2947 = vpop.permute.xlu0 %2946
  %v2949 = vmul.f32 %v2731, %v2943
  %v2950 = vmul.f32 %v2732, %v2943
  %v2951 = vmul.f32 %v2733, %v2943
  %v2952 = vmul.f32 %v2734, %v2943
  %v2953 = vmul.f32 %v2735, %v2947
  %v2954 = vmul.f32 %v2736, %v2947
  %v2955 = vmul.f32 %v2737, %v2947
  %v2956 = vmul.f32 %v2738, %v2947
  %2957 = vset.pattern.permute.xlu0 7
  %2958 = vperm.xlu0 %2957, %v2524
  %v2959 = vpop.permute.xlu0 %2958
  %2961 = vset.pattern.permute.xlu0 7
  %2962 = vperm.xlu0 %2961, %v2525
  %v2963 = vpop.permute.xlu0 %2962
  %v2965 = vmul.f32 %v2513, %v2959
  %v2966 = vmul.f32 %v2514, %v2959
  %v2967 = vmul.f32 %v2515, %v2959
  %v2968 = vmul.f32 %v2516, %v2959
  %v2969 = vmul.f32 %v2703, %v2963
  %v2970 = vmul.f32 %v2704, %v2963
  %v2971 = vmul.f32 %v2705, %v2963
  %v2972 = vmul.f32 %v2706, %v2963
  %v2973 = vadd.f32 %v2949, %v2965
  %v2974 = vadd.f32 %v2950, %v2966
  %v2975 = vadd.f32 %v2951, %v2967
  %v2976 = vadd.f32 %v2952, %v2968
  %v2977 = vadd.f32 %v2953, %v2969
  %v2978 = vadd.f32 %v2954, %v2970
  %v2979 = vadd.f32 %v2955, %v2971
  %v2980 = vadd.f32 %v2956, %v2972
  %2981 = vset.pattern.permute.xlu0 8
  %2982 = vperm.xlu0 %2981, %v2524
  %v2983 = vpop.permute.xlu0 %2982
  %2985 = vset.pattern.permute.xlu0 8
  %2986 = vperm.xlu0 %2985, %v2525
  %v2987 = vpop.permute.xlu0 %2986
  %v2989 = vmul.f32 %v2763, %v2983
  %v2990 = vmul.f32 %v2764, %v2983
  %v2991 = vmul.f32 %v2765, %v2983
  %v2992 = vmul.f32 %v2766, %v2983
  %v2993 = vmul.f32 %v2767, %v2987
  %v2994 = vmul.f32 %v2768, %v2987
  %v2995 = vmul.f32 %v2769, %v2987
  %v2996 = vmul.f32 %v2770, %v2987
  %v2997 = vadd.f32 %v2973, %v2989
  %v2998 = vadd.f32 %v2974, %v2990
  %v2999 = vadd.f32 %v2975, %v2991
  %v3000 = vadd.f32 %v2976, %v2992
  %v3001 = vadd.f32 %v2977, %v2993
  %v3002 = vadd.f32 %v2978, %v2994
  %v3003 = vadd.f32 %v2979, %v2995
  %v3004 = vadd.f32 %v2980, %v2996
  %3005 = vrot.lane.b32.xlu0 %v2997, 112
  %v3006 = vpop.permute.xlu0 %3005
  %3007 = vrot.lane.b32.xlu0 %v3001, 112
  %v3008 = vpop.permute.xlu0 %3007
  %3009 = vrot.lane.b32.xlu0 %v2998, 112
  %v3010 = vpop.permute.xlu0 %3009
  %3011 = vrot.lane.b32.xlu0 %v3002, 112
  %v3012 = vpop.permute.xlu0 %3011
  %3013 = vrot.lane.b32.xlu0 %v2999, 112
  %v3014 = vpop.permute.xlu0 %3013
  %3015 = vrot.lane.b32.xlu0 %v3003, 112
  %v3016 = vpop.permute.xlu0 %3015
  %3017 = vrot.lane.b32.xlu0 %v3000, 112
  %v3018 = vpop.permute.xlu0 %3017
  %3019 = vrot.lane.b32.xlu0 %v3004, 112
  %v3020 = vpop.permute.xlu0 %3019
  %v3021 = vsel %vm689, %v3014, %v3018
  %v3022 = vsel %vm689, %v3016, %v3020
  %v3023 = vsel %vm689, %v3010, %v3014
  %v3024 = vsel %vm689, %v3012, %v3016
  %v3025 = vsel %vm689, %v3006, %v3010
  %v3026 = vsel %vm689, %v3008, %v3012
  %v3027 = vsel %vm689, %v3018, %v3006
  %v3028 = vsel %vm689, %v3020, %v3008
  %v3029 = vmul.f32 %v3025, %v721
  %v3030 = vmul.f32 %v3023, %v725
  %v3031 = vmul.f32 %v3021, %v729
  %v3032 = vmul.f32 %v3027, %v733
  %v3033 = vmul.f32 %v3026, %v721
  %v3034 = vmul.f32 %v3024, %v725
  %v3035 = vmul.f32 %v3022, %v729
  %v3036 = vmul.f32 %v3028, %v733
  %v3037 = vadd.f32 %v2933, %v3029
  %v3038 = vadd.f32 %v2934, %v3030
  %v3039 = vadd.f32 %v2935, %v3031
  %v3040 = vadd.f32 %v2936, %v3032
  %v3041 = vadd.f32 %v2937, %v3033
  %v3042 = vadd.f32 %v2938, %v3034
  %v3043 = vadd.f32 %v2939, %v3035
  %v3044 = vadd.f32 %v2940, %v3036
  %3045 = vset.pattern.permute.xlu0 3
  %3046 = vperm.xlu0 %3045, %v75
  %v3047 = vpop.permute.xlu0 %3046
  %3049 = vset.pattern.permute.xlu0 3
  %3050 = vperm.xlu0 %3049, %v76
  %v3051 = vpop.permute.xlu0 %3050
  %v3053 = vadd.f32 %v3037, %v3047
  %v3054 = vadd.f32 %v3038, %v3047
  %v3055 = vadd.f32 %v3039, %v3047
  %v3056 = vadd.f32 %v3040, %v3047
  %v3057 = vadd.f32 %v3041, %v3051
  %v3058 = vadd.f32 %v3042, %v3051
  %v3059 = vadd.f32 %v3043, %v3051
  %v3060 = vadd.f32 %v3044, %v3051
  %3062 = vset.pattern.permute.xlu0 0
  %3063 = vperm.xlu0 %3062, %v2528
  %v3064 = vpop.permute.xlu0 %3063
  %3067 = vset.pattern.permute.xlu0 0
  %3068 = vperm.xlu0 %3067, %v2529
  %v3069 = vpop.permute.xlu0 %3068
  %v3072 = vsel %vm778, %v2526, 0
  %v3075 = vsel %vm778, %v2527, 0
  %3077 = vmatprep.subr.mxu0 %v3054
  %3078 = vmatpush1.msra.mxu0 %v3053
  %3079 = vmatprep.subr.mxu0 %v3058
  %3080 = vmatpush1.msra.mxu0 %v3057
  %3081 = vmatprep.subr.mxu0 0.0
  %3082 = vmatpush1.msra.mxu0 0.0
  %3083 = vmatprep.subr.mxu0 0.0
  %3084 = vmatpush1.msra.mxu0 0.0
  %3085 = vmatprep.subr.mxu0 0.0
  %3086 = vmatpush1.msra.mxu0 0.0
  %3087 = vmatprep.subr.mxu0 0.0
  %3088 = vmatpush1.msra.mxu0 0.0
  %3089 = vmatprep.subr.mxu0 0.0
  %3090 = vmatpush1.msra.mxu0 0.0
  %3091 = vmatprep.subr.mxu0 0.0
  %3092 = vmatpush1.msra.mxu0 0.0
  %3093 = vmatprep.subr.mxu0 0.0
  %3094 = vmatpush1.msra.mxu0 0.0
  %3095 = vmatprep.subr.mxu0 0.0
  %3096 = vmatpush1.msra.mxu0 0.0
  %3097 = vmatprep.subr.mxu0 0.0
  %3098 = vmatpush1.msra.mxu0 0.0
  %3099 = vmatprep.subr.mxu0 0.0
  %3100 = vmatpush1.msra.mxu0 0.0
  %3101 = vmatprep.subr.mxu0 0.0
  %3102 = vmatpush1.msra.mxu0 0.0
  %3103 = vmatprep.subr.mxu0 0.0
  %3104 = vmatpush1.msra.mxu0 0.0
  %3105 = vmatprep.subr.mxu0 0.0
  %3106 = vmatpush1.msra.mxu0 0.0
  %3107 = vmatprep.subr.mxu0 0.0
  %3108 = vmatpush1.msra.mxu0 0.0
  %3109 = vmatprep.subr.mxu0 0.0
  %3110 = vmatpush1.msra.mxu0 0.0
  %3111 = vmatprep.subr.mxu0 0.0
  %3112 = vmatpush1.msra.mxu0 0.0
  %3113 = vmatprep.subr.mxu0 0.0
  %3114 = vmatpush1.msra.mxu0 0.0
  %3115 = vmatprep.subr.mxu0 0.0
  %3116 = vmatpush1.msra.mxu0 0.0
  %3117 = vmatprep.subr.mxu0 0.0
  %3118 = vmatpush1.msra.mxu0 0.0
  %3119 = vmatprep.subr.mxu0 0.0
  %3120 = vmatpush1.msra.mxu0 0.0
  %3121 = vmatprep.subr.mxu0 0.0
  %3122 = vmatpush1.msra.mxu0 0.0
  %3123 = vmatprep.subr.mxu0 0.0
  %3124 = vmatpush1.msra.mxu0 0.0
  %3125 = vmatprep.subr.mxu0 0.0
  %3126 = vmatpush1.msra.mxu0 0.0
  %3127 = vmatprep.subr.mxu0 0.0
  %3128 = vmatpush1.msra.mxu0 0.0
  %3129 = vmatprep.subr.mxu0 0.0
  %3130 = vmatpush1.msra.mxu0 0.0
  %3131 = vmatprep.subr.mxu0 0.0
  %3132 = vmatpush1.msra.mxu0 0.0
  %3133 = vmatprep.subr.mxu0 0.0
  %3134 = vmatpush1.msra.mxu0 0.0
  %3135 = vmatprep.subr.mxu0 0.0
  %3136 = vmatpush1.msra.mxu0 0.0
  %3137 = vmatprep.subr.mxu0 0.0
  %3138 = vmatpush1.msra.mxu0 0.0
  %3139 = vmatprep.subr.mxu0 0.0
  %3140 = vmatpush1.msra.mxu0 0.0
  %3141 = vmatprep.mubr.f32.mxu0 0.0
  %3142 = vmatmul.mubr.f32.gmra.mrb[0].mxu0 %v3072
  %v3143 = vpop.f32.mrb[0].mxu0
  %v3144 = vadd.f32 %v3064, %v3143
  %v3145 = vpop.f32.mrb[0].mxu0
  %v3146 = vadd.f32 %v3064, %v3145
  %3147 = vmatprep.mubr.f32.mxu0 0.0
  %3148 = vmatmul.mubr.f32.gmra.mrb[0].mxu0 %v3075
  %v3149 = vpop.f32.mrb[0].mxu0
  %v3150 = vadd.f32 %v3069, %v3149
  %v3151 = vpop.f32.mrb[0].mxu0
  %v3152 = vadd.f32 %v3069, %v3151
  %3153 = vdwg.mxu0
  %3154 = vmatprep.subr.mxu0 %v3056
  %3155 = vmatpush1.msra.mxu0 %v3055
  %3156 = vmatprep.subr.mxu0 %v3060
  %3157 = vmatpush1.msra.mxu0 %v3059
  %3158 = vmatprep.subr.mxu0 0.0
  %3159 = vmatpush1.msra.mxu0 0.0
  %3160 = vmatprep.subr.mxu0 0.0
  %3161 = vmatpush1.msra.mxu0 0.0
  %3162 = vmatprep.subr.mxu0 0.0
  %3163 = vmatpush1.msra.mxu0 0.0
  %3164 = vmatprep.subr.mxu0 0.0
  %3165 = vmatpush1.msra.mxu0 0.0
  %3166 = vmatprep.subr.mxu0 0.0
  %3167 = vmatpush1.msra.mxu0 0.0
  %3168 = vmatprep.subr.mxu0 0.0
  %3169 = vmatpush1.msra.mxu0 0.0
  %3170 = vmatprep.subr.mxu0 0.0
  %3171 = vmatpush1.msra.mxu0 0.0
  %3172 = vmatprep.subr.mxu0 0.0
  %3173 = vmatpush1.msra.mxu0 0.0
  %3174 = vmatprep.subr.mxu0 0.0
  %3175 = vmatpush1.msra.mxu0 0.0
  %3176 = vmatprep.subr.mxu0 0.0
  %3177 = vmatpush1.msra.mxu0 0.0
  %3178 = vmatprep.subr.mxu0 0.0
  %3179 = vmatpush1.msra.mxu0 0.0
  %3180 = vmatprep.subr.mxu0 0.0
  %3181 = vmatpush1.msra.mxu0 0.0
  %3182 = vmatprep.subr.mxu0 0.0
  %3183 = vmatpush1.msra.mxu0 0.0
  %3184 = vmatprep.subr.mxu0 0.0
  %3185 = vmatpush1.msra.mxu0 0.0
  %3186 = vmatprep.subr.mxu0 0.0
  %3187 = vmatpush1.msra.mxu0 0.0
  %3188 = vmatprep.subr.mxu0 0.0
  %3189 = vmatpush1.msra.mxu0 0.0
  %3190 = vmatprep.subr.mxu0 0.0
  %3191 = vmatpush1.msra.mxu0 0.0
  %3192 = vmatprep.subr.mxu0 0.0
  %3193 = vmatpush1.msra.mxu0 0.0
  %3194 = vmatprep.subr.mxu0 0.0
  %3195 = vmatpush1.msra.mxu0 0.0
  %3196 = vmatprep.subr.mxu0 0.0
  %3197 = vmatpush1.msra.mxu0 0.0
  %3198 = vmatprep.subr.mxu0 0.0
  %3199 = vmatpush1.msra.mxu0 0.0
  %3200 = vmatprep.subr.mxu0 0.0
  %3201 = vmatpush1.msra.mxu0 0.0
  %3202 = vmatprep.subr.mxu0 0.0
  %3203 = vmatpush1.msra.mxu0 0.0
  %3204 = vmatprep.subr.mxu0 0.0
  %3205 = vmatpush1.msra.mxu0 0.0
  %3206 = vmatprep.subr.mxu0 0.0
  %3207 = vmatpush1.msra.mxu0 0.0
  %3208 = vmatprep.subr.mxu0 0.0
  %3209 = vmatpush1.msra.mxu0 0.0
  %3210 = vmatprep.subr.mxu0 0.0
  %3211 = vmatpush1.msra.mxu0 0.0
  %3212 = vmatprep.subr.mxu0 0.0
  %3213 = vmatpush1.msra.mxu0 0.0
  %3214 = vmatprep.subr.mxu0 0.0
  %3215 = vmatpush1.msra.mxu0 0.0
  %3216 = vmatprep.subr.mxu0 0.0
  %3217 = vmatpush1.msra.mxu0 0.0
  %3218 = vmatprep.mubr.f32.mxu0 0.0
  %3219 = vmatmul.mubr.f32.gmra.mrb[0].mxu0 %v3072
  %v3220 = vpop.f32.mrb[0].mxu0
  %v3221 = vadd.f32 %v3064, %v3220
  %v3222 = vpop.f32.mrb[0].mxu0
  %v3223 = vadd.f32 %v3064, %v3222
  %3224 = vmatprep.mubr.f32.mxu0 0.0
  %3225 = vmatmul.mubr.f32.gmra.mrb[0].mxu0 %v3075
  %v3226 = vpop.f32.mrb[0].mxu0
  %v3227 = vadd.f32 %v3069, %v3226
  %v3228 = vpop.f32.mrb[0].mxu0
  %v3229 = vadd.f32 %v3069, %v3228
  %3230 = vdwg.mxu0
  %v3231 = vxor.u32 %v3144, 2147483648
  %v3232 = vxor.u32 %v3146, 2147483648
  %v3233 = vxor.u32 %v3221, 2147483648
  %v3234 = vxor.u32 %v3223, 2147483648
  %v3235 = vxor.u32 %v3150, 2147483648
  %v3236 = vxor.u32 %v3152, 2147483648
  %v3237 = vxor.u32 %v3227, 2147483648
  %v3238 = vxor.u32 %v3229, 2147483648
  %v3239 = vmul.f32 %v3231, 1.442695
  %v3240 = vpow.pop %v3239
  %v3241 = vmul.f32 %v3232, 1.442695
  %v3242 = vpow.pop %v3241
  %v3243 = vmul.f32 %v3233, 1.442695
  %v3244 = vpow.pop %v3243
  %v3245 = vmul.f32 %v3234, 1.442695
  %v3246 = vpow.pop %v3245
  %v3247 = vmul.f32 %v3235, 1.442695
  %v3248 = vpow.pop %v3247
  %v3249 = vmul.f32 %v3236, 1.442695
  %v3250 = vpow.pop %v3249
  %v3251 = vmul.f32 %v3237, 1.442695
  %v3252 = vpow.pop %v3251
  %v3253 = vmul.f32 %v3238, 1.442695
  %v3254 = vpow.pop %v3253
  %v3255 = vadd.f32 %v3240, 1.0
  %v3256 = vadd.f32 %v3242, 1.0
  %v3257 = vadd.f32 %v3244, 1.0
  %v3258 = vadd.f32 %v3246, 1.0
  %v3259 = vadd.f32 %v3248, 1.0
  %v3260 = vadd.f32 %v3250, 1.0
  %v3261 = vadd.f32 %v3252, 1.0
  %v3262 = vadd.f32 %v3254, 1.0
  %v3263 = vrcp.pop %v3255
  %v3264 = vmul.f32 1.0, %v3263
  %v3265 = vrcp.pop %v3256
  %v3266 = vmul.f32 1.0, %v3265
  %v3267 = vrcp.pop %v3257
  %v3268 = vmul.f32 1.0, %v3267
  %v3269 = vrcp.pop %v3258
  %v3270 = vmul.f32 1.0, %v3269
  %v3271 = vrcp.pop %v3259
  %v3272 = vmul.f32 1.0, %v3271
  %v3273 = vrcp.pop %v3260
  %v3274 = vmul.f32 1.0, %v3273
  %v3275 = vrcp.pop %v3261
  %v3276 = vmul.f32 1.0, %v3275
  %v3277 = vrcp.pop %v3262
  %v3278 = vmul.f32 1.0, %v3277
  %v3279 = vmul.f32 %v3144, %v3264
  %v3280 = vmul.f32 %v3146, %v3266
  %v3281 = vmul.f32 %v3221, %v3268
  %v3282 = vmul.f32 %v3223, %v3270
  %v3283 = vmul.f32 %v3150, %v3272
  %v3284 = vmul.f32 %v3152, %v3274
  %v3285 = vmul.f32 %v3227, %v3276
  %v3286 = vmul.f32 %v3229, %v3278
  %3287 = vst [vmem:[%s19] sm:$0xff] %v3279
  %3288 = vst [vmem:[%s19 + $0x8] sm:$0xff] %v3280
  %3289 = vst [vmem:[%s19 + $0x10] sm:$0xff] %v3281
  %3290 = vst [vmem:[%s19 + $0x18] sm:$0xff] %v3282
  %3291 = vst [vmem:[%s19 + $0x20] sm:$0xff] %v3283
  %3292 = vst [vmem:[%s19 + $0x28] sm:$0xff] %v3284
  %3293 = vst [vmem:[%s19 + $0x30] sm:$0xff] %v3285
  %3294 = vst [vmem:[%s19 + $0x38] sm:$0xff] %v3286
  %v3295 = vld [vmem:[%s1] sm:$0xff]
  %v3296 = vld [vmem:[%s1 + $0x8] sm:$0xff]
  %v3297 = vld [vmem:[%s1 + $0x10] sm:$0xff]
  %v3298 = vld [vmem:[%s1 + $0x18] sm:$0xff]
  %v3299 = vld [vmem:[%s1 + $0x20] sm:$0xff]
  %v3300 = vld [vmem:[%s1 + $0x28] sm:$0xff]
  %v3301 = vld [vmem:[%s1 + $0x30] sm:$0xff]
  %v3302 = vld [vmem:[%s1 + $0x38] sm:$0xff]
  %v3303 = vadd.f32 %v3279, %v3295
  %v3304 = vadd.f32 %v3280, %v3296
  %v3305 = vadd.f32 %v3281, %v3297
  %v3306 = vadd.f32 %v3282, %v3298
  %v3307 = vadd.f32 %v3283, %v3299
  %v3308 = vadd.f32 %v3284, %v3300
  %v3309 = vadd.f32 %v3285, %v3301
  %v3310 = vadd.f32 %v3286, %v3302
  %v3311 = vxor.u32 %v3303, 2147483648
  %v3312 = vxor.u32 %v3304, 2147483648
  %v3313 = vxor.u32 %v3305, 2147483648
  %v3314 = vxor.u32 %v3306, 2147483648
  %v3315 = vxor.u32 %v3307, 2147483648
  %v3316 = vxor.u32 %v3308, 2147483648
  %v3317 = vxor.u32 %v3309, 2147483648
  %v3318 = vxor.u32 %v3310, 2147483648
  %v3319 = vmul.f32 %v3311, 1.442695
  %v3320 = vpow.pop %v3319
  %v3321 = vmul.f32 %v3312, 1.442695
  %v3322 = vpow.pop %v3321
  %v3323 = vmul.f32 %v3313, 1.442695
  %v3324 = vpow.pop %v3323
  %v3325 = vmul.f32 %v3314, 1.442695
  %v3326 = vpow.pop %v3325
  %v3327 = vmul.f32 %v3315, 1.442695
  %v3328 = vpow.pop %v3327
  %v3329 = vmul.f32 %v3316, 1.442695
  %v3330 = vpow.pop %v3329
  %v3331 = vmul.f32 %v3317, 1.442695
  %v3332 = vpow.pop %v3331
  %v3333 = vmul.f32 %v3318, 1.442695
  %v3334 = vpow.pop %v3333
  %v3335 = vadd.f32 %v3320, 1.0
  %v3336 = vadd.f32 %v3322, 1.0
  %v3337 = vadd.f32 %v3324, 1.0
  %v3338 = vadd.f32 %v3326, 1.0
  %v3339 = vadd.f32 %v3328, 1.0
  %v3340 = vadd.f32 %v3330, 1.0
  %v3341 = vadd.f32 %v3332, 1.0
  %v3342 = vadd.f32 %v3334, 1.0
  %v3343 = vrcp.pop %v3335
  %v3344 = vmul.f32 1.0, %v3343
  %v3345 = vrcp.pop %v3336
  %v3346 = vmul.f32 1.0, %v3345
  %v3347 = vrcp.pop %v3337
  %v3348 = vmul.f32 1.0, %v3347
  %v3349 = vrcp.pop %v3338
  %v3350 = vmul.f32 1.0, %v3349
  %v3351 = vrcp.pop %v3339
  %v3352 = vmul.f32 1.0, %v3351
  %v3353 = vrcp.pop %v3340
  %v3354 = vmul.f32 1.0, %v3353
  %v3355 = vrcp.pop %v3341
  %v3356 = vmul.f32 1.0, %v3355
  %v3357 = vrcp.pop %v3342
  %v3358 = vmul.f32 1.0, %v3357
  %v3359 = vmul.f32 %v3303, %v3344
  %v3360 = vmul.f32 %v3304, %v3346
  %v3361 = vmul.f32 %v3305, %v3348
  %v3362 = vmul.f32 %v3306, %v3350
  %v3363 = vmul.f32 %v3307, %v3352
  %v3364 = vmul.f32 %v3308, %v3354
  %v3365 = vmul.f32 %v3309, %v3356
  %v3366 = vmul.f32 %v3310, %v3358
  %v3367 = vld [vmem:[%s12] sm:$0xff]
  %v3368 = vld [vmem:[%s12 + $0x8] sm:$0xff]
  %v3369 = vld [vmem:[%s13] sm:$0xff]
  %v3370 = vld [vmem:[%s13 + $0x8] sm:$0xff]
  %3372 = vset.pattern.permute.xlu0 0
  %3373 = vperm.xlu0 %3372, %v3369
  %v3374 = vpop.permute.xlu0 %3373
  %3377 = vset.pattern.permute.xlu0 0
  %3378 = vperm.xlu0 %3377, %v3370
  %v3379 = vpop.permute.xlu0 %3378
  %v3382 = vsel %vm778, %v3367, 0
  %v3385 = vsel %vm778, %v3368, 0
  %3387 = vmatprep.subr.mxu0 %v3360
  %3388 = vmatpush1.msra.mxu0 %v3359
  %3389 = vmatprep.subr.mxu0 %v3364
  %3390 = vmatpush1.msra.mxu0 %v3363
  %3391 = vmatprep.subr.mxu0 0.0
  %3392 = vmatpush1.msra.mxu0 0.0
  %3393 = vmatprep.subr.mxu0 0.0
  %3394 = vmatpush1.msra.mxu0 0.0
  %3395 = vmatprep.subr.mxu0 0.0
  %3396 = vmatpush1.msra.mxu0 0.0
  %3397 = vmatprep.subr.mxu0 0.0
  %3398 = vmatpush1.msra.mxu0 0.0
  %3399 = vmatprep.subr.mxu0 0.0
  %3400 = vmatpush1.msra.mxu0 0.0
  %3401 = vmatprep.subr.mxu0 0.0
  %3402 = vmatpush1.msra.mxu0 0.0
  %3403 = vmatprep.subr.mxu0 0.0
  %3404 = vmatpush1.msra.mxu0 0.0
  %3405 = vmatprep.subr.mxu0 0.0
  %3406 = vmatpush1.msra.mxu0 0.0
  %3407 = vmatprep.subr.mxu0 0.0
  %3408 = vmatpush1.msra.mxu0 0.0
  %3409 = vmatprep.subr.mxu0 0.0
  %3410 = vmatpush1.msra.mxu0 0.0
  %3411 = vmatprep.subr.mxu0 0.0
  %3412 = vmatpush1.msra.mxu0 0.0
  %3413 = vmatprep.subr.mxu0 0.0
  %3414 = vmatpush1.msra.mxu0 0.0
  %3415 = vmatprep.subr.mxu0 0.0
  %3416 = vmatpush1.msra.mxu0 0.0
  %3417 = vmatprep.subr.mxu0 0.0
  %3418 = vmatpush1.msra.mxu0 0.0
  %3419 = vmatprep.subr.mxu0 0.0
  %3420 = vmatpush1.msra.mxu0 0.0
  %3421 = vmatprep.subr.mxu0 0.0
  %3422 = vmatpush1.msra.mxu0 0.0
  %3423 = vmatprep.subr.mxu0 0.0
  %3424 = vmatpush1.msra.mxu0 0.0
  %3425 = vmatprep.subr.mxu0 0.0
  %3426 = vmatpush1.msra.mxu0 0.0
  %3427 = vmatprep.subr.mxu0 0.0
  %3428 = vmatpush1.msra.mxu0 0.0
  %3429 = vmatprep.subr.mxu0 0.0
  %3430 = vmatpush1.msra.mxu0 0.0
  %3431 = vmatprep.subr.mxu0 0.0
  %3432 = vmatpush1.msra.mxu0 0.0
  %3433 = vmatprep.subr.mxu0 0.0
  %3434 = vmatpush1.msra.mxu0 0.0
  %3435 = vmatprep.subr.mxu0 0.0
  %3436 = vmatpush1.msra.mxu0 0.0
  %3437 = vmatprep.subr.mxu0 0.0
  %3438 = vmatpush1.msra.mxu0 0.0
  %3439 = vmatprep.subr.mxu0 0.0
  %3440 = vmatpush1.msra.mxu0 0.0
  %3441 = vmatprep.subr.mxu0 0.0
  %3442 = vmatpush1.msra.mxu0 0.0
  %3443 = vmatprep.subr.mxu0 0.0
  %3444 = vmatpush1.msra.mxu0 0.0
  %3445 = vmatprep.subr.mxu0 0.0
  %3446 = vmatpush1.msra.mxu0 0.0
  %3447 = vmatprep.subr.mxu0 0.0
  %3448 = vmatpush1.msra.mxu0 0.0
  %3449 = vmatprep.subr.mxu0 0.0
  %3450 = vmatpush1.msra.mxu0 0.0
  %3451 = vmatprep.mubr.f32.mxu0 0.0
  %3452 = vmatmul.mubr.f32.gmra.mrb[0].mxu0 %v3382
  %v3453 = vpop.f32.mrb[0].mxu0
  %v3454 = vadd.f32 %v3374, %v3453
  %v3455 = vpop.f32.mrb[0].mxu0
  %v3456 = vadd.f32 %v3374, %v3455
  %3457 = vmatprep.mubr.f32.mxu0 0.0
  %3458 = vmatmul.mubr.f32.gmra.mrb[0].mxu0 %v3385
  %v3459 = vpop.f32.mrb[0].mxu0
  %v3460 = vadd.f32 %v3379, %v3459
  %v3461 = vpop.f32.mrb[0].mxu0
  %v3462 = vadd.f32 %v3379, %v3461
  %3463 = vdwg.mxu0
  %3464 = vmatprep.subr.mxu0 %v3362
  %3465 = vmatpush1.msra.mxu0 %v3361
  %3466 = vmatprep.subr.mxu0 %v3366
  %3467 = vmatpush1.msra.mxu0 %v3365
  %3468 = vmatprep.subr.mxu0 0.0
  %3469 = vmatpush1.msra.mxu0 0.0
  %3470 = vmatprep.subr.mxu0 0.0
  %3471 = vmatpush1.msra.mxu0 0.0
  %3472 = vmatprep.subr.mxu0 0.0
  %3473 = vmatpush1.msra.mxu0 0.0
  %3474 = vmatprep.subr.mxu0 0.0
  %3475 = vmatpush1.msra.mxu0 0.0
  %3476 = vmatprep.subr.mxu0 0.0
  %3477 = vmatpush1.msra.mxu0 0.0
  %3478 = vmatprep.subr.mxu0 0.0
  %3479 = vmatpush1.msra.mxu0 0.0
  %3480 = vmatprep.subr.mxu0 0.0
  %3481 = vmatpush1.msra.mxu0 0.0
  %3482 = vmatprep.subr.mxu0 0.0
  %3483 = vmatpush1.msra.mxu0 0.0
  %3484 = vmatprep.subr.mxu0 0.0
  %3485 = vmatpush1.msra.mxu0 0.0
  %3486 = vmatprep.subr.mxu0 0.0
  %3487 = vmatpush1.msra.mxu0 0.0
  %3488 = vmatprep.subr.mxu0 0.0
  %3489 = vmatpush1.msra.mxu0 0.0
  %3490 = vmatprep.subr.mxu0 0.0
  %3491 = vmatpush1.msra.mxu0 0.0
  %3492 = vmatprep.subr.mxu0 0.0
  %3493 = vmatpush1.msra.mxu0 0.0
  %3494 = vmatprep.subr.mxu0 0.0
  %3495 = vmatpush1.msra.mxu0 0.0
  %3496 = vmatprep.subr.mxu0 0.0
  %3497 = vmatpush1.msra.mxu0 0.0
  %3498 = vmatprep.subr.mxu0 0.0
  %3499 = vmatpush1.msra.mxu0 0.0
  %3500 = vmatprep.subr.mxu0 0.0
  %3501 = vmatpush1.msra.mxu0 0.0
  %3502 = vmatprep.subr.mxu0 0.0
  %3503 = vmatpush1.msra.mxu0 0.0
  %3504 = vmatprep.subr.mxu0 0.0
  %3505 = vmatpush1.msra.mxu0 0.0
  %3506 = vmatprep.subr.mxu0 0.0
  %3507 = vmatpush1.msra.mxu0 0.0
  %3508 = vmatprep.subr.mxu0 0.0
  %3509 = vmatpush1.msra.mxu0 0.0
  %3510 = vmatprep.subr.mxu0 0.0
  %3511 = vmatpush1.msra.mxu0 0.0
  %3512 = vmatprep.subr.mxu0 0.0
  %3513 = vmatpush1.msra.mxu0 0.0
  %3514 = vmatprep.subr.mxu0 0.0
  %3515 = vmatpush1.msra.mxu0 0.0
  %3516 = vmatprep.subr.mxu0 0.0
  %3517 = vmatpush1.msra.mxu0 0.0
  %3518 = vmatprep.subr.mxu0 0.0
  %3519 = vmatpush1.msra.mxu0 0.0
  %3520 = vmatprep.subr.mxu0 0.0
  %3521 = vmatpush1.msra.mxu0 0.0
  %3522 = vmatprep.subr.mxu0 0.0
  %3523 = vmatpush1.msra.mxu0 0.0
  %3524 = vmatprep.subr.mxu0 0.0
  %3525 = vmatpush1.msra.mxu0 0.0
  %3526 = vmatprep.subr.mxu0 0.0
  %3527 = vmatpush1.msra.mxu0 0.0
  %3528 = vmatprep.mubr.f32.mxu0 0.0
  %3529 = vmatmul.mubr.f32.gmra.mrb[0].mxu0 %v3382
  %v3530 = vpop.f32.mrb[0].mxu0
  %v3531 = vadd.f32 %v3374, %v3530
  %v3532 = vpop.f32.mrb[0].mxu0
  %v3533 = vadd.f32 %v3374, %v3532
  %3534 = vmatprep.mubr.f32.mxu0 0.0
  %3535 = vmatmul.mubr.f32.gmra.mrb[0].mxu0 %v3385
  %v3536 = vpop.f32.mrb[0].mxu0
  %v3537 = vadd.f32 %v3379, %v3536
  %v3538 = vpop.f32.mrb[0].mxu0
  %v3539 = vadd.f32 %v3379, %v3538
  %3540 = vdwg.mxu0
  %v3541 = vxor.u32 %v3454, 2147483648
  %v3542 = vxor.u32 %v3456, 2147483648
  %v3543 = vxor.u32 %v3531, 2147483648
  %v3544 = vxor.u32 %v3533, 2147483648
  %v3545 = vxor.u32 %v3460, 2147483648
  %v3546 = vxor.u32 %v3462, 2147483648
  %v3547 = vxor.u32 %v3537, 2147483648
  %v3548 = vxor.u32 %v3539, 2147483648
  %v3549 = vmul.f32 %v3541, 1.442695
  %v3550 = vpow.pop %v3549
  %v3551 = vmul.f32 %v3542, 1.442695
  %v3552 = vpow.pop %v3551
  %v3553 = vmul.f32 %v3543, 1.442695
  %v3554 = vpow.pop %v3553
  %v3555 = vmul.f32 %v3544, 1.442695
  %v3556 = vpow.pop %v3555
  %v3557 = vmul.f32 %v3545, 1.442695
  %v3558 = vpow.pop %v3557
  %v3559 = vmul.f32 %v3546, 1.442695
  %v3560 = vpow.pop %v3559
  %v3561 = vmul.f32 %v3547, 1.442695
  %v3562 = vpow.pop %v3561
  %v3563 = vmul.f32 %v3548, 1.442695
  %v3564 = vpow.pop %v3563
  %v3565 = vadd.f32 %v3550, 1.0
  %v3566 = vadd.f32 %v3552, 1.0
  %v3567 = vadd.f32 %v3554, 1.0
  %v3568 = vadd.f32 %v3556, 1.0
  %v3569 = vadd.f32 %v3558, 1.0
  %v3570 = vadd.f32 %v3560, 1.0
  %v3571 = vadd.f32 %v3562, 1.0
  %v3572 = vadd.f32 %v3564, 1.0
  %v3573 = vrcp.pop %v3565
  %v3574 = vmul.f32 1.0, %v3573
  %v3575 = vrcp.pop %v3566
  %v3576 = vmul.f32 1.0, %v3575
  %v3577 = vrcp.pop %v3567
  %v3578 = vmul.f32 1.0, %v3577
  %v3579 = vrcp.pop %v3568
  %v3580 = vmul.f32 1.0, %v3579
  %v3581 = vrcp.pop %v3569
  %v3582 = vmul.f32 1.0, %v3581
  %v3583 = vrcp.pop %v3570
  %v3584 = vmul.f32 1.0, %v3583
  %v3585 = vrcp.pop %v3571
  %v3586 = vmul.f32 1.0, %v3585
  %v3587 = vrcp.pop %v3572
  %v3588 = vmul.f32 1.0, %v3587
  %v3589 = vmul.f32 %v3454, %v3574
  %v3590 = vmul.f32 %v3456, %v3576
  %v3591 = vmul.f32 %v3531, %v3578
  %v3592 = vmul.f32 %v3533, %v3580
  %v3593 = vmul.f32 %v3460, %v3582
  %v3594 = vmul.f32 %v3462, %v3584
  %v3595 = vmul.f32 %v3537, %v3586
  %v3596 = vmul.f32 %v3539, %v3588
  %v3597 = vld [vmem:[%s14] sm:$0xff]
  %v3598 = vld [vmem:[%s14 + $0x8] sm:$0xff]
  %v3599 = vld [vmem:[%s14 + $0x10] sm:$0xff]
  %v3600 = vld [vmem:[%s14 + $0x18] sm:$0xff]
  %3601 = vrot.lane.b32.xlu0 %v3359, 1
  %v3602 = vpop.permute.xlu0 %3601
  %3603 = vrot.lane.b32.xlu0 %v3363, 1
  %v3604 = vpop.permute.xlu0 %3603
  %3605 = vrot.lane.b32.xlu0 %v3589, 1
  %v3606 = vpop.permute.xlu0 %3605
  %3607 = vrot.lane.b32.xlu0 %v3593, 1
  %v3608 = vpop.permute.xlu0 %3607
  %3609 = vrot.lane.b32.xlu0 %v3360, 1
  %v3610 = vpop.permute.xlu0 %3609
  %3611 = vrot.lane.b32.xlu0 %v3364, 1
  %v3612 = vpop.permute.xlu0 %3611
  %3613 = vrot.lane.b32.xlu0 %v3590, 1
  %v3614 = vpop.permute.xlu0 %3613
  %3615 = vrot.lane.b32.xlu0 %v3594, 1
  %v3616 = vpop.permute.xlu0 %3615
  %3617 = vrot.lane.b32.xlu0 %v3361, 1
  %v3618 = vpop.permute.xlu0 %3617
  %3619 = vrot.lane.b32.xlu0 %v3365, 1
  %v3620 = vpop.permute.xlu0 %3619
  %3621 = vrot.lane.b32.xlu0 %v3591, 1
  %v3622 = vpop.permute.xlu0 %3621
  %3623 = vrot.lane.b32.xlu0 %v3595, 1
  %v3624 = vpop.permute.xlu0 %3623
  %3625 = vrot.lane.b32.xlu0 %v3362, 1
  %v3626 = vpop.permute.xlu0 %3625
  %3627 = vrot.lane.b32.xlu0 %v3366, 1
  %v3628 = vpop.permute.xlu0 %3627
  %3629 = vrot.lane.b32.xlu0 %v3592, 1
  %v3630 = vpop.permute.xlu0 %3629
  %3631 = vrot.lane.b32.xlu0 %v3596, 1
  %v3632 = vpop.permute.xlu0 %3631
  %v3633 = vsel %vm278, %v3618, %v3626
  %v3634 = vsel %vm278, %v3620, %v3628
  %v3635 = vsel %vm278, %v3622, %v3630
  %v3636 = vsel %vm278, %v3624, %v3632
  %v3637 = vsel %vm278, %v3610, %v3618
  %v3638 = vsel %vm278, %v3612, %v3620
  %v3639 = vsel %vm278, %v3614, %v3622
  %v3640 = vsel %vm278, %v3616, %v3624
  %v3641 = vsel %vm278, %v3602, %v3610
  %v3642 = vsel %vm278, %v3604, %v3612
  %v3643 = vsel %vm278, %v3606, %v3614
  %v3644 = vsel %vm278, %v3608, %v3616
  %v3645 = vsel %vm278, %v3626, %v3602
  %v3646 = vsel %vm278, %v3628, %v3604
  %v3647 = vsel %vm278, %v3630, %v3606
  %v3648 = vsel %vm278, %v3632, %v3608
  %v3649 = vmul.f32 %v3645, %v312
  %v3650 = vmul.f32 %v3641, %v316
  %v3651 = vmul.f32 %v3637, %v320
  %v3652 = vmul.f32 %v3633, %v324
  %v3653 = vmul.f32 %v3646, %v312
  %v3654 = vmul.f32 %v3642, %v316
  %v3655 = vmul.f32 %v3638, %v320
  %v3656 = vmul.f32 %v3634, %v324
  %v3657 = vmul.f32 %v3647, %v312
  %v3658 = vmul.f32 %v3643, %v316
  %v3659 = vmul.f32 %v3639, %v320
  %v3660 = vmul.f32 %v3635, %v324
  %v3661 = vmul.f32 %v3648, %v312
  %v3662 = vmul.f32 %v3644, %v316
  %v3663 = vmul.f32 %v3640, %v320
  %v3664 = vmul.f32 %v3636, %v324
  %3665 = vrot.lane.b32.xlu0 %v3359, 127
  %v3666 = vpop.permute.xlu0 %3665
  %3667 = vrot.lane.b32.xlu0 %v3363, 127
  %v3668 = vpop.permute.xlu0 %3667
  %3669 = vrot.lane.b32.xlu0 %v3589, 127
  %v3670 = vpop.permute.xlu0 %3669
  %3671 = vrot.lane.b32.xlu0 %v3593, 127
  %v3672 = vpop.permute.xlu0 %3671
  %3673 = vrot.lane.b32.xlu0 %v3360, 127
  %v3674 = vpop.permute.xlu0 %3673
  %3675 = vrot.lane.b32.xlu0 %v3364, 127
  %v3676 = vpop.permute.xlu0 %3675
  %3677 = vrot.lane.b32.xlu0 %v3590, 127
  %v3678 = vpop.permute.xlu0 %3677
  %3679 = vrot.lane.b32.xlu0 %v3594, 127
  %v3680 = vpop.permute.xlu0 %3679
  %3681 = vrot.lane.b32.xlu0 %v3361, 127
  %v3682 = vpop.permute.xlu0 %3681
  %3683 = vrot.lane.b32.xlu0 %v3365, 127
  %v3684 = vpop.permute.xlu0 %3683
  %3685 = vrot.lane.b32.xlu0 %v3591, 127
  %v3686 = vpop.permute.xlu0 %3685
  %3687 = vrot.lane.b32.xlu0 %v3595, 127
  %v3688 = vpop.permute.xlu0 %3687
  %3689 = vrot.lane.b32.xlu0 %v3362, 127
  %v3690 = vpop.permute.xlu0 %3689
  %3691 = vrot.lane.b32.xlu0 %v3366, 127
  %v3692 = vpop.permute.xlu0 %3691
  %3693 = vrot.lane.b32.xlu0 %v3592, 127
  %v3694 = vpop.permute.xlu0 %3693
  %3695 = vrot.lane.b32.xlu0 %v3596, 127
  %v3696 = vpop.permute.xlu0 %3695
  %v3697 = vsel %vm349, %v3682, %v3690
  %v3698 = vsel %vm349, %v3684, %v3692
  %v3699 = vsel %vm349, %v3686, %v3694
  %v3700 = vsel %vm349, %v3688, %v3696
  %v3701 = vsel %vm349, %v3674, %v3682
  %v3702 = vsel %vm349, %v3676, %v3684
  %v3703 = vsel %vm349, %v3678, %v3686
  %v3704 = vsel %vm349, %v3680, %v3688
  %v3705 = vsel %vm349, %v3666, %v3674
  %v3706 = vsel %vm349, %v3668, %v3676
  %v3707 = vsel %vm349, %v3670, %v3678
  %v3708 = vsel %vm349, %v3672, %v3680
  %v3709 = vsel %vm349, %v3690, %v3666
  %v3710 = vsel %vm349, %v3692, %v3668
  %v3711 = vsel %vm349, %v3694, %v3670
  %v3712 = vsel %vm349, %v3696, %v3672
  %v3713 = vmul.f32 %v3705, %v381
  %v3714 = vmul.f32 %v3701, %v385
  %v3715 = vmul.f32 %v3697, %v389
  %v3716 = vmul.f32 %v3709, %v393
  %v3717 = vmul.f32 %v3706, %v381
  %v3718 = vmul.f32 %v3702, %v385
  %v3719 = vmul.f32 %v3698, %v389
  %v3720 = vmul.f32 %v3710, %v393
  %v3721 = vmul.f32 %v3707, %v381
  %v3722 = vmul.f32 %v3703, %v385
  %v3723 = vmul.f32 %v3699, %v389
  %v3724 = vmul.f32 %v3711, %v393
  %v3725 = vmul.f32 %v3708, %v381
  %v3726 = vmul.f32 %v3704, %v385
  %v3727 = vmul.f32 %v3700, %v389
  %v3728 = vmul.f32 %v3712, %v393
  %3730 = vset.pattern.permute.xlu0 0
  %3731 = vperm.xlu0 %3730, %v3597
  %v3732 = vpop.permute.xlu0 %3731
  %3735 = vset.pattern.permute.xlu0 0
  %3736 = vperm.xlu0 %3735, %v3598
  %v3737 = vpop.permute.xlu0 %3736
  %3740 = vset.pattern.permute.xlu0 0
  %3741 = vperm.xlu0 %3740, %v3599
  %v3742 = vpop.permute.xlu0 %3741
  %3745 = vset.pattern.permute.xlu0 0
  %3746 = vperm.xlu0 %3745, %v3600
  %v3747 = vpop.permute.xlu0 %3746
  %v3749 = vmul.f32 %v3649, %v3732
  %v3750 = vmul.f32 %v3650, %v3732
  %v3751 = vmul.f32 %v3651, %v3732
  %v3752 = vmul.f32 %v3652, %v3732
  %v3753 = vmul.f32 %v3653, %v3737
  %v3754 = vmul.f32 %v3654, %v3737
  %v3755 = vmul.f32 %v3655, %v3737
  %v3756 = vmul.f32 %v3656, %v3737
  %v3757 = vmul.f32 %v3657, %v3742
  %v3758 = vmul.f32 %v3658, %v3742
  %v3759 = vmul.f32 %v3659, %v3742
  %v3760 = vmul.f32 %v3660, %v3742
  %v3761 = vmul.f32 %v3661, %v3747
  %v3762 = vmul.f32 %v3662, %v3747
  %v3763 = vmul.f32 %v3663, %v3747
  %v3764 = vmul.f32 %v3664, %v3747
  %3765 = vset.pattern.permute.xlu0 1
  %3766 = vperm.xlu0 %3765, %v3597
  %v3767 = vpop.permute.xlu0 %3766
  %3769 = vset.pattern.permute.xlu0 1
  %3770 = vperm.xlu0 %3769, %v3598
  %v3771 = vpop.permute.xlu0 %3770
  %3773 = vset.pattern.permute.xlu0 1
  %3774 = vperm.xlu0 %3773, %v3599
  %v3775 = vpop.permute.xlu0 %3774
  %3777 = vset.pattern.permute.xlu0 1
  %3778 = vperm.xlu0 %3777, %v3600
  %v3779 = vpop.permute.xlu0 %3778
  %v3781 = vmul.f32 %v3359, %v3767
  %v3782 = vmul.f32 %v3360, %v3767
  %v3783 = vmul.f32 %v3361, %v3767
  %v3784 = vmul.f32 %v3362, %v3767
  %v3785 = vmul.f32 %v3363, %v3771
  %v3786 = vmul.f32 %v3364, %v3771
  %v3787 = vmul.f32 %v3365, %v3771
  %v3788 = vmul.f32 %v3366, %v3771
  %v3789 = vmul.f32 %v3589, %v3775
  %v3790 = vmul.f32 %v3590, %v3775
  %v3791 = vmul.f32 %v3591, %v3775
  %v3792 = vmul.f32 %v3592, %v3775
  %v3793 = vmul.f32 %v3593, %v3779
  %v3794 = vmul.f32 %v3594, %v3779
  %v3795 = vmul.f32 %v3595, %v3779
  %v3796 = vmul.f32 %v3596, %v3779
  %v3797 = vadd.f32 %v3749, %v3781
  %v3798 = vadd.f32 %v3750, %v3782
  %v3799 = vadd.f32 %v3751, %v3783
  %v3800 = vadd.f32 %v3752, %v3784
  %v3801 = vadd.f32 %v3753, %v3785
  %v3802 = vadd.f32 %v3754, %v3786
  %v3803 = vadd.f32 %v3755, %v3787
  %v3804 = vadd.f32 %v3756, %v3788
  %v3805 = vadd.f32 %v3757, %v3789
  %v3806 = vadd.f32 %v3758, %v3790
  %v3807 = vadd.f32 %v3759, %v3791
  %v3808 = vadd.f32 %v3760, %v3792
  %v3809 = vadd.f32 %v3761, %v3793
  %v3810 = vadd.f32 %v3762, %v3794
  %v3811 = vadd.f32 %v3763, %v3795
  %v3812 = vadd.f32 %v3764, %v3796
  %3813 = vset.pattern.permute.xlu0 2
  %3814 = vperm.xlu0 %3813, %v3597
  %v3815 = vpop.permute.xlu0 %3814
  %3817 = vset.pattern.permute.xlu0 2
  %3818 = vperm.xlu0 %3817, %v3598
  %v3819 = vpop.permute.xlu0 %3818
  %3821 = vset.pattern.permute.xlu0 2
  %3822 = vperm.xlu0 %3821, %v3599
  %v3823 = vpop.permute.xlu0 %3822
  %3825 = vset.pattern.permute.xlu0 2
  %3826 = vperm.xlu0 %3825, %v3600
  %v3827 = vpop.permute.xlu0 %3826
  %v3829 = vmul.f32 %v3713, %v3815
  %v3830 = vmul.f32 %v3714, %v3815
  %v3831 = vmul.f32 %v3715, %v3815
  %v3832 = vmul.f32 %v3716, %v3815
  %v3833 = vmul.f32 %v3717, %v3819
  %v3834 = vmul.f32 %v3718, %v3819
  %v3835 = vmul.f32 %v3719, %v3819
  %v3836 = vmul.f32 %v3720, %v3819
  %v3837 = vmul.f32 %v3721, %v3823
  %v3838 = vmul.f32 %v3722, %v3823
  %v3839 = vmul.f32 %v3723, %v3823
  %v3840 = vmul.f32 %v3724, %v3823
  %v3841 = vmul.f32 %v3725, %v3827
  %v3842 = vmul.f32 %v3726, %v3827
  %v3843 = vmul.f32 %v3727, %v3827
  %v3844 = vmul.f32 %v3728, %v3827
  %v3845 = vadd.f32 %v3797, %v3829
  %v3846 = vadd.f32 %v3798, %v3830
  %v3847 = vadd.f32 %v3799, %v3831
  %v3848 = vadd.f32 %v3800, %v3832
  %v3849 = vadd.f32 %v3801, %v3833
  %v3850 = vadd.f32 %v3802, %v3834
  %v3851 = vadd.f32 %v3803, %v3835
  %v3852 = vadd.f32 %v3804, %v3836
  %v3853 = vadd.f32 %v3805, %v3837
  %v3854 = vadd.f32 %v3806, %v3838
  %v3855 = vadd.f32 %v3807, %v3839
  %v3856 = vadd.f32 %v3808, %v3840
  %v3857 = vadd.f32 %v3809, %v3841
  %v3858 = vadd.f32 %v3810, %v3842
  %v3859 = vadd.f32 %v3811, %v3843
  %v3860 = vadd.f32 %v3812, %v3844
  %3861 = vrot.lane.b32.xlu0 %v3845, 16
  %v3862 = vpop.permute.xlu0 %3861
  %3863 = vrot.lane.b32.xlu0 %v3849, 16
  %v3864 = vpop.permute.xlu0 %3863
  %3865 = vrot.lane.b32.xlu0 %v3853, 16
  %v3866 = vpop.permute.xlu0 %3865
  %3867 = vrot.lane.b32.xlu0 %v3857, 16
  %v3868 = vpop.permute.xlu0 %3867
  %3869 = vrot.lane.b32.xlu0 %v3846, 16
  %v3870 = vpop.permute.xlu0 %3869
  %3871 = vrot.lane.b32.xlu0 %v3850, 16
  %v3872 = vpop.permute.xlu0 %3871
  %3873 = vrot.lane.b32.xlu0 %v3854, 16
  %v3874 = vpop.permute.xlu0 %3873
  %3875 = vrot.lane.b32.xlu0 %v3858, 16
  %v3876 = vpop.permute.xlu0 %3875
  %3877 = vrot.lane.b32.xlu0 %v3847, 16
  %v3878 = vpop.permute.xlu0 %3877
  %3879 = vrot.lane.b32.xlu0 %v3851, 16
  %v3880 = vpop.permute.xlu0 %3879
  %3881 = vrot.lane.b32.xlu0 %v3855, 16
  %v3882 = vpop.permute.xlu0 %3881
  %3883 = vrot.lane.b32.xlu0 %v3859, 16
  %v3884 = vpop.permute.xlu0 %3883
  %3885 = vrot.lane.b32.xlu0 %v3848, 16
  %v3886 = vpop.permute.xlu0 %3885
  %3887 = vrot.lane.b32.xlu0 %v3852, 16
  %v3888 = vpop.permute.xlu0 %3887
  %3889 = vrot.lane.b32.xlu0 %v3856, 16
  %v3890 = vpop.permute.xlu0 %3889
  %3891 = vrot.lane.b32.xlu0 %v3860, 16
  %v3892 = vpop.permute.xlu0 %3891
  %v3893 = vsel %vm484, %v3878, %v3886
  %v3894 = vsel %vm484, %v3880, %v3888
  %v3895 = vsel %vm484, %v3882, %v3890
  %v3896 = vsel %vm484, %v3884, %v3892
  %v3897 = vsel %vm484, %v3870, %v3878
  %v3898 = vsel %vm484, %v3872, %v3880
  %v3899 = vsel %vm484, %v3874, %v3882
  %v3900 = vsel %vm484, %v3876, %v3884
  %v3901 = vsel %vm484, %v3862, %v3870
  %v3902 = vsel %vm484, %v3864, %v3872
  %v3903 = vsel %vm484, %v3866, %v3874
  %v3904 = vsel %vm484, %v3868, %v3876
  %v3905 = vsel %vm484, %v3886, %v3862
  %v3906 = vsel %vm484, %v3888, %v3864
  %v3907 = vsel %vm484, %v3890, %v3866
  %v3908 = vsel %vm484, %v3892, %v3868
  %v3909 = vmul.f32 %v3905, %v516
  %v3910 = vmul.f32 %v3901, %v520
  %v3911 = vmul.f32 %v3897, %v524
  %v3912 = vmul.f32 %v3893, %v528
  %v3913 = vmul.f32 %v3906, %v516
  %v3914 = vmul.f32 %v3902, %v520
  %v3915 = vmul.f32 %v3898, %v524
  %v3916 = vmul.f32 %v3894, %v528
  %v3917 = vmul.f32 %v3907, %v516
  %v3918 = vmul.f32 %v3903, %v520
  %v3919 = vmul.f32 %v3899, %v524
  %v3920 = vmul.f32 %v3895, %v528
  %v3921 = vmul.f32 %v3908, %v516
  %v3922 = vmul.f32 %v3904, %v520
  %v3923 = vmul.f32 %v3900, %v524
  %v3924 = vmul.f32 %v3896, %v528
  %3925 = vset.pattern.permute.xlu0 3
  %3926 = vperm.xlu0 %3925, %v3597
  %v3927 = vpop.permute.xlu0 %3926
  %3929 = vset.pattern.permute.xlu0 3
  %3930 = vperm.xlu0 %3929, %v3598
  %v3931 = vpop.permute.xlu0 %3930
  %3933 = vset.pattern.permute.xlu0 3
  %3934 = vperm.xlu0 %3933, %v3599
  %v3935 = vpop.permute.xlu0 %3934
  %3937 = vset.pattern.permute.xlu0 3
  %3938 = vperm.xlu0 %3937, %v3600
  %v3939 = vpop.permute.xlu0 %3938
  %v3941 = vmul.f32 %v3649, %v3927
  %v3942 = vmul.f32 %v3650, %v3927
  %v3943 = vmul.f32 %v3651, %v3927
  %v3944 = vmul.f32 %v3652, %v3927
  %v3945 = vmul.f32 %v3653, %v3931
  %v3946 = vmul.f32 %v3654, %v3931
  %v3947 = vmul.f32 %v3655, %v3931
  %v3948 = vmul.f32 %v3656, %v3931
  %v3949 = vmul.f32 %v3657, %v3935
  %v3950 = vmul.f32 %v3658, %v3935
  %v3951 = vmul.f32 %v3659, %v3935
  %v3952 = vmul.f32 %v3660, %v3935
  %v3953 = vmul.f32 %v3661, %v3939
  %v3954 = vmul.f32 %v3662, %v3939
  %v3955 = vmul.f32 %v3663, %v3939
  %v3956 = vmul.f32 %v3664, %v3939
  %3957 = vset.pattern.permute.xlu0 4
  %3958 = vperm.xlu0 %3957, %v3597
  %v3959 = vpop.permute.xlu0 %3958
  %3961 = vset.pattern.permute.xlu0 4
  %3962 = vperm.xlu0 %3961, %v3598
  %v3963 = vpop.permute.xlu0 %3962
  %3965 = vset.pattern.permute.xlu0 4
  %3966 = vperm.xlu0 %3965, %v3599
  %v3967 = vpop.permute.xlu0 %3966
  %3969 = vset.pattern.permute.xlu0 4
  %3970 = vperm.xlu0 %3969, %v3600
  %v3971 = vpop.permute.xlu0 %3970
  %v3973 = vmul.f32 %v3359, %v3959
  %v3974 = vmul.f32 %v3360, %v3959
  %v3975 = vmul.f32 %v3361, %v3959
  %v3976 = vmul.f32 %v3362, %v3959
  %v3977 = vmul.f32 %v3363, %v3963
  %v3978 = vmul.f32 %v3364, %v3963
  %v3979 = vmul.f32 %v3365, %v3963
  %v3980 = vmul.f32 %v3366, %v3963
  %v3981 = vmul.f32 %v3589, %v3967
  %v3982 = vmul.f32 %v3590, %v3967
  %v3983 = vmul.f32 %v3591, %v3967
  %v3984 = vmul.f32 %v3592, %v3967
  %v3985 = vmul.f32 %v3593, %v3971
  %v3986 = vmul.f32 %v3594, %v3971
  %v3987 = vmul.f32 %v3595, %v3971
  %v3988 = vmul.f32 %v3596, %v3971
  %v3989 = vadd.f32 %v3941, %v3973
  %v3990 = vadd.f32 %v3942, %v3974
  %v3991 = vadd.f32 %v3943, %v3975
  %v3992 = vadd.f32 %v3944, %v3976
  %v3993 = vadd.f32 %v3945, %v3977
  %v3994 = vadd.f32 %v3946, %v3978
  %v3995 = vadd.f32 %v3947, %v3979
  %v3996 = vadd.f32 %v3948, %v3980
  %v3997 = vadd.f32 %v3949, %v3981
  %v3998 = vadd.f32 %v3950, %v3982
  %v3999 = vadd.f32 %v3951, %v3983
  %v4000 = vadd.f32 %v3952, %v3984
  %v4001 = vadd.f32 %v3953, %v3985
  %v4002 = vadd.f32 %v3954, %v3986
  %v4003 = vadd.f32 %v3955, %v3987
  %v4004 = vadd.f32 %v3956, %v3988
  %4005 = vset.pattern.permute.xlu0 5
  %4006 = vperm.xlu0 %4005, %v3597
  %v4007 = vpop.permute.xlu0 %4006
  %4009 = vset.pattern.permute.xlu0 5
  %4010 = vperm.xlu0 %4009, %v3598
  %v4011 = vpop.permute.xlu0 %4010
  %4013 = vset.pattern.permute.xlu0 5
  %4014 = vperm.xlu0 %4013, %v3599
  %v4015 = vpop.permute.xlu0 %4014
  %4017 = vset.pattern.permute.xlu0 5
  %4018 = vperm.xlu0 %4017, %v3600
  %v4019 = vpop.permute.xlu0 %4018
  %v4021 = vmul.f32 %v3713, %v4007
  %v4022 = vmul.f32 %v3714, %v4007
  %v4023 = vmul.f32 %v3715, %v4007
  %v4024 = vmul.f32 %v3716, %v4007
  %v4025 = vmul.f32 %v3717, %v4011
  %v4026 = vmul.f32 %v3718, %v4011
  %v4027 = vmul.f32 %v3719, %v4011
  %v4028 = vmul.f32 %v3720, %v4011
  %v4029 = vmul.f32 %v3721, %v4015
  %v4030 = vmul.f32 %v3722, %v4015
  %v4031 = vmul.f32 %v3723, %v4015
  %v4032 = vmul.f32 %v3724, %v4015
  %v4033 = vmul.f32 %v3725, %v4019
  %v4034 = vmul.f32 %v3726, %v4019
  %v4035 = vmul.f32 %v3727, %v4019
  %v4036 = vmul.f32 %v3728, %v4019
  %v4037 = vadd.f32 %v3989, %v4021
  %v4038 = vadd.f32 %v3990, %v4022
  %v4039 = vadd.f32 %v3991, %v4023
  %v4040 = vadd.f32 %v3992, %v4024
  %v4041 = vadd.f32 %v3993, %v4025
  %v4042 = vadd.f32 %v3994, %v4026
  %v4043 = vadd.f32 %v3995, %v4027
  %v4044 = vadd.f32 %v3996, %v4028
  %v4045 = vadd.f32 %v3997, %v4029
  %v4046 = vadd.f32 %v3998, %v4030
  %v4047 = vadd.f32 %v3999, %v4031
  %v4048 = vadd.f32 %v4000, %v4032
  %v4049 = vadd.f32 %v4001, %v4033
  %v4050 = vadd.f32 %v4002, %v4034
  %v4051 = vadd.f32 %v4003, %v4035
  %v4052 = vadd.f32 %v4004, %v4036
  %v4053 = vadd.f32 %v3909, %v4037
  %v4054 = vadd.f32 %v3910, %v4038
  %v4055 = vadd.f32 %v3911, %v4039
  %v4056 = vadd.f32 %v3912, %v4040
  %v4057 = vadd.f32 %v3913, %v4041
  %v4058 = vadd.f32 %v3914, %v4042
  %v4059 = vadd.f32 %v3915, %v4043
  %v4060 = vadd.f32 %v3916, %v4044
  %v4061 = vadd.f32 %v3917, %v4045
  %v4062 = vadd.f32 %v3918, %v4046
  %v4063 = vadd.f32 %v3919, %v4047
  %v4064 = vadd.f32 %v3920, %v4048
  %v4065 = vadd.f32 %v3921, %v4049
  %v4066 = vadd.f32 %v3922, %v4050
  %v4067 = vadd.f32 %v3923, %v4051
  %v4068 = vadd.f32 %v3924, %v4052
  %4069 = vset.pattern.permute.xlu0 6
  %4070 = vperm.xlu0 %4069, %v3597
  %v4071 = vpop.permute.xlu0 %4070
  %4073 = vset.pattern.permute.xlu0 6
  %4074 = vperm.xlu0 %4073, %v3598
  %v4075 = vpop.permute.xlu0 %4074
  %4077 = vset.pattern.permute.xlu0 6
  %4078 = vperm.xlu0 %4077, %v3599
  %v4079 = vpop.permute.xlu0 %4078
  %4081 = vset.pattern.permute.xlu0 6
  %4082 = vperm.xlu0 %4081, %v3600
  %v4083 = vpop.permute.xlu0 %4082
  %v4085 = vmul.f32 %v3649, %v4071
  %v4086 = vmul.f32 %v3650, %v4071
  %v4087 = vmul.f32 %v3651, %v4071
  %v4088 = vmul.f32 %v3652, %v4071
  %v4089 = vmul.f32 %v3653, %v4075
  %v4090 = vmul.f32 %v3654, %v4075
  %v4091 = vmul.f32 %v3655, %v4075
  %v4092 = vmul.f32 %v3656, %v4075
  %v4093 = vmul.f32 %v3657, %v4079
  %v4094 = vmul.f32 %v3658, %v4079
  %v4095 = vmul.f32 %v3659, %v4079
  %v4096 = vmul.f32 %v3660, %v4079
  %v4097 = vmul.f32 %v3661, %v4083
  %v4098 = vmul.f32 %v3662, %v4083
  %v4099 = vmul.f32 %v3663, %v4083
  %v4100 = vmul.f32 %v3664, %v4083
  %4101 = vset.pattern.permute.xlu0 7
  %4102 = vperm.xlu0 %4101, %v3597
  %v4103 = vpop.permute.xlu0 %4102
  %4105 = vset.pattern.permute.xlu0 7
  %4106 = vperm.xlu0 %4105, %v3598
  %v4107 = vpop.permute.xlu0 %4106
  %4109 = vset.pattern.permute.xlu0 7
  %4110 = vperm.xlu0 %4109, %v3599
  %v4111 = vpop.permute.xlu0 %4110
  %4113 = vset.pattern.permute.xlu0 7
  %4114 = vperm.xlu0 %4113, %v3600
  %v4115 = vpop.permute.xlu0 %4114
  %v4117 = vmul.f32 %v3359, %v4103
  %v4118 = vmul.f32 %v3360, %v4103
  %v4119 = vmul.f32 %v3361, %v4103
  %v4120 = vmul.f32 %v3362, %v4103
  %v4121 = vmul.f32 %v3363, %v4107
  %v4122 = vmul.f32 %v3364, %v4107
  %v4123 = vmul.f32 %v3365, %v4107
  %v4124 = vmul.f32 %v3366, %v4107
  %v4125 = vmul.f32 %v3589, %v4111
  %v4126 = vmul.f32 %v3590, %v4111
  %v4127 = vmul.f32 %v3591, %v4111
  %v4128 = vmul.f32 %v3592, %v4111
  %v4129 = vmul.f32 %v3593, %v4115
  %v4130 = vmul.f32 %v3594, %v4115
  %v4131 = vmul.f32 %v3595, %v4115
  %v4132 = vmul.f32 %v3596, %v4115
  %v4133 = vadd.f32 %v4085, %v4117
  %v4134 = vadd.f32 %v4086, %v4118
  %v4135 = vadd.f32 %v4087, %v4119
  %v4136 = vadd.f32 %v4088, %v4120
  %v4137 = vadd.f32 %v4089, %v4121
  %v4138 = vadd.f32 %v4090, %v4122
  %v4139 = vadd.f32 %v4091, %v4123
  %v4140 = vadd.f32 %v4092, %v4124
  %v4141 = vadd.f32 %v4093, %v4125
  %v4142 = vadd.f32 %v4094, %v4126
  %v4143 = vadd.f32 %v4095, %v4127
  %v4144 = vadd.f32 %v4096, %v4128
  %v4145 = vadd.f32 %v4097, %v4129
  %v4146 = vadd.f32 %v4098, %v4130
  %v4147 = vadd.f32 %v4099, %v4131
  %v4148 = vadd.f32 %v4100, %v4132
  %4149 = vset.pattern.permute.xlu0 8
  %4150 = vperm.xlu0 %4149, %v3597
  %v4151 = vpop.permute.xlu0 %4150
  %4153 = vset.pattern.permute.xlu0 8
  %4154 = vperm.xlu0 %4153, %v3598
  %v4155 = vpop.permute.xlu0 %4154
  %4157 = vset.pattern.permute.xlu0 8
  %4158 = vperm.xlu0 %4157, %v3599
  %v4159 = vpop.permute.xlu0 %4158
  %4161 = vset.pattern.permute.xlu0 8
  %4162 = vperm.xlu0 %4161, %v3600
  %v4163 = vpop.permute.xlu0 %4162
  %v4165 = vmul.f32 %v3713, %v4151
  %v4166 = vmul.f32 %v3714, %v4151
  %v4167 = vmul.f32 %v3715, %v4151
  %v4168 = vmul.f32 %v3716, %v4151
  %v4169 = vmul.f32 %v3717, %v4155
  %v4170 = vmul.f32 %v3718, %v4155
  %v4171 = vmul.f32 %v3719, %v4155
  %v4172 = vmul.f32 %v3720, %v4155
  %v4173 = vmul.f32 %v3721, %v4159
  %v4174 = vmul.f32 %v3722, %v4159
  %v4175 = vmul.f32 %v3723, %v4159
  %v4176 = vmul.f32 %v3724, %v4159
  %v4177 = vmul.f32 %v3725, %v4163
  %v4178 = vmul.f32 %v3726, %v4163
  %v4179 = vmul.f32 %v3727, %v4163
  %v4180 = vmul.f32 %v3728, %v4163
  %v4181 = vadd.f32 %v4133, %v4165
  %v4182 = vadd.f32 %v4134, %v4166
  %v4183 = vadd.f32 %v4135, %v4167
  %v4184 = vadd.f32 %v4136, %v4168
  %v4185 = vadd.f32 %v4137, %v4169
  %v4186 = vadd.f32 %v4138, %v4170
  %v4187 = vadd.f32 %v4139, %v4171
  %v4188 = vadd.f32 %v4140, %v4172
  %v4189 = vadd.f32 %v4141, %v4173
  %v4190 = vadd.f32 %v4142, %v4174
  %v4191 = vadd.f32 %v4143, %v4175
  %v4192 = vadd.f32 %v4144, %v4176
  %v4193 = vadd.f32 %v4145, %v4177
  %v4194 = vadd.f32 %v4146, %v4178
  %v4195 = vadd.f32 %v4147, %v4179
  %v4196 = vadd.f32 %v4148, %v4180
  %4197 = vrot.lane.b32.xlu0 %v4181, 112
  %v4198 = vpop.permute.xlu0 %4197
  %4199 = vrot.lane.b32.xlu0 %v4185, 112
  %v4200 = vpop.permute.xlu0 %4199
  %4201 = vrot.lane.b32.xlu0 %v4189, 112
  %v4202 = vpop.permute.xlu0 %4201
  %4203 = vrot.lane.b32.xlu0 %v4193, 112
  %v4204 = vpop.permute.xlu0 %4203
  %4205 = vrot.lane.b32.xlu0 %v4182, 112
  %v4206 = vpop.permute.xlu0 %4205
  %4207 = vrot.lane.b32.xlu0 %v4186, 112
  %v4208 = vpop.permute.xlu0 %4207
  %4209 = vrot.lane.b32.xlu0 %v4190, 112
  %v4210 = vpop.permute.xlu0 %4209
  %4211 = vrot.lane.b32.xlu0 %v4194, 112
  %v4212 = vpop.permute.xlu0 %4211
  %4213 = vrot.lane.b32.xlu0 %v4183, 112
  %v4214 = vpop.permute.xlu0 %4213
  %4215 = vrot.lane.b32.xlu0 %v4187, 112
  %v4216 = vpop.permute.xlu0 %4215
  %4217 = vrot.lane.b32.xlu0 %v4191, 112
  %v4218 = vpop.permute.xlu0 %4217
  %4219 = vrot.lane.b32.xlu0 %v4195, 112
  %v4220 = vpop.permute.xlu0 %4219
  %4221 = vrot.lane.b32.xlu0 %v4184, 112
  %v4222 = vpop.permute.xlu0 %4221
  %4223 = vrot.lane.b32.xlu0 %v4188, 112
  %v4224 = vpop.permute.xlu0 %4223
  %4225 = vrot.lane.b32.xlu0 %v4192, 112
  %v4226 = vpop.permute.xlu0 %4225
  %4227 = vrot.lane.b32.xlu0 %v4196, 112
  %v4228 = vpop.permute.xlu0 %4227
  %v4229 = vsel %vm689, %v4214, %v4222
  %v4230 = vsel %vm689, %v4216, %v4224
  %v4231 = vsel %vm689, %v4218, %v4226
  %v4232 = vsel %vm689, %v4220, %v4228
  %v4233 = vsel %vm689, %v4206, %v4214
  %v4234 = vsel %vm689, %v4208, %v4216
  %v4235 = vsel %vm689, %v4210, %v4218
  %v4236 = vsel %vm689, %v4212, %v4220
  %v4237 = vsel %vm689, %v4198, %v4206
  %v4238 = vsel %vm689, %v4200, %v4208
  %v4239 = vsel %vm689, %v4202, %v4210
  %v4240 = vsel %vm689, %v4204, %v4212
  %v4241 = vsel %vm689, %v4222, %v4198
  %v4242 = vsel %vm689, %v4224, %v4200
  %v4243 = vsel %vm689, %v4226, %v4202
  %v4244 = vsel %vm689, %v4228, %v4204
  %v4245 = vmul.f32 %v4237, %v721
  %v4246 = vmul.f32 %v4233, %v725
  %v4247 = vmul.f32 %v4229, %v729
  %v4248 = vmul.f32 %v4241, %v733
  %v4249 = vmul.f32 %v4238, %v721
  %v4250 = vmul.f32 %v4234, %v725
  %v4251 = vmul.f32 %v4230, %v729
  %v4252 = vmul.f32 %v4242, %v733
  %v4253 = vmul.f32 %v4239, %v721
  %v4254 = vmul.f32 %v4235, %v725
  %v4255 = vmul.f32 %v4231, %v729
  %v4256 = vmul.f32 %v4243, %v733
  %v4257 = vmul.f32 %v4240, %v721
  %v4258 = vmul.f32 %v4236, %v725
  %v4259 = vmul.f32 %v4232, %v729
  %v4260 = vmul.f32 %v4244, %v733
  %v4261 = vadd.f32 %v4053, %v4245
  %v4262 = vadd.f32 %v4054, %v4246
  %v4263 = vadd.f32 %v4055, %v4247
  %v4264 = vadd.f32 %v4056, %v4248
  %v4265 = vadd.f32 %v4057, %v4249
  %v4266 = vadd.f32 %v4058, %v4250
  %v4267 = vadd.f32 %v4059, %v4251
  %v4268 = vadd.f32 %v4060, %v4252
  %v4269 = vadd.f32 %v4061, %v4253
  %v4270 = vadd.f32 %v4062, %v4254
  %v4271 = vadd.f32 %v4063, %v4255
  %v4272 = vadd.f32 %v4064, %v4256
  %v4273 = vadd.f32 %v4065, %v4257
  %v4274 = vadd.f32 %v4066, %v4258
  %v4275 = vadd.f32 %v4067, %v4259
  %v4276 = vadd.f32 %v4068, %v4260
  %v4277 = vld [vmem:[%s3] sm:$0xff]
  %v4278 = vld [vmem:[%s3 + $0x8] sm:$0xff]
  %v4279 = vld [vmem:[%s3 + $0x10] sm:$0xff]
  %v4280 = vld [vmem:[%s3 + $0x18] sm:$0xff]
  %v4281 = vld [vmem:[%s3 + $0x20] sm:$0xff]
  %v4282 = vld [vmem:[%s3 + $0x28] sm:$0xff]
  %v4283 = vld [vmem:[%s3 + $0x30] sm:$0xff]
  %v4284 = vld [vmem:[%s3 + $0x38] sm:$0xff]
  %v4285 = vld [vmem:[%s3 + $0x40] sm:$0xff]
  %v4286 = vld [vmem:[%s3 + $0x48] sm:$0xff]
  %v4287 = vld [vmem:[%s3 + $0x50] sm:$0xff]
  %v4288 = vld [vmem:[%s3 + $0x58] sm:$0xff]
  %v4289 = vld [vmem:[%s3 + $0x60] sm:$0xff]
  %v4290 = vld [vmem:[%s3 + $0x68] sm:$0xff]
  %v4291 = vld [vmem:[%s3 + $0x70] sm:$0xff]
  %v4292 = vld [vmem:[%s3 + $0x78] sm:$0xff]
  %v4293 = vld [vmem:[%s3 + $0x80] sm:$0xff]
  %v4294 = vld [vmem:[%s3 + $0x88] sm:$0xff]
  %v4295 = vld [vmem:[%s3 + $0x90] sm:$0xff]
  %v4296 = vld [vmem:[%s3 + $0x98] sm:$0xff]
  %v4297 = vld [vmem:[%s3 + $0xa0] sm:$0xff]
  %v4298 = vld [vmem:[%s3 + $0xa8] sm:$0xff]
  %v4299 = vld [vmem:[%s3 + $0xb0] sm:$0xff]
  %v4300 = vld [vmem:[%s3 + $0xb8] sm:$0xff]
  %v4301 = vld [vmem:[%s3 + $0xc0] sm:$0xff]
  %v4302 = vld [vmem:[%s3 + $0xc8] sm:$0xff]
  %v4303 = vld [vmem:[%s3 + $0xd0] sm:$0xff]
  %v4304 = vld [vmem:[%s3 + $0xd8] sm:$0xff]
  %v4305 = vld [vmem:[%s3 + $0xe0] sm:$0xff]
  %v4306 = vld [vmem:[%s3 + $0xe8] sm:$0xff]
  %v4307 = vld [vmem:[%s3 + $0xf0] sm:$0xff]
  %v4308 = vld [vmem:[%s3 + $0xf8] sm:$0xff]
  %4309 = vmatprep.subr.mxu0 0.0
  %4310 = vmatpush1.msra.mxu0 %v4277
  %4311 = vmatprep.subr.mxu0 0.0
  %4312 = vmatpush1.msra.mxu0 %v4278
  %4313 = vmatprep.subr.mxu0 0.0
  %4314 = vmatpush1.msra.mxu0 %v4279
  %4315 = vmatprep.subr.mxu0 0.0
  %4316 = vmatpush1.msra.mxu0 %v4280
  %4317 = vmatprep.subr.mxu0 0.0
  %4318 = vmatpush1.msra.mxu0 %v4281
  %4319 = vmatprep.subr.mxu0 0.0
  %4320 = vmatpush1.msra.mxu0 %v4282
  %4321 = vmatprep.subr.mxu0 0.0
  %4322 = vmatpush1.msra.mxu0 %v4283
  %4323 = vmatprep.subr.mxu0 0.0
  %4324 = vmatpush1.msra.mxu0 %v4284
  %4325 = vmatprep.subr.mxu0 0.0
  %4326 = vmatpush1.msra.mxu0 %v4285
  %4327 = vmatprep.subr.mxu0 0.0
  %4328 = vmatpush1.msra.mxu0 %v4286
  %4329 = vmatprep.subr.mxu0 0.0
  %4330 = vmatpush1.msra.mxu0 %v4287
  %4331 = vmatprep.subr.mxu0 0.0
  %4332 = vmatpush1.msra.mxu0 %v4288
  %4333 = vmatprep.subr.mxu0 0.0
  %4334 = vmatpush1.msra.mxu0 %v4289
  %4335 = vmatprep.subr.mxu0 0.0
  %4336 = vmatpush1.msra.mxu0 %v4290
  %4337 = vmatprep.subr.mxu0 0.0
  %4338 = vmatpush1.msra.mxu0 %v4291
  %4339 = vmatprep.subr.mxu0 0.0
  %4340 = vmatpush1.msra.mxu0 %v4292
  %4341 = vmatprep.subr.mxu0 0.0
  %4342 = vmatpush1.msra.mxu0 %v4293
  %4343 = vmatprep.subr.mxu0 0.0
  %4344 = vmatpush1.msra.mxu0 %v4294
  %4345 = vmatprep.subr.mxu0 0.0
  %4346 = vmatpush1.msra.mxu0 %v4295
  %4347 = vmatprep.subr.mxu0 0.0
  %4348 = vmatpush1.msra.mxu0 %v4296
  %4349 = vmatprep.subr.mxu0 0.0
  %4350 = vmatpush1.msra.mxu0 %v4297
  %4351 = vmatprep.subr.mxu0 0.0
  %4352 = vmatpush1.msra.mxu0 %v4298
  %4353 = vmatprep.subr.mxu0 0.0
  %4354 = vmatpush1.msra.mxu0 %v4299
  %4355 = vmatprep.subr.mxu0 0.0
  %4356 = vmatpush1.msra.mxu0 %v4300
  %4357 = vmatprep.subr.mxu0 0.0
  %4358 = vmatpush1.msra.mxu0 %v4301
  %4359 = vmatprep.subr.mxu0 0.0
  %4360 = vmatpush1.msra.mxu0 %v4302
  %4361 = vmatprep.subr.mxu0 0.0
  %4362 = vmatpush1.msra.mxu0 %v4303
  %4363 = vmatprep.subr.mxu0 0.0
  %4364 = vmatpush1.msra.mxu0 %v4304
  %4365 = vmatprep.subr.mxu0 0.0
  %4366 = vmatpush1.msra.mxu0 %v4305
  %4367 = vmatprep.subr.mxu0 0.0
  %4368 = vmatpush1.msra.mxu0 %v4306
  %4369 = vmatprep.subr.mxu0 0.0
  %4370 = vmatpush1.msra.mxu0 %v4307
  %4371 = vmatprep.subr.mxu0 0.0
  %4372 = vmatpush1.msra.mxu0 %v4308
  %4373 = vmatprep.mubr.f32.mxu0 %v4262
  %4374 = vmatmul.mubr.f32.gmra.mrb[0].mxu0 %v4261
  %v4375 = vpop.f32.mrb[0].mxu0
  %v4376 = vadd.f32 0.0, %v4375
  %v4377 = vpop.f32.mrb[0].mxu0
  %4378 = vmatprep.mubr.f32.mxu0 %v4266
  %4379 = vmatmul.mubr.f32.gmra.mrb[0].mxu0 %v4265
  %v4380 = vpop.f32.mrb[0].mxu0
  %v4381 = vadd.f32 0.0, %v4380
  %v4382 = vpop.f32.mrb[0].mxu0
  %4383 = vmatprep.mubr.f32.mxu0 %v4270
  %4384 = vmatmul.mubr.f32.gmra.mrb[0].mxu0 %v4269
  %v4385 = vpop.f32.mrb[0].mxu0
  %v4386 = vadd.f32 0.0, %v4385
  %v4387 = vpop.f32.mrb[0].mxu0
  %4388 = vmatprep.mubr.f32.mxu0 %v4274
  %4389 = vmatmul.mubr.f32.gmra.mrb[0].mxu0 %v4273
  %v4390 = vpop.f32.mrb[0].mxu0
  %v4391 = vadd.f32 0.0, %v4390
  %v4392 = vpop.f32.mrb[0].mxu0
  %4393 = vdwg.mxu0
  %4394 = vmatprep.subr.mxu0 0.0
  %4395 = vmatpush1.msra.mxu0 %v4277
  %4396 = vmatprep.subr.mxu0 0.0
  %4397 = vmatpush1.msra.mxu0 %v4278
  %4398 = vmatprep.subr.mxu0 0.0
  %4399 = vmatpush1.msra.mxu0 %v4279
  %4400 = vmatprep.subr.mxu0 0.0
  %4401 = vmatpush1.msra.mxu0 %v4280
  %4402 = vmatprep.subr.mxu0 0.0
  %4403 = vmatpush1.msra.mxu0 %v4281
  %4404 = vmatprep.subr.mxu0 0.0
  %4405 = vmatpush1.msra.mxu0 %v4282
  %4406 = vmatprep.subr.mxu0 0.0
  %4407 = vmatpush1.msra.mxu0 %v4283
  %4408 = vmatprep.subr.mxu0 0.0
  %4409 = vmatpush1.msra.mxu0 %v4284
  %4410 = vmatprep.subr.mxu0 0.0
  %4411 = vmatpush1.msra.mxu0 %v4285
  %4412 = vmatprep.subr.mxu0 0.0
  %4413 = vmatpush1.msra.mxu0 %v4286
  %4414 = vmatprep.subr.mxu0 0.0
  %4415 = vmatpush1.msra.mxu0 %v4287
  %4416 = vmatprep.subr.mxu0 0.0
  %4417 = vmatpush1.msra.mxu0 %v4288
  %4418 = vmatprep.subr.mxu0 0.0
  %4419 = vmatpush1.msra.mxu0 %v4289
  %4420 = vmatprep.subr.mxu0 0.0
  %4421 = vmatpush1.msra.mxu0 %v4290
  %4422 = vmatprep.subr.mxu0 0.0
  %4423 = vmatpush1.msra.mxu0 %v4291
  %4424 = vmatprep.subr.mxu0 0.0
  %4425 = vmatpush1.msra.mxu0 %v4292
  %4426 = vmatprep.subr.mxu0 0.0
  %4427 = vmatpush1.msra.mxu0 %v4293
  %4428 = vmatprep.subr.mxu0 0.0
  %4429 = vmatpush1.msra.mxu0 %v4294
  %4430 = vmatprep.subr.mxu0 0.0
  %4431 = vmatpush1.msra.mxu0 %v4295
  %4432 = vmatprep.subr.mxu0 0.0
  %4433 = vmatpush1.msra.mxu0 %v4296
  %4434 = vmatprep.subr.mxu0 0.0
  %4435 = vmatpush1.msra.mxu0 %v4297
  %4436 = vmatprep.subr.mxu0 0.0
  %4437 = vmatpush1.msra.mxu0 %v4298
  %4438 = vmatprep.subr.mxu0 0.0
  %4439 = vmatpush1.msra.mxu0 %v4299
  %4440 = vmatprep.subr.mxu0 0.0
  %4441 = vmatpush1.msra.mxu0 %v4300
  %4442 = vmatprep.subr.mxu0 0.0
  %4443 = vmatpush1.msra.mxu0 %v4301
  %4444 = vmatprep.subr.mxu0 0.0
  %4445 = vmatpush1.msra.mxu0 %v4302
  %4446 = vmatprep.subr.mxu0 0.0
  %4447 = vmatpush1.msra.mxu0 %v4303
  %4448 = vmatprep.subr.mxu0 0.0
  %4449 = vmatpush1.msra.mxu0 %v4304
  %4450 = vmatprep.subr.mxu0 0.0
  %4451 = vmatpush1.msra.mxu0 %v4305
  %4452 = vmatprep.subr.mxu0 0.0
  %4453 = vmatpush1.msra.mxu0 %v4306
  %4454 = vmatprep.subr.mxu0 0.0
  %4455 = vmatpush1.msra.mxu0 %v4307
  %4456 = vmatprep.subr.mxu0 0.0
  %4457 = vmatpush1.msra.mxu0 %v4308
  %4458 = vmatprep.mubr.f32.mxu0 %v4264
  %4459 = vmatmul.mubr.f32.gmra.mrb[0].mxu0 %v4263
  %v4460 = vpop.f32.mrb[0].mxu0
  %v4461 = vadd.f32 0.0, %v4460
  %v4462 = vpop.f32.mrb[0].mxu0
  %4463 = vmatprep.mubr.f32.mxu0 %v4268
  %4464 = vmatmul.mubr.f32.gmra.mrb[0].mxu0 %v4267
  %v4465 = vpop.f32.mrb[0].mxu0
  %v4466 = vadd.f32 0.0, %v4465
  %v4467 = vpop.f32.mrb[0].mxu0
  %4468 = vmatprep.mubr.f32.mxu0 %v4272
  %4469 = vmatmul.mubr.f32.gmra.mrb[0].mxu0 %v4271
  %v4470 = vpop.f32.mrb[0].mxu0
  %v4471 = vadd.f32 0.0, %v4470
  %v4472 = vpop.f32.mrb[0].mxu0
  %4473 = vmatprep.mubr.f32.mxu0 %v4276
  %4474 = vmatmul.mubr.f32.gmra.mrb[0].mxu0 %v4275
  %v4475 = vpop.f32.mrb[0].mxu0
  %v4476 = vadd.f32 0.0, %v4475
  %v4477 = vpop.f32.mrb[0].mxu0
  %4478 = vdwg.mxu0
  %4483 = vrot.lane.b32.xlu0 %v4461, 64
  %v4484 = vpop.permute.xlu0 %4483
  %4485 = vrot.lane.b32.xlu0 %v4466, 64
  %v4486 = vpop.permute.xlu0 %4485
  %4487 = vrot.lane.b32.xlu0 %v4471, 64
  %v4488 = vpop.permute.xlu0 %4487
  %4489 = vrot.lane.b32.xlu0 %v4476, 64
  %v4490 = vpop.permute.xlu0 %4489
  %vm4495 = vcmask 523264
  %v4496 = vsel %vm4495, %v4376, %v4484
  %v4497 = vsel %vm4495, %v4381, %v4486
  %v4498 = vsel %vm4495, %v4386, %v4488
  %v4499 = vsel %vm4495, %v4391, %v4490
  %v4500 = vld [vmem:[%s15] sm:$0xff]
  %v4501 = vld [vmem:[%s15 + $0x8] sm:$0xff]
  %v4502 = vld [vmem:[%s15 + $0x10] sm:$0xff]
  %v4503 = vld [vmem:[%s15 + $0x18] sm:$0xff]
  %4505 = vset.pattern.permute.xlu0 0
  %4506 = vperm.xlu0 %4505, %v4500
  %v4507 = vpop.permute.xlu0 %4506
  %4510 = vset.pattern.permute.xlu0 0
  %4511 = vperm.xlu0 %4510, %v4501
  %v4512 = vpop.permute.xlu0 %4511
  %4515 = vset.pattern.permute.xlu0 0
  %4516 = vperm.xlu0 %4515, %v4502
  %v4517 = vpop.permute.xlu0 %4516
  %4520 = vset.pattern.permute.xlu0 0
  %4521 = vperm.xlu0 %4520, %v4503
  %v4522 = vpop.permute.xlu0 %4521
  %v4524 = vadd.f32 %v4496, %v4507
  %v4525 = vadd.f32 %v4497, %v4512
  %v4526 = vadd.f32 %v4498, %v4517
  %v4527 = vadd.f32 %v4499, %v4522
  %v4528 = vld [vmem:[%s16] sm:$0xff]
  %v4529 = vld [vmem:[%s16 + $0x8] sm:$0xff]
  %v4530 = vld [vmem:[%s16 + $0x10] sm:$0xff]
  %v4531 = vld [vmem:[%s16 + $0x18] sm:$0xff]
  %v4532 = vld [vmem:[%s17] sm:$0xff]
  %v4533 = vld [vmem:[%s17 + $0x8] sm:$0xff]
  %v4534 = vld [vmem:[%s17 + $0x10] sm:$0xff]
  %v4535 = vld [vmem:[%s17 + $0x18] sm:$0xff]
  %4537 = vset.pattern.permute.xlu0 0
  %4538 = vperm.xlu0 %4537, %v4532
  %v4539 = vpop.permute.xlu0 %4538
  %4542 = vset.pattern.permute.xlu0 0
  %4543 = vperm.xlu0 %4542, %v4533
  %v4544 = vpop.permute.xlu0 %4543
  %4547 = vset.pattern.permute.xlu0 0
  %4548 = vperm.xlu0 %4547, %v4534
  %v4549 = vpop.permute.xlu0 %4548
  %4552 = vset.pattern.permute.xlu0 0
  %4553 = vperm.xlu0 %4552, %v4535
  %v4554 = vpop.permute.xlu0 %4553
  %vm4556 = vcmask 261120
  %v4558 = vsel %vm4556, %v4528, 0
  %v4561 = vsel %vm4556, %v4529, 0
  %v4564 = vsel %vm4556, %v4530, 0
  %v4567 = vsel %vm4556, %v4531, 0
  %4569 = vmatprep.subr.mxu0 0.0
  %4570 = vmatpush1.msra.mxu0 %v4524
  %4571 = vmatprep.subr.mxu0 0.0
  %4572 = vmatpush1.msra.mxu0 %v4525
  %4573 = vmatprep.subr.mxu0 0.0
  %4574 = vmatpush1.msra.mxu0 %v4526
  %4575 = vmatprep.subr.mxu0 0.0
  %4576 = vmatpush1.msra.mxu0 %v4527
  %4577 = vmatprep.subr.mxu0 0.0
  %4578 = vmatpush1.msra.mxu0 0.0
  %4579 = vmatprep.subr.mxu0 0.0
  %4580 = vmatpush1.msra.mxu0 0.0
  %4581 = vmatprep.subr.mxu0 0.0
  %4582 = vmatpush1.msra.mxu0 0.0
  %4583 = vmatprep.subr.mxu0 0.0
  %4584 = vmatpush1.msra.mxu0 0.0
  %4585 = vmatprep.subr.mxu0 0.0
  %4586 = vmatpush1.msra.mxu0 0.0
  %4587 = vmatprep.subr.mxu0 0.0
  %4588 = vmatpush1.msra.mxu0 0.0
  %4589 = vmatprep.subr.mxu0 0.0
  %4590 = vmatpush1.msra.mxu0 0.0
  %4591 = vmatprep.subr.mxu0 0.0
  %4592 = vmatpush1.msra.mxu0 0.0
  %4593 = vmatprep.subr.mxu0 0.0
  %4594 = vmatpush1.msra.mxu0 0.0
  %4595 = vmatprep.subr.mxu0 0.0
  %4596 = vmatpush1.msra.mxu0 0.0
  %4597 = vmatprep.subr.mxu0 0.0
  %4598 = vmatpush1.msra.mxu0 0.0
  %4599 = vmatprep.subr.mxu0 0.0
  %4600 = vmatpush1.msra.mxu0 0.0
  %4601 = vmatprep.subr.mxu0 0.0
  %4602 = vmatpush1.msra.mxu0 0.0
  %4603 = vmatprep.subr.mxu0 0.0
  %4604 = vmatpush1.msra.mxu0 0.0
  %4605 = vmatprep.subr.mxu0 0.0
  %4606 = vmatpush1.msra.mxu0 0.0
  %4607 = vmatprep.subr.mxu0 0.0
  %4608 = vmatpush1.msra.mxu0 0.0
  %4609 = vmatprep.subr.mxu0 0.0
  %4610 = vmatpush1.msra.mxu0 0.0
  %4611 = vmatprep.subr.mxu0 0.0
  %4612 = vmatpush1.msra.mxu0 0.0
  %4613 = vmatprep.subr.mxu0 0.0
  %4614 = vmatpush1.msra.mxu0 0.0
  %4615 = vmatprep.subr.mxu0 0.0
  %4616 = vmatpush1.msra.mxu0 0.0
  %4617 = vmatprep.subr.mxu0 0.0
  %4618 = vmatpush1.msra.mxu0 0.0
  %4619 = vmatprep.subr.mxu0 0.0
  %4620 = vmatpush1.msra.mxu0 0.0
  %4621 = vmatprep.subr.mxu0 0.0
  %4622 = vmatpush1.msra.mxu0 0.0
  %4623 = vmatprep.subr.mxu0 0.0
  %4624 = vmatpush1.msra.mxu0 0.0
  %4625 = vmatprep.subr.mxu0 0.0
  %4626 = vmatpush1.msra.mxu0 0.0
  %4627 = vmatprep.subr.mxu0 0.0
  %4628 = vmatpush1.msra.mxu0 0.0
  %4629 = vmatprep.subr.mxu0 0.0
  %4630 = vmatpush1.msra.mxu0 0.0
  %4631 = vmatprep.subr.mxu0 0.0
  %4632 = vmatpush1.msra.mxu0 0.0
  %4633 = vmatprep.mubr.f32.mxu0 0.0
  %4634 = vmatmul.mubr.f32.gmra.mrb[0].mxu0 %v4558
  %v4635 = vpop.f32.mrb[0].mxu0
  %v4636 = vadd.f32 %v4539, %v4635
  %v4637 = vpop.f32.mrb[0].mxu0
  %4638 = vmatprep.mubr.f32.mxu0 0.0
  %4639 = vmatmul.mubr.f32.gmra.mrb[0].mxu0 %v4561
  %v4640 = vpop.f32.mrb[0].mxu0
  %v4641 = vadd.f32 %v4544, %v4640
  %v4642 = vpop.f32.mrb[0].mxu0
  %4643 = vmatprep.mubr.f32.mxu0 0.0
  %4644 = vmatmul.mubr.f32.gmra.mrb[0].mxu0 %v4564
  %v4645 = vpop.f32.mrb[0].mxu0
  %v4646 = vadd.f32 %v4549, %v4645
  %v4647 = vpop.f32.mrb[0].mxu0
  %4648 = vmatprep.mubr.f32.mxu0 0.0
  %4649 = vmatmul.mubr.f32.gmra.mrb[0].mxu0 %v4567
  %v4650 = vpop.f32.mrb[0].mxu0
  %v4651 = vadd.f32 %v4554, %v4650
  %v4652 = vpop.f32.mrb[0].mxu0
  %4653 = vdwg.mxu0
  %v4654 = vxor.u32 %v4636, 2147483648
  %v4655 = vxor.u32 %v4641, 2147483648
  %v4656 = vxor.u32 %v4646, 2147483648
  %v4657 = vxor.u32 %v4651, 2147483648
  %v4658 = vmul.f32 %v4654, 1.442695
  %v4659 = vpow.pop %v4658
  %v4660 = vmul.f32 %v4655, 1.442695
  %v4661 = vpow.pop %v4660
  %v4662 = vmul.f32 %v4656, 1.442695
  %v4663 = vpow.pop %v4662
  %v4664 = vmul.f32 %v4657, 1.442695
  %v4665 = vpow.pop %v4664
  %v4666 = vadd.f32 %v4659, 1.0
  %v4667 = vadd.f32 %v4661, 1.0
  %v4668 = vadd.f32 %v4663, 1.0
  %v4669 = vadd.f32 %v4665, 1.0
  %v4670 = vrcp.pop %v4666
  %v4671 = vmul.f32 1.0, %v4670
  %v4672 = vrcp.pop %v4667
  %v4673 = vmul.f32 1.0, %v4672
  %v4674 = vrcp.pop %v4668
  %v4675 = vmul.f32 1.0, %v4674
  %v4676 = vrcp.pop %v4669
  %v4677 = vmul.f32 1.0, %v4676
  %v4678 = vmul.f32 %v4636, %v4671
  %v4679 = vmul.f32 %v4641, %v4673
  %v4680 = vmul.f32 %v4646, %v4675
  %v4681 = vmul.f32 %v4651, %v4677
  %4682 = vst [vmem:[%s18] sm:$0xff] %v4678
  %4683 = vst [vmem:[%s18 + $0x8] sm:$0xff] %v4679
  %4684 = vst [vmem:[%s18 + $0x10] sm:$0xff] %v4680
  %4685 = vst [vmem:[%s18 + $0x18] sm:$0xff] %v4681
  // Predicated region
  $region74: #{encoder_block_forward.1} parent=0 // pred_check
    _
  $region75: #{encoder_block_forward.1} parent=0 // pred_check_branch
    %4687 = sbr.rel (0) target = $region77
  $region76: #{encoder_block_forward.1} parent=0 // pred_region
    _
  $region77: #{encoder_block_forward.1} parent=0 // pred_fallthru
    _
  // Predicated region
  $region78: #{encoder_block_forward.1} parent=0 // pred_check
    _
  $region79: #{encoder_block_forward.1} parent=0 // pred_check_branch
    %4689 = sbr.rel (0) target = $region81
  $region80: #{encoder_block_forward.1} parent=0 // pred_region
    _
  $region81: #{encoder_block_forward.1} parent=0 // pred_fallthru
    _
  // Predicated region
  $region82: #{encoder_block_forward.1} parent=0 // pred_check
    _
  $region83: #{encoder_block_forward.1} parent=0 // pred_check_branch
    %4691 = sbr.rel (0) target = $region85
  $region84: #{encoder_block_forward.1} parent=0 // pred_region
    _
  $region85: #{encoder_block_forward.1} parent=0 // pred_fallthru
    _
  // Predicated region
  $region86: #{encoder_block_forward.1} parent=0 // pred_check
    _
  $region87: #{encoder_block_forward.1} parent=0 // pred_check_branch
    %4693 = sbr.rel (0) target = $region89
  $region88: #{encoder_block_forward.1} parent=0 // pred_region
    _
  $region89: #{encoder_block_forward.1} parent=0 // pred_fallthru
    _

</llo_original>
